<compile_context>
chip_gen: v5e
topology: v5e:2x2
jax: 0.10.0
libtpu: 0.0.40
codegen_flags: <defaults>
</compile_context>

<pallas_src>
import functools

import jax
import jax.numpy as jnp
from jax import lax
from jax.experimental import pallas as pl
from jax.experimental.pallas import tpu as pltpu

_VMEM_LIMIT = 48 * 1024 * 1024


# ----------------------------------------------------------------------------
# Host-side constant builders (tiny)
# ----------------------------------------------------------------------------
def _bilinear_matrix(in_size, out_size):
    """(out_size, in_size) matrix A s.t. A @ v == bilinear(align_corners=True) resize."""
    if in_size == 1:
        return jnp.ones((out_size, 1), jnp.float32)
    s = jnp.arange(out_size, dtype=jnp.float32) * (in_size - 1) / (out_size - 1)
    i0 = jnp.clip(jnp.floor(s).astype(jnp.int32), 0, in_size - 2)
    w1 = s - i0.astype(jnp.float32)
    rows = jnp.arange(out_size)
    a = jnp.zeros((out_size, in_size), jnp.float32)
    return a.at[rows, i0].add(1.0 - w1).at[rows, i0 + 1].add(w1)


def _padded_interp_matrix(in_size, out_size, n_rows):
    """Interp matrix embedded in a zero-padded frame: row (1+i) holds interp row i."""
    a = _bilinear_matrix(in_size, out_size)
    top = jnp.zeros((1, in_size), jnp.float32)
    bot = jnp.zeros((n_rows - out_size - 1, in_size), jnp.float32)
    return jnp.concatenate([top, a, bot], axis=0)


# ----------------------------------------------------------------------------
# Kernel 1: bilinear 2x upsample + channel concat, written into a padded NCHW frame
# ----------------------------------------------------------------------------
def _resample_embed(v, row_ref, colt_ref, n_rows, n_cols):
    """v: (C, Hi, Wi) f32 -> (C, n_rows, n_cols) = rows @ v @ cols^T per channel."""
    c, hi, wi = v.shape
    t = jnp.dot(v.reshape(c * hi, wi), colt_ref[...],
                preferred_element_type=jnp.float32)                  # (C*Hi, n_cols)
    t3 = t.reshape(c, hi, n_cols)
    rb = jnp.broadcast_to(row_ref[...][None], (c, n_rows, hi))
    return lax.dot_general(rb, t3, (((2,), (1,)), ((0,), (0,))),
                           preferred_element_type=jnp.float32)        # (C, n_rows, n_cols)


def _upsample_concat_kernel(x_ref, cx_ref, ahp_ref, awpt_ref, php_ref, pwpt_ref,
                            o_ref, *, c_up, hp3, wp):
    # upsampled channels (interp matrices already carry the zero halo)
    up = _resample_embed(x_ref[0].astype(jnp.float32), ahp_ref, awpt_ref, hp3, wp)
    o_ref[0, :c_up] = up.astype(o_ref.dtype)
    # skip channels, embedded via 0/1 placement matrices (zero halo, no strided stores)
    cpad = _resample_embed(cx_ref[0].astype(jnp.float32), php_ref, pwpt_ref, hp3, wp)
    o_ref[0, c_up:] = cpad.astype(o_ref.dtype)


# ----------------------------------------------------------------------------
# Kernels 2/3: (BN-apply + ReLU +) 3x3 conv + bias + per-channel BN partial stats
# 3x3 "same" conv as ONE im2col matmul over a padded-flat activation (C, L):
#   output column q = i*Wp + jj  maps to output pixel (i, jj) for jj < W
#   tap (dy, dx) of column q is flat position q + dy*Wp + dx  (no wrap for valid jj)
# Junk columns (jj >= W) are masked to zero; they land exactly on halo positions of the
# next padded-flat buffer, so the halo stays zero.
# ----------------------------------------------------------------------------
def _conv_from_padded_flat(z, w_ref, b_ref, mq_ref, o_ref, st_ref, p_ref,
                           *, cin, wp, q, s_off):
    # build im2col patches: 9 lane-shifted windows -> VMEM scratch (9*Cin, Q)
    for t in range(9):
        off = (t // 3) * wp + (t % 3)
        p_ref[t * cin:(t + 1) * cin, :] = z[:, off:off + q]
    # single MXU matmul, K = 9*Cin, f32 accumulation, lane-dense (Cout, Q) output
    acc = lax.dot_general(w_ref[...], p_ref[...], (((1,), (0,)), ((), ())),
                          preferred_element_type=jnp.float32)
    acc = (acc + b_ref[...]) * mq_ref[...]                     # bias; junk cols -> 0
    # per-channel partial sums for BatchNorm batch statistics (reduced in XLA, tiny)
    st_ref[0, :, 0:1] = jnp.sum(acc, axis=1, keepdims=True)
    st_ref[0, :, 1:2] = jnp.sum(acc * acc, axis=1, keepdims=True)
    # write back into the padded-flat frame of the next stage (halo stays zero)
    o_ref[0] = jnp.zeros(o_ref.shape[1:], o_ref.dtype)
    o_ref[0, :, s_off:s_off + q] = acc.astype(o_ref.dtype)


def _conv_bias_stats_kernel(x_ref, w_ref, b_ref, mq_ref, o_ref, st_ref, p_ref,
                            *, cin, wp, q, s_off):
    z = x_ref[0].astype(p_ref.dtype)
    _conv_from_padded_flat(z, w_ref, b_ref, mq_ref, o_ref, st_ref, p_ref,
                           cin=cin, wp=wp, q=q, s_off=s_off)


def _bn_relu_conv_bias_stats_kernel(x_ref, sc_ref, sh_ref, ml_ref, w_ref, b_ref, mq_ref,
                                    o_ref, st_ref, p_ref, *, cin, wp, q, s_off):
    x = x_ref[0].astype(jnp.float32)
    # BN affine + ReLU in f32, re-mask so the halo stays exactly zero for the conv taps
    z = (jnp.maximum(x * sc_ref[...] + sh_ref[...], 0.0) * ml_ref[...]).astype(p_ref.dtype)
    _conv_from_padded_flat(z, w_ref, b_ref, mq_ref, o_ref, st_ref, p_ref,
                           cin=cin, wp=wp, q=q, s_off=s_off)


# ----------------------------------------------------------------------------
# Kernel 4: final BN-apply + ReLU (halo garbage is cropped by the wrapper)
# ----------------------------------------------------------------------------
def _bn_relu_kernel(x_ref, sc_ref, sh_ref, o_ref):
    x = x_ref[0].astype(jnp.float32)
    o_ref[0] = jnp.maximum(x * sc_ref[...] + sh_ref[...], 0.0).astype(o_ref.dtype)


# ----------------------------------------------------------------------------
# Wrapper
# ----------------------------------------------------------------------------
def _bn_scale_shift(partial_stats, gamma, beta, count, eps):
    """Fold per-batch-item partial (sum, sumsq) into BN scale/shift vectors (tiny XLA)."""
    s = jnp.sum(partial_stats, axis=0)                      # (C, 2)
    mean = s[:, 0] / count
    var = jnp.maximum(s[:, 1] / count - mean * mean, 0.0)   # biased variance (train mode)
    scale = gamma * lax.rsqrt(var + eps)
    shift = beta - mean * scale
    return scale.reshape(-1, 1).astype(jnp.float32), shift.reshape(-1, 1).astype(jnp.float32)


@functools.partial(jax.jit, static_argnames=("use_bf16",))
def unet_expansion_stack(x, cx, params, use_bf16=True, eps=1e-5):
    """x: (N, Cx, H, W); cx: (N, Ccx, 2H, 2W) -> (N, out_channels, 2H, 2W), NCHW."""
    n, c_up, h_in, w_in = x.shape
    _, c_skip, h_out, w_out = cx.shape
    cin = c_up + c_skip
    cmid = params["w1"].shape[-1]
    cout = params["w2"].shape[-1]

    wp = w_out + 2                    # padded row length (1 left + 1 right halo column)
    hp3 = h_out + 3                   # 1 top halo + 2 bottom rows (halo + shift slack)
    lpad = hp3 * wp                   # padded-flat length
    q = h_out * wp                    # conv output columns (incl. 2 junk cols per row)
    s_off = wp + 1                    # flat offset of interior pixel (0, 0)

    act_dt = jnp.bfloat16 if use_bf16 else jnp.float32
    act_b = 2 if use_bf16 else 4

    # tiny host-side constants
    ahp = _padded_interp_matrix(h_in, h_out, hp3)        # (hp3, h_in)
    awpt = _padded_interp_matrix(w_in, w_out, wp).T      # (w_in, wp)
    php = _padded_interp_matrix(h_out, h_out, hp3)       # identity placement (hp3, h_out)
    pwpt = _padded_interp_matrix(w_out, w_out, wp).T     # (w_out, wp)

    col = jnp.arange(q, dtype=jnp.int32) % wp
    mask_q = (col < w_out).astype(jnp.float32).reshape(1, q)
    p = jnp.arange(lpad, dtype=jnp.int32)
    pi, pj = p // wp, p % wp
    mask_l = ((pi >= 1) & (pi <= h_out) & (pj >= 1) & (pj <= w_out)
              ).astype(jnp.float32).reshape(1, lpad)

    # ---- 1) upsample + concat -> padded NCHW frame (one grid step per batch item)
    h0 = pl.pallas_call(
        functools.partial(_upsample_concat_kernel, c_up=c_up, hp3=hp3, wp=wp),
        out_shape=jax.ShapeDtypeStruct((n, cin, hp3, wp), act_dt),
        grid=(n,),
        in_specs=[
            pl.BlockSpec((1, c_up, h_in, w_in), lambda i: (i, 0, 0, 0)),
            pl.BlockSpec((1, c_skip, h_out, w_out), lambda i: (i, 0, 0, 0)),
            pl.BlockSpec((hp3, h_in), lambda i: (0, 0)),
            pl.BlockSpec((w_in, wp), lambda i: (0, 0)),
            pl.BlockSpec((hp3, h_out), lambda i: (0, 0)),
            pl.BlockSpec((w_out, wp), lambda i: (0, 0)),
        ],
        out_specs=pl.BlockSpec((1, cin, hp3, wp), lambda i: (i, 0, 0, 0)),
        compiler_params=pltpu.CompilerParams(
            dimension_semantics=("parallel",), vmem_limit_bytes=_VMEM_LIMIT),
        cost_estimate=pl.CostEstimate(
            flops=2 * n * (c_up * h_in * wp * (w_in + hp3)
                           + c_skip * h_out * wp * (w_out + hp3)),
            transcendentals=0,
            bytes_accessed=4 * n * (c_up * h_in * w_in + c_skip * h_out * w_out)
                           + act_b * n * cin * lpad),
    )(x, cx, ahp, awpt, php, pwpt)
    h0 = h0.reshape(n, cin, lpad)     # free XLA reshape: trailing dims merge

    # ---- 2) conv1 + bias + BN1 partial stats
    w1m = jnp.transpose(params["w1"], (3, 0, 1, 2)).reshape(cmid, 9 * cin).astype(act_dt)
    b1 = params["b1"].reshape(cmid, 1).astype(jnp.float32)
    h1, pstats1 = pl.pallas_call(
        functools.partial(_conv_bias_stats_kernel, cin=cin, wp=wp, q=q, s_off=s_off),
        out_shape=(jax.ShapeDtypeStruct((n, cmid, lpad), act_dt),
                   jax.ShapeDtypeStruct((n, cmid, 2), jnp.float32)),
        grid=(n,),
        in_specs=[
            pl.BlockSpec((1, cin, lpad), lambda i: (i, 0, 0)),
            pl.BlockSpec((cmid, 9 * cin), lambda i: (0, 0)),
            pl.BlockSpec((cmid, 1), lambda i: (0, 0)),
            pl.BlockSpec((1, q), lambda i: (0, 0)),
        ],
        out_specs=(pl.BlockSpec((1, cmid, lpad), lambda i: (i, 0, 0)),
                   pl.BlockSpec((1, cmid, 2), lambda i: (i, 0, 0))),
        scratch_shapes=[pltpu.VMEM((9 * cin, q), act_dt)],
        compiler_params=pltpu.CompilerParams(
            dimension_semantics=("parallel",), vmem_limit_bytes=_VMEM_LIMIT),
        cost_estimate=pl.CostEstimate(
            flops=2 * n * cmid * 9 * cin * q, transcendentals=0,
            bytes_accessed=act_b * n * (cin + cmid) * lpad + act_b * cmid * 9 * cin),
    )(h0, w1m, b1, mask_q)
    scale1, shift1 = _bn_scale_shift(pstats1, params["g1"], params["be1"],
                                     n * h_out * w_out, eps)

    # ---- 3) BN1-apply + ReLU + conv2 + bias + BN2 partial stats (fused)
    w2m = jnp.transpose(params["w2"], (3, 0, 1, 2)).reshape(cout, 9 * cmid).astype(act_dt)
    b2 = params["b2"].reshape(cout, 1).astype(jnp.float32)
    h2, pstats2 = pl.pallas_call(
        functools.partial(_bn_relu_conv_bias_stats_kernel, cin=cmid, wp=wp, q=q, s_off=s_off),
        out_shape=(jax.ShapeDtypeStruct((n, cout, lpad), act_dt),
                   jax.ShapeDtypeStruct((n, cout, 2), jnp.float32)),
        grid=(n,),
        in_specs=[
            pl.BlockSpec((1, cmid, lpad), lambda i: (i, 0, 0)),
            pl.BlockSpec((cmid, 1), lambda i: (0, 0)),
            pl.BlockSpec((cmid, 1), lambda i: (0, 0)),
            pl.BlockSpec((1, lpad), lambda i: (0, 0)),
            pl.BlockSpec((cout, 9 * cmid), lambda i: (0, 0)),
            pl.BlockSpec((cout, 1), lambda i: (0, 0)),
            pl.BlockSpec((1, q), lambda i: (0, 0)),
        ],
        out_specs=(pl.BlockSpec((1, cout, lpad), lambda i: (i, 0, 0)),
                   pl.BlockSpec((1, cout, 2), lambda i: (i, 0, 0))),
        scratch_shapes=[pltpu.VMEM((9 * cmid, q), act_dt)],
        compiler_params=pltpu.CompilerParams(
            dimension_semantics=("parallel",), vmem_limit_bytes=_VMEM_LIMIT),
        cost_estimate=pl.CostEstimate(
            flops=2 * n * cout * 9 * cmid * q + 4 * n * cmid * lpad, transcendentals=0,
            bytes_accessed=act_b * n * (cmid + cout) * lpad + act_b * cout * 9 * cmid),
    )(h1, scale1, shift1, mask_l, w2m, b2, mask_q)
    scale2, shift2 = _bn_scale_shift(pstats2, params["g2"], params["be2"],
                                     n * h_out * w_out, eps)

    # ---- 4) final BN2-apply + ReLU
    out_flat = pl.pallas_call(
        _bn_relu_kernel,
        out_shape=jax.ShapeDtypeStruct((n, cout, lpad), jnp.float32),
        grid=(n,),
        in_specs=[
            pl.BlockSpec((1, cout, lpad), lambda i: (i, 0, 0)),
            pl.BlockSpec((cout, 1), lambda i: (0, 0)),
            pl.BlockSpec((cout, 1), lambda i: (0, 0)),
        ],
        out_specs=pl.BlockSpec((1, cout, lpad), lambda i: (i, 0, 0)),
        compiler_params=pltpu.CompilerParams(
            dimension_semantics=("parallel",), vmem_limit_bytes=_VMEM_LIMIT),
    )(h2, scale2, shift2)

    # crop the zero halo (cheap XLA slice on the small final tensor) -> NCHW output
    out = out_flat.reshape(n, cout, hp3, wp)[:, :, 1:h_out + 1, 1:w_out + 1]
    return out


# ----------------------------------------------------------------------------
# Pure-XLA reference (used to validate the f32 Pallas path)
# ----------------------------------------------------------------------------
def unet_expansion_stack_reference(x, cx, params, eps=1e-5):
    n, c_up, h_in, w_in = x.shape
    h_out, w_out = 2 * h_in, 2 * w_in
    ah = _bilinear_matrix(h_in, h_out)
    aw = _bilinear_matrix(w_in, w_out)
    up = jnp.einsum("ph,nchw->ncpw", ah, x, precision=lax.Precision.HIGHEST)
    up = jnp.einsum("qw,ncpw->ncpq", aw, up, precision=lax.Precision.HIGHEST)
    h = jnp.concatenate([up, cx], axis=1)

    def conv_bn_relu(h, w_hwio, b, g, be):
        y = lax.conv_general_dilated(h, w_hwio, window_strides=(1, 1), padding="SAME",
                                     dimension_numbers=("NCHW", "HWIO", "NCHW"),
                                     precision=lax.Precision.HIGHEST)
        y = y + b.reshape(1, -1, 1, 1)
        mean = jnp.mean(y, axis=(0, 2, 3), keepdims=True)
        var = jnp.mean((y - mean) ** 2, axis=(0, 2, 3), keepdims=True)
        y = (y - mean) * lax.rsqrt(var + eps) * g.reshape(1, -1, 1, 1) + be.reshape(1, -1, 1, 1)
        return jnp.maximum(y, 0.0)

    h = conv_bn_relu(h, params["w1"], params["b1"], params["g1"], params["be1"])
    h = conv_bn_relu(h, params["w2"], params["b2"], params["g2"], params["be2"])
    return h


def init_params(key, in_channels, out_channels, kernel_size=3):
    """Deterministic synthetic parameters. Conv weights stored HWIO: (kh, kw, Cin, Cout)."""
    mid = out_channels
    k1, k2, k3, k4 = jax.random.split(key, 4)
    std1 = 1.0 / jnp.sqrt(in_channels * kernel_size * kernel_size)
    std2 = 1.0 / jnp.sqrt(mid * kernel_size * kernel_size)
    return {
        "w1": std1 * jax.random.normal(k1, (kernel_size, kernel_size, in_channels, mid), jnp.float32),
        "b1": std1 * jax.random.normal(k2, (mid,), jnp.float32),
        "g1": jnp.ones((mid,), jnp.float32),
        "be1": jnp.zeros((mid,), jnp.float32),
        "w2": std2 * jax.random.normal(k3, (kernel_size, kernel_size, mid, out_channels), jnp.float32),
        "b2": std2 * jax.random.normal(k4, (out_channels,), jnp.float32),
        "g2": jnp.ones((out_channels,), jnp.float32),
        "be2": jnp.zeros((out_channels,), jnp.float32),
    }


if __name__ == "__main__":
    # UnetExpansionStack(in_channels=8, out_channels=4):
    #   x has 4 channels, skip connection cx has 4 channels -> concat = 8 = in_channels.
    N, C_UP, H_IN, W_IN = 2, 4, 16, 16
    C_SKIP = 4
    IN_CH, OUT_CH = C_UP + C_SKIP, 4

    key = jax.random.PRNGKey(0)
    kx, kc, kp = jax.random.split(key, 3)
    x = jax.random.normal(kx, (N, C_UP, H_IN, W_IN), jnp.float32)
    cx = jax.random.normal(kc, (N, C_SKIP, 2 * H_IN, 2 * W_IN), jnp.float32)
    params = init_params(kp, IN_CH, OUT_CH)

    # f32 path: validate against the XLA reference
    out_f32 = jax.block_until_ready(unet_expansion_stack(x, cx, params, use_bf16=False))
    ref = jax.block_until_ready(unet_expansion_stack_reference(x, cx, params))
    assert out_f32.shape == (N, OUT_CH, 2 * H_IN, 2 * W_IN), out_f32.shape
    err = float(jnp.max(jnp.abs(out_f32 - ref)))
    assert err == err and err < 5e-2, f"max abs err vs reference: {err}"

    # bf16 MXU/DMA path (default, v6e/v7x recommendation)
    out_bf16 = jax.block_until_ready(unet_expansion_stack(x, cx, params, use_bf16=True))
    assert out_bf16.shape == (N, OUT_CH, 2 * H_IN, 2 * W_IN), out_bf16.shape
    assert bool(jnp.all(jnp.isfinite(out_bf16)))

    # TODO(synk): BatchNorm running_mean/running_var buffer updates (module state) are
    # not modeled; forward uses batch statistics as a freshly constructed .train() module.
    print("KERNEL_OK")
</pallas_src>

<mosaic_0001>
module attributes {stable_mosaic.version = 11 : i64} {
  func.func @_upsample_concat_kernel(%arg0: i32, %arg1: memref<1x4x16x16xf32, #tpu.memory_space<vmem>>, %arg2: memref<1x4x32x32xf32, #tpu.memory_space<vmem>>, %arg3: memref<35x16xf32, #tpu.memory_space<vmem>>, %arg4: memref<16x34xf32, #tpu.memory_space<vmem>>, %arg5: memref<35x32xf32, #tpu.memory_space<vmem>>, %arg6: memref<32x34xf32, #tpu.memory_space<vmem>>, %arg7: memref<1x8x35x34xf32, #tpu.memory_space<vmem>>) attributes {dimension_semantics = [#tpu.dimension_semantics<parallel>], iteration_bounds = array<i64: 2>, scalar_prefetch = 0 : i64, scratch_operands = 0 : i64, tpu.core_type = #tpu.core_type<tc>, window_params = [{transform_indices = @transform_0, window_bounds = array<i64: 1, 4, 16, 16>}, {transform_indices = @transform_1, window_bounds = array<i64: 1, 4, 32, 32>}, {pipeline_mode = #tpu.pipeline_mode<synchronous>, transform_indices = @transform_2, window_bounds = array<i64: 35, 16>}, {pipeline_mode = #tpu.pipeline_mode<synchronous>, transform_indices = @transform_3, window_bounds = array<i64: 16, 34>}, {pipeline_mode = #tpu.pipeline_mode<synchronous>, transform_indices = @transform_4, window_bounds = array<i64: 35, 32>}, {pipeline_mode = #tpu.pipeline_mode<synchronous>, transform_indices = @transform_5, window_bounds = array<i64: 32, 34>}, {transform_indices = @transform_6, window_bounds = array<i64: 1, 8, 35, 34>}]} {
    %c0 = arith.constant 0 : index
    %c0_0 = arith.constant 0 : index
    %c0_1 = arith.constant 0 : index
    %c0_2 = arith.constant 0 : index
    %0 = vector.load %arg1[%c0, %c0_0, %c0_1, %c0_2] : memref<1x4x16x16xf32, #tpu.memory_space<vmem>>, vector<1x4x16x16xf32>
    %1 = vector.shape_cast %0 : vector<1x4x16x16xf32> to vector<4x16x16xf32>
    %2 = vector.shape_cast %1 : vector<4x16x16xf32> to vector<64x16xf32>
    %c0_3 = arith.constant 0 : index
    %c0_4 = arith.constant 0 : index
    %3 = vector.load %arg4[%c0_3, %c0_4] : memref<16x34xf32, #tpu.memory_space<vmem>>, vector<16x34xf32>
    %cst = arith.constant dense<0.000000e+00> : vector<64x34xf32>
    %4 = tpu.matmul %2, %3, %cst {dimension_numbers = #tpu.dot_dimension_numbers<[1], [0], [0], [1], [0, 0, 1, 1], [], []>} : vector<64x16xf32>, vector<16x34xf32>, vector<64x34xf32> -> vector<64x34xf32>
    %5 = vector.shape_cast %4 : vector<64x34xf32> to vector<4x16x34xf32>
    %c0_5 = arith.constant 0 : index
    %c0_6 = arith.constant 0 : index
    %6 = vector.load %arg3[%c0_5, %c0_6] : memref<35x16xf32, #tpu.memory_space<vmem>>, vector<35x16xf32>
    %7 = vector.shape_cast %6 : vector<35x16xf32> to vector<1x35x16xf32>
    %8 = vector.shape_cast %7 : vector<1x35x16xf32> to vector<1x35x16xf32>
    %9 = vector.broadcast %8 : vector<1x35x16xf32> to vector<4x35x16xf32>
    %cst_7 = arith.constant dense<0.000000e+00> : vector<4x35x34xf32>
    %10 = tpu.matmul %9, %5, %cst_7 {dimension_numbers = #tpu.dot_dimension_numbers<[2], [1], [1], [2], [0, 0, 0, 1, 1, 2], [0], [0]>} : vector<4x35x16xf32>, vector<4x16x34xf32>, vector<4x35x34xf32> -> vector<4x35x34xf32>
    %c0_8 = arith.constant 0 : index
    %c0_9 = arith.constant 0 : index
    %c0_10 = arith.constant 0 : index
    %c0_11 = arith.constant 0 : index
    %11 = vector.load %arg7[%c0_8, %c0_9, %c0_10, %c0_11] : memref<1x8x35x34xf32, #tpu.memory_space<vmem>>, vector<1x4x35x34xf32>
    %12 = vector.shape_cast %11 : vector<1x4x35x34xf32> to vector<4x35x34xf32>
    %13 = vector.shape_cast %10 : vector<4x35x34xf32> to vector<1x4x35x34xf32>
    tpu.vector_store %arg7[%c0_8, %c0_9, %c0_10, %c0_11], %13 {strides = array<i32>} : memref<1x8x35x34xf32, #tpu.memory_space<vmem>>, vector<1x4x35x34xf32>,
    %c0_12 = arith.constant 0 : index
    %c0_13 = arith.constant 0 : index
    %c0_14 = arith.constant 0 : index
    %c0_15 = arith.constant 0 : index
    %14 = vector.load %arg2[%c0_12, %c0_13, %c0_14, %c0_15] : memref<1x4x32x32xf32, #tpu.memory_space<vmem>>, vector<1x4x32x32xf32>
    %15 = vector.shape_cast %14 : vector<1x4x32x32xf32> to vector<4x32x32xf32>
    %16 = vector.shape_cast %15 : vector<4x32x32xf32> to vector<128x32xf32>
    %c0_16 = arith.constant 0 : index
    %c0_17 = arith.constant 0 : index
    %17 = vector.load %arg6[%c0_16, %c0_17] : memref<32x34xf32, #tpu.memory_space<vmem>>, vector<32x34xf32>
    %cst_18 = arith.constant dense<0.000000e+00> : vector<128x34xf32>
    %18 = tpu.matmul %16, %17, %cst_18 {dimension_numbers = #tpu.dot_dimension_numbers<[1], [0], [0], [1], [0, 0, 1, 1], [], []>} : vector<128x32xf32>, vector<32x34xf32>, vector<128x34xf32> -> vector<128x34xf32>
    %19 = vector.shape_cast %18 : vector<128x34xf32> to vector<4x32x34xf32>
    %c0_19 = arith.constant 0 : index
    %c0_20 = arith.constant 0 : index
    %20 = vector.load %arg5[%c0_19, %c0_20] : memref<35x32xf32, #tpu.memory_space<vmem>>, vector<35x32xf32>
    %21 = vector.shape_cast %20 : vector<35x32xf32> to vector<1x35x32xf32>
    %22 = vector.shape_cast %21 : vector<1x35x32xf32> to vector<1x35x32xf32>
    %23 = vector.broadcast %22 : vector<1x35x32xf32> to vector<4x35x32xf32>
    %cst_21 = arith.constant dense<0.000000e+00> : vector<4x35x34xf32>
    %24 = tpu.matmul %23, %19, %cst_21 {dimension_numbers = #tpu.dot_dimension_numbers<[2], [1], [1], [2], [0, 0, 0, 1, 1, 2], [0], [0]>} : vector<4x35x32xf32>, vector<4x32x34xf32>, vector<4x35x34xf32> -> vector<4x35x34xf32>
    %c0_22 = arith.constant 0 : index
    %c4 = arith.constant 4 : index
    %c0_23 = arith.constant 0 : index
    %c0_24 = arith.constant 0 : index
    %25 = vector.load %arg7[%c0_22, %c4, %c0_23, %c0_24] : memref<1x8x35x34xf32, #tpu.memory_space<vmem>>, vector<1x4x35x34xf32>
    %26 = vector.shape_cast %25 : vector<1x4x35x34xf32> to vector<4x35x34xf32>
    %27 = vector.shape_cast %24 : vector<4x35x34xf32> to vector<1x4x35x34xf32>
    tpu.vector_store %arg7[%c0_22, %c4, %c0_23, %c0_24], %27 {strides = array<i32>} : memref<1x8x35x34xf32, #tpu.memory_space<vmem>>, vector<1x4x35x34xf32>,
    return
  }
  func.func @transform_0(%arg0: i32) -> (i32, i32, i32, i32) {
    %c0_i32 = arith.constant 0 : i32
    %c0_i32_0 = arith.constant 0 : i32
    %c0_i32_1 = arith.constant 0 : i32
    %c0_i32_2 = arith.constant 0 : i32
    return %arg0, %c0_i32, %c0_i32_0, %c0_i32_1 : i32, i32, i32, i32
  }
  func.func @transform_1(%arg0: i32) -> (i32, i32, i32, i32) {
    %c0_i32 = arith.constant 0 : i32
    %c0_i32_0 = arith.constant 0 : i32
    %c0_i32_1 = arith.constant 0 : i32
    %c0_i32_2 = arith.constant 0 : i32
    return %arg0, %c0_i32, %c0_i32_0, %c0_i32_1 : i32, i32, i32, i32
  }
  func.func @transform_2(%arg0: i32) -> (i32, i32) {
    %c0_i32 = arith.constant 0 : i32
    %c0_i32_0 = arith.constant 0 : i32
    %c0_i32_1 = arith.constant 0 : i32
    return %c0_i32, %c0_i32_0 : i32, i32
  }
  func.func @transform_3(%arg0: i32) -> (i32, i32) {
    %c0_i32 = arith.constant 0 : i32
    %c0_i32_0 = arith.constant 0 : i32
    %c0_i32_1 = arith.constant 0 : i32
    return %c0_i32, %c0_i32_0 : i32, i32
  }
  func.func @transform_4(%arg0: i32) -> (i32, i32) {
    %c0_i32 = arith.constant 0 : i32
    %c0_i32_0 = arith.constant 0 : i32
    %c0_i32_1 = arith.constant 0 : i32
    return %c0_i32, %c0_i32_0 : i32, i32
  }
  func.func @transform_5(%arg0: i32) -> (i32, i32) {
    %c0_i32 = arith.constant 0 : i32
    %c0_i32_0 = arith.constant 0 : i32
    %c0_i32_1 = arith.constant 0 : i32
    return %c0_i32, %c0_i32_0 : i32, i32
  }
  func.func @transform_6(%arg0: i32) -> (i32, i32, i32, i32) {
    %c0_i32 = arith.constant 0 : i32
    %c0_i32_0 = arith.constant 0 : i32
    %c0_i32_1 = arith.constant 0 : i32
    %c0_i32_2 = arith.constant 0 : i32
    return %arg0, %c0_i32, %c0_i32_0, %c0_i32_1 : i32, i32, i32, i32
  }
}

module attributes {stable_mosaic.version = 11 : i64} {
  func.func @_conv_bias_stats_kernel(%arg0: i32, %arg1: memref<1x8x1190xf32, #tpu.memory_space<vmem>>, %arg2: memref<4x72xf32, #tpu.memory_space<vmem>>, %arg3: memref<4x1xf32, #tpu.memory_space<vmem>>, %arg4: memref<1x1088xf32, #tpu.memory_space<vmem>>, %arg5: memref<1x4x1190xf32, #tpu.memory_space<vmem>>, %arg6: memref<1x4x2xf32, #tpu.memory_space<vmem>>, %arg7: memref<72x1088xf32, #tpu.memory_space<vmem>>) attributes {dimension_semantics = [#tpu.dimension_semantics<parallel>], iteration_bounds = array<i64: 2>, scalar_prefetch = 0 : i64, scratch_operands = 1 : i64, tpu.core_type = #tpu.core_type<tc>, window_params = [{transform_indices = @transform_0, window_bounds = array<i64: 1, 8, 1190>}, {pipeline_mode = #tpu.pipeline_mode<synchronous>, transform_indices = @transform_1, window_bounds = array<i64: 4, 72>}, {pipeline_mode = #tpu.pipeline_mode<synchronous>, transform_indices = @transform_2, window_bounds = array<i64: 4, 1>}, {pipeline_mode = #tpu.pipeline_mode<synchronous>, transform_indices = @transform_3, window_bounds = array<i64: 1, 1088>}, {transform_indices = @transform_4, window_bounds = array<i64: 1, 4, 1190>}, {transform_indices = @transform_5, window_bounds = array<i64: 1, 4, 2>}]} {
    %c0 = arith.constant 0 : index
    %c0_0 = arith.constant 0 : index
    %c0_1 = arith.constant 0 : index
    %0 = vector.load %arg1[%c0, %c0_0, %c0_1] : memref<1x8x1190xf32, #tpu.memory_space<vmem>>, vector<1x8x1190xf32>
    %1 = vector.shape_cast %0 : vector<1x8x1190xf32> to vector<8x1190xf32>
    %2 = vector.extract_strided_slice %1 {offsets = [0, 0], sizes = [8, 1088], strides = [1, 1]} : vector<8x1190xf32> to vector<8x1088xf32>
    %c0_2 = arith.constant 0 : index
    %c0_3 = arith.constant 0 : index
    %3 = vector.load %arg7[%c0_2, %c0_3] : memref<72x1088xf32, #tpu.memory_space<vmem>>, vector<8x1088xf32>
    tpu.vector_store %arg7[%c0_2, %c0_3], %2 {strides = array<i32>} : memref<72x1088xf32, #tpu.memory_space<vmem>>, vector<8x1088xf32>,
    %4 = vector.extract_strided_slice %1 {offsets = [0, 1], sizes = [8, 1088], strides = [1, 1]} : vector<8x1190xf32> to vector<8x1088xf32>
    %c8 = arith.constant 8 : index
    %c0_4 = arith.constant 0 : index
    %5 = vector.load %arg7[%c8, %c0_4] : memref<72x1088xf32, #tpu.memory_space<vmem>>, vector<8x1088xf32>
    tpu.vector_store %arg7[%c8, %c0_4], %4 {strides = array<i32>} : memref<72x1088xf32, #tpu.memory_space<vmem>>, vector<8x1088xf32>,
    %6 = vector.extract_strided_slice %1 {offsets = [0, 2], sizes = [8, 1088], strides = [1, 1]} : vector<8x1190xf32> to vector<8x1088xf32>
    %c16 = arith.constant 16 : index
    %c0_5 = arith.constant 0 : index
    %7 = vector.load %arg7[%c16, %c0_5] : memref<72x1088xf32, #tpu.memory_space<vmem>>, vector<8x1088xf32>
    tpu.vector_store %arg7[%c16, %c0_5], %6 {strides = array<i32>} : memref<72x1088xf32, #tpu.memory_space<vmem>>, vector<8x1088xf32>,
    %8 = vector.extract_strided_slice %1 {offsets = [0, 34], sizes = [8, 1088], strides = [1, 1]} : vector<8x1190xf32> to vector<8x1088xf32>
    %c24 = arith.constant 24 : index
    %c0_6 = arith.constant 0 : index
    %9 = vector.load %arg7[%c24, %c0_6] : memref<72x1088xf32, #tpu.memory_space<vmem>>, vector<8x1088xf32>
    tpu.vector_store %arg7[%c24, %c0_6], %8 {strides = array<i32>} : memref<72x1088xf32, #tpu.memory_space<vmem>>, vector<8x1088xf32>,
    %10 = vector.extract_strided_slice %1 {offsets = [0, 35], sizes = [8, 1088], strides = [1, 1]} : vector<8x1190xf32> to vector<8x1088xf32>
    %c32 = arith.constant 32 : index
    %c0_7 = arith.constant 0 : index
    %11 = vector.load %arg7[%c32, %c0_7] : memref<72x1088xf32, #tpu.memory_space<vmem>>, vector<8x1088xf32>
    tpu.vector_store %arg7[%c32, %c0_7], %10 {strides = array<i32>} : memref<72x1088xf32, #tpu.memory_space<vmem>>, vector<8x1088xf32>,
    %12 = vector.extract_strided_slice %1 {offsets = [0, 36], sizes = [8, 1088], strides = [1, 1]} : vector<8x1190xf32> to vector<8x1088xf32>
    %c40 = arith.constant 40 : index
    %c0_8 = arith.constant 0 : index
    %13 = vector.load %arg7[%c40, %c0_8] : memref<72x1088xf32, #tpu.memory_space<vmem>>, vector<8x1088xf32>
    tpu.vector_store %arg7[%c40, %c0_8], %12 {strides = array<i32>} : memref<72x1088xf32, #tpu.memory_space<vmem>>, vector<8x1088xf32>,
    %14 = vector.extract_strided_slice %1 {offsets = [0, 68], sizes = [8, 1088], strides = [1, 1]} : vector<8x1190xf32> to vector<8x1088xf32>
    %c48 = arith.constant 48 : index
    %c0_9 = arith.constant 0 : index
    %15 = vector.load %arg7[%c48, %c0_9] : memref<72x1088xf32, #tpu.memory_space<vmem>>, vector<8x1088xf32>
    tpu.vector_store %arg7[%c48, %c0_9], %14 {strides = array<i32>} : memref<72x1088xf32, #tpu.memory_space<vmem>>, vector<8x1088xf32>,
    %16 = vector.extract_strided_slice %1 {offsets = [0, 69], sizes = [8, 1088], strides = [1, 1]} : vector<8x1190xf32> to vector<8x1088xf32>
    %c56 = arith.constant 56 : index
    %c0_10 = arith.constant 0 : index
    %17 = vector.load %arg7[%c56, %c0_10] : memref<72x1088xf32, #tpu.memory_space<vmem>>, vector<8x1088xf32>
    tpu.vector_store %arg7[%c56, %c0_10], %16 {strides = array<i32>} : memref<72x1088xf32, #tpu.memory_space<vmem>>, vector<8x1088xf32>,
    %18 = vector.extract_strided_slice %1 {offsets = [0, 70], sizes = [8, 1088], strides = [1, 1]} : vector<8x1190xf32> to vector<8x1088xf32>
    %c64 = arith.constant 64 : index
    %c0_11 = arith.constant 0 : index
    %19 = vector.load %arg7[%c64, %c0_11] : memref<72x1088xf32, #tpu.memory_space<vmem>>, vector<8x1088xf32>
    tpu.vector_store %arg7[%c64, %c0_11], %18 {strides = array<i32>} : memref<72x1088xf32, #tpu.memory_space<vmem>>, vector<8x1088xf32>,
    %c0_12 = arith.constant 0 : index
    %c0_13 = arith.constant 0 : index
    %20 = vector.load %arg2[%c0_12, %c0_13] : memref<4x72xf32, #tpu.memory_space<vmem>>, vector<4x72xf32>
    %c0_14 = arith.constant 0 : index
    %c0_15 = arith.constant 0 : index
    %21 = vector.load %arg7[%c0_14, %c0_15] : memref<72x1088xf32, #tpu.memory_space<vmem>>, vector<72x1088xf32>
    %cst = arith.constant dense<0.000000e+00> : vector<4x1088xf32>
    %22 = tpu.matmul %20, %21, %cst {dimension_numbers = #tpu.dot_dimension_numbers<[1], [0], [0], [1], [0, 0, 1, 1], [], []>} : vector<4x72xf32>, vector<72x1088xf32>, vector<4x1088xf32> -> vector<4x1088xf32>
    %c0_16 = arith.constant 0 : index
    %c0_17 = arith.constant 0 : index
    %23 = vector.load %arg3[%c0_16, %c0_17] : memref<4x1xf32, #tpu.memory_space<vmem>>, vector<4x1xf32>
    %24 = vector.broadcast %23 : vector<4x1xf32> to vector<4x1088xf32>
    %25 = arith.addf %22, %24 : vector<4x1088xf32>
    %c0_18 = arith.constant 0 : index
    %c0_19 = arith.constant 0 : index
    %26 = vector.load %arg4[%c0_18, %c0_19] : memref<1x1088xf32, #tpu.memory_space<vmem>>, vector<1x1088xf32>
    %27 = vector.broadcast %26 : vector<1x1088xf32> to vector<4x1088xf32>
    %28 = arith.mulf %25, %27 : vector<4x1088xf32>
    %cst_20 = arith.constant dense<0.000000e+00> : vector<4xf32>
    %29 = vector.multi_reduction <add>, %28, %cst_20 [1] : vector<4x1088xf32> to vector<4xf32>
    %30 = vector.shape_cast %29 : vector<4xf32> to vector<4x1xf32>
    %c0_21 = arith.constant 0 : index
    %c0_22 = arith.constant 0 : index
    %c0_23 = arith.constant 0 : index
    %31 = vector.load %arg6[%c0_21, %c0_22, %c0_23] : memref<1x4x2xf32, #tpu.memory_space<vmem>>, vector<1x4x1xf32>
    %32 = vector.shape_cast %31 : vector<1x4x1xf32> to vector<4x1xf32>
    %33 = vector.shape_cast %30 : vector<4x1xf32> to vector<1x4x1xf32>
    tpu.vector_store %arg6[%c0_21, %c0_22, %c0_23], %33 {strides = array<i32>} : memref<1x4x2xf32, #tpu.memory_space<vmem>>, vector<1x4x1xf32>,
    %34 = arith.mulf %28, %28 : vector<4x1088xf32>
    %cst_24 = arith.constant dense<0.000000e+00> : vector<4xf32>
    %35 = vector.multi_reduction <add>, %34, %cst_24 [1] : vector<4x1088xf32> to vector<4xf32>
    %36 = vector.shape_cast %35 : vector<4xf32> to vector<4x1xf32>
    %c0_25 = arith.constant 0 : index
    %c0_26 = arith.constant 0 : index
    %c1 = arith.constant 1 : index
    %37 = vector.load %arg6[%c0_25, %c0_26, %c1] : memref<1x4x2xf32, #tpu.memory_space<vmem>>, vector<1x4x1xf32>
    %38 = vector.shape_cast %37 : vector<1x4x1xf32> to vector<4x1xf32>
    %39 = vector.shape_cast %36 : vector<4x1xf32> to vector<1x4x1xf32>
    tpu.vector_store %arg6[%c0_25, %c0_26, %c1], %39 {strides = array<i32>} : memref<1x4x2xf32, #tpu.memory_space<vmem>>, vector<1x4x1xf32>,
    %cst_27 = arith.constant 0.000000e+00 : f32
    %40 = vector.broadcast %cst_27 : f32 to vector<4x1190xf32>
    %c0_28 = arith.constant 0 : index
    %c0_29 = arith.constant 0 : index
    %c0_30 = arith.constant 0 : index
    %41 = vector.load %arg5[%c0_28, %c0_29, %c0_30] : memref<1x4x1190xf32, #tpu.memory_space<vmem>>, vector<1x4x1190xf32>
    %42 = vector.shape_cast %41 : vector<1x4x1190xf32> to vector<4x1190xf32>
    %43 = vector.shape_cast %40 : vector<4x1190xf32> to vector<1x4x1190xf32>
    tpu.vector_store %arg5[%c0_28, %c0_29, %c0_30], %43 {strides = array<i32>} : memref<1x4x1190xf32, #tpu.memory_space<vmem>>, vector<1x4x1190xf32>,
    %c0_31 = arith.constant 0 : index
    %c0_32 = arith.constant 0 : index
    %c35 = arith.constant 35 : index
    %44 = vector.load %arg5[%c0_31, %c0_32, %c35] : memref<1x4x1190xf32, #tpu.memory_space<vmem>>, vector<1x4x1088xf32>
    %45 = vector.shape_cast %44 : vector<1x4x1088xf32> to vector<4x1088xf32>
    %46 = vector.shape_cast %28 : vector<4x1088xf32> to vector<1x4x1088xf32>
    tpu.vector_store %arg5[%c0_31, %c0_32, %c35], %46 {strides = array<i32>} : memref<1x4x1190xf32, #tpu.memory_space<vmem>>, vector<1x4x1088xf32>,
    return
  }
  func.func @transform_0(%arg0: i32) -> (i32, i32, i32) {
    %c0_i32 = arith.constant 0 : i32
    %c0_i32_0 = arith.constant 0 : i32
    %c0_i32_1 = arith.constant 0 : i32
    return %arg0, %c0_i32, %c0_i32_0 : i32, i32, i32
  }
  func.func @transform_1(%arg0: i32) -> (i32, i32) {
    %c0_i32 = arith.constant 0 : i32
    %c0_i32_0 = arith.constant 0 : i32
    %c0_i32_1 = arith.constant 0 : i32
    return %c0_i32, %c0_i32_0 : i32, i32
  }
  func.func @transform_2(%arg0: i32) -> (i32, i32) {
    %c0_i32 = arith.constant 0 : i32
    %c0_i32_0 = arith.constant 0 : i32
    %c0_i32_1 = arith.constant 0 : i32
    return %c0_i32, %c0_i32_0 : i32, i32
  }
  func.func @transform_3(%arg0: i32) -> (i32, i32) {
    %c0_i32 = arith.constant 0 : i32
    %c0_i32_0 = arith.constant 0 : i32
    %c0_i32_1 = arith.constant 0 : i32
    return %c0_i32, %c0_i32_0 : i32, i32
  }
  func.func @transform_4(%arg0: i32) -> (i32, i32, i32) {
    %c0_i32 = arith.constant 0 : i32
    %c0_i32_0 = arith.constant 0 : i32
    %c0_i32_1 = arith.constant 0 : i32
    return %arg0, %c0_i32, %c0_i32_0 : i32, i32, i32
  }
  func.func @transform_5(%arg0: i32) -> (i32, i32, i32) {
    %c0_i32 = arith.constant 0 : i32
    %c0_i32_0 = arith.constant 0 : i32
    %c0_i32_1 = arith.constant 0 : i32
    return %arg0, %c0_i32, %c0_i32_0 : i32, i32, i32
  }
}

module attributes {stable_mosaic.version = 11 : i64} {
  func.func @_bn_relu_conv_bias_stats_kernel(%arg0: i32, %arg1: memref<1x4x1190xf32, #tpu.memory_space<vmem>>, %arg2: memref<4x1xf32, #tpu.memory_space<vmem>>, %arg3: memref<4x1xf32, #tpu.memory_space<vmem>>, %arg4: memref<1x1190xf32, #tpu.memory_space<vmem>>, %arg5: memref<4x36xf32, #tpu.memory_space<vmem>>, %arg6: memref<4x1xf32, #tpu.memory_space<vmem>>, %arg7: memref<1x1088xf32, #tpu.memory_space<vmem>>, %arg8: memref<1x4x1190xf32, #tpu.memory_space<vmem>>, %arg9: memref<1x4x2xf32, #tpu.memory_space<vmem>>, %arg10: memref<36x1088xf32, #tpu.memory_space<vmem>>) attributes {dimension_semantics = [#tpu.dimension_semantics<parallel>], iteration_bounds = array<i64: 2>, scalar_prefetch = 0 : i64, scratch_operands = 1 : i64, tpu.core_type = #tpu.core_type<tc>, window_params = [{transform_indices = @transform_0, window_bounds = array<i64: 1, 4, 1190>}, {pipeline_mode = #tpu.pipeline_mode<synchronous>, transform_indices = @transform_1, window_bounds = array<i64: 4, 1>}, {pipeline_mode = #tpu.pipeline_mode<synchronous>, transform_indices = @transform_2, window_bounds = array<i64: 4, 1>}, {pipeline_mode = #tpu.pipeline_mode<synchronous>, transform_indices = @transform_3, window_bounds = array<i64: 1, 1190>}, {pipeline_mode = #tpu.pipeline_mode<synchronous>, transform_indices = @transform_4, window_bounds = array<i64: 4, 36>}, {pipeline_mode = #tpu.pipeline_mode<synchronous>, transform_indices = @transform_5, window_bounds = array<i64: 4, 1>}, {pipeline_mode = #tpu.pipeline_mode<synchronous>, transform_indices = @transform_6, window_bounds = array<i64: 1, 1088>}, {transform_indices = @transform_7, window_bounds = array<i64: 1, 4, 1190>}, {transform_indices = @transform_8, window_bounds = array<i64: 1, 4, 2>}]} {
    %c0 = arith.constant 0 : index
    %c0_0 = arith.constant 0 : index
    %c0_1 = arith.constant 0 : index
    %0 = vector.load %arg1[%c0, %c0_0, %c0_1] : memref<1x4x1190xf32, #tpu.memory_space<vmem>>, vector<1x4x1190xf32>
    %1 = vector.shape_cast %0 : vector<1x4x1190xf32> to vector<4x1190xf32>
    %c0_2 = arith.constant 0 : index
    %c0_3 = arith.constant 0 : index
    %2 = vector.load %arg2[%c0_2, %c0_3] : memref<4x1xf32, #tpu.memory_space<vmem>>, vector<4x1xf32>
    %3 = vector.broadcast %2 : vector<4x1xf32> to vector<4x1190xf32>
    %4 = arith.mulf %1, %3 : vector<4x1190xf32>
    %c0_4 = arith.constant 0 : index
    %c0_5 = arith.constant 0 : index
    %5 = vector.load %arg3[%c0_4, %c0_5] : memref<4x1xf32, #tpu.memory_space<vmem>>, vector<4x1xf32>
    %6 = vector.broadcast %5 : vector<4x1xf32> to vector<4x1190xf32>
    %7 = arith.addf %4, %6 : vector<4x1190xf32>
    %cst = arith.constant 0.000000e+00 : f32
    %8 = vector.broadcast %cst : f32 to vector<4x1190xf32>
    %9 = arith.maximumf %7, %8 : vector<4x1190xf32>
    %c0_6 = arith.constant 0 : index
    %c0_7 = arith.constant 0 : index
    %10 = vector.load %arg4[%c0_6, %c0_7] : memref<1x1190xf32, #tpu.memory_space<vmem>>, vector<1x1190xf32>
    %11 = vector.broadcast %10 : vector<1x1190xf32> to vector<4x1190xf32>
    %12 = arith.mulf %9, %11 : vector<4x1190xf32>
    %13 = vector.extract_strided_slice %12 {offsets = [0, 0], sizes = [4, 1088], strides = [1, 1]} : vector<4x1190xf32> to vector<4x1088xf32>
    %c0_8 = arith.constant 0 : index
    %c0_9 = arith.constant 0 : index
    %14 = vector.load %arg10[%c0_8, %c0_9] : memref<36x1088xf32, #tpu.memory_space<vmem>>, vector<4x1088xf32>
    tpu.vector_store %arg10[%c0_8, %c0_9], %13 {strides = array<i32>} : memref<36x1088xf32, #tpu.memory_space<vmem>>, vector<4x1088xf32>,
    %15 = vector.extract_strided_slice %12 {offsets = [0, 1], sizes = [4, 1088], strides = [1, 1]} : vector<4x1190xf32> to vector<4x1088xf32>
    %c4 = arith.constant 4 : index
    %c0_10 = arith.constant 0 : index
    %16 = vector.load %arg10[%c4, %c0_10] : memref<36x1088xf32, #tpu.memory_space<vmem>>, vector<4x1088xf32>
    tpu.vector_store %arg10[%c4, %c0_10], %15 {strides = array<i32>} : memref<36x1088xf32, #tpu.memory_space<vmem>>, vector<4x1088xf32>,
    %17 = vector.extract_strided_slice %12 {offsets = [0, 2], sizes = [4, 1088], strides = [1, 1]} : vector<4x1190xf32> to vector<4x1088xf32>
    %c8 = arith.constant 8 : index
    %c0_11 = arith.constant 0 : index
    %18 = vector.load %arg10[%c8, %c0_11] : memref<36x1088xf32, #tpu.memory_space<vmem>>, vector<4x1088xf32>
    tpu.vector_store %arg10[%c8, %c0_11], %17 {strides = array<i32>} : memref<36x1088xf32, #tpu.memory_space<vmem>>, vector<4x1088xf32>,
    %19 = vector.extract_strided_slice %12 {offsets = [0, 34], sizes = [4, 1088], strides = [1, 1]} : vector<4x1190xf32> to vector<4x1088xf32>
    %c12 = arith.constant 12 : index
    %c0_12 = arith.constant 0 : index
    %20 = vector.load %arg10[%c12, %c0_12] : memref<36x1088xf32, #tpu.memory_space<vmem>>, vector<4x1088xf32>
    tpu.vector_store %arg10[%c12, %c0_12], %19 {strides = array<i32>} : memref<36x1088xf32, #tpu.memory_space<vmem>>, vector<4x1088xf32>,
    %21 = vector.extract_strided_slice %12 {offsets = [0, 35], sizes = [4, 1088], strides = [1, 1]} : vector<4x1190xf32> to vector<4x1088xf32>
    %c16 = arith.constant 16 : index
    %c0_13 = arith.constant 0 : index
    %22 = vector.load %arg10[%c16, %c0_13] : memref<36x1088xf32, #tpu.memory_space<vmem>>, vector<4x1088xf32>
    tpu.vector_store %arg10[%c16, %c0_13], %21 {strides = array<i32>} : memref<36x1088xf32, #tpu.memory_space<vmem>>, vector<4x1088xf32>,
    %23 = vector.extract_strided_slice %12 {offsets = [0, 36], sizes = [4, 1088], strides = [1, 1]} : vector<4x1190xf32> to vector<4x1088xf32>
    %c20 = arith.constant 20 : index
    %c0_14 = arith.constant 0 : index
    %24 = vector.load %arg10[%c20, %c0_14] : memref<36x1088xf32, #tpu.memory_space<vmem>>, vector<4x1088xf32>
    tpu.vector_store %arg10[%c20, %c0_14], %23 {strides = array<i32>} : memref<36x1088xf32, #tpu.memory_space<vmem>>, vector<4x1088xf32>,
    %25 = vector.extract_strided_slice %12 {offsets = [0, 68], sizes = [4, 1088], strides = [1, 1]} : vector<4x1190xf32> to vector<4x1088xf32>
    %c24 = arith.constant 24 : index
    %c0_15 = arith.constant 0 : index
    %26 = vector.load %arg10[%c24, %c0_15] : memref<36x1088xf32, #tpu.memory_space<vmem>>, vector<4x1088xf32>
    tpu.vector_store %arg10[%c24, %c0_15], %25 {strides = array<i32>} : memref<36x1088xf32, #tpu.memory_space<vmem>>, vector<4x1088xf32>,
    %27 = vector.extract_strided_slice %12 {offsets = [0, 69], sizes = [4, 1088], strides = [1, 1]} : vector<4x1190xf32> to vector<4x1088xf32>
    %c28 = arith.constant 28 : index
    %c0_16 = arith.constant 0 : index
    %28 = vector.load %arg10[%c28, %c0_16] : memref<36x1088xf32, #tpu.memory_space<vmem>>, vector<4x1088xf32>
    tpu.vector_store %arg10[%c28, %c0_16], %27 {strides = array<i32>} : memref<36x1088xf32, #tpu.memory_space<vmem>>, vector<4x1088xf32>,
    %29 = vector.extract_strided_slice %12 {offsets = [0, 70], sizes = [4, 1088], strides = [1, 1]} : vector<4x1190xf32> to vector<4x1088xf32>
    %c32 = arith.constant 32 : index
    %c0_17 = arith.constant 0 : index
    %30 = vector.load %arg10[%c32, %c0_17] : memref<36x1088xf32, #tpu.memory_space<vmem>>, vector<4x1088xf32>
    tpu.vector_store %arg10[%c32, %c0_17], %29 {strides = array<i32>} : memref<36x1088xf32, #tpu.memory_space<vmem>>, vector<4x1088xf32>,
    %c0_18 = arith.constant 0 : index
    %c0_19 = arith.constant 0 : index
    %31 = vector.load %arg5[%c0_18, %c0_19] : memref<4x36xf32, #tpu.memory_space<vmem>>, vector<4x36xf32>
    %c0_20 = arith.constant 0 : index
    %c0_21 = arith.constant 0 : index
    %32 = vector.load %arg10[%c0_20, %c0_21] : memref<36x1088xf32, #tpu.memory_space<vmem>>, vector<36x1088xf32>
    %cst_22 = arith.constant dense<0.000000e+00> : vector<4x1088xf32>
    %33 = tpu.matmul %31, %32, %cst_22 {dimension_numbers = #tpu.dot_dimension_numbers<[1], [0], [0], [1], [0, 0, 1, 1], [], []>} : vector<4x36xf32>, vector<36x1088xf32>, vector<4x1088xf32> -> vector<4x1088xf32>
    %c0_23 = arith.constant 0 : index
    %c0_24 = arith.constant 0 : index
    %34 = vector.load %arg6[%c0_23, %c0_24] : memref<4x1xf32, #tpu.memory_space<vmem>>, vector<4x1xf32>
    %35 = vector.broadcast %34 : vector<4x1xf32> to vector<4x1088xf32>
    %36 = arith.addf %33, %35 : vector<4x1088xf32>
    %c0_25 = arith.constant 0 : index
    %c0_26 = arith.constant 0 : index
    %37 = vector.load %arg7[%c0_25, %c0_26] : memref<1x1088xf32, #tpu.memory_space<vmem>>, vector<1x1088xf32>
    %38 = vector.broadcast %37 : vector<1x1088xf32> to vector<4x1088xf32>
    %39 = arith.mulf %36, %38 : vector<4x1088xf32>
    %cst_27 = arith.constant dense<0.000000e+00> : vector<4xf32>
    %40 = vector.multi_reduction <add>, %39, %cst_27 [1] : vector<4x1088xf32> to vector<4xf32>
    %41 = vector.shape_cast %40 : vector<4xf32> to vector<4x1xf32>
    %c0_28 = arith.constant 0 : index
    %c0_29 = arith.constant 0 : index
    %c0_30 = arith.constant 0 : index
    %42 = vector.load %arg9[%c0_28, %c0_29, %c0_30] : memref<1x4x2xf32, #tpu.memory_space<vmem>>, vector<1x4x1xf32>
    %43 = vector.shape_cast %42 : vector<1x4x1xf32> to vector<4x1xf32>
    %44 = vector.shape_cast %41 : vector<4x1xf32> to vector<1x4x1xf32>
    tpu.vector_store %arg9[%c0_28, %c0_29, %c0_30], %44 {strides = array<i32>} : memref<1x4x2xf32, #tpu.memory_space<vmem>>, vector<1x4x1xf32>,
    %45 = arith.mulf %39, %39 : vector<4x1088xf32>
    %cst_31 = arith.constant dense<0.000000e+00> : vector<4xf32>
    %46 = vector.multi_reduction <add>, %45, %cst_31 [1] : vector<4x1088xf32> to vector<4xf32>
    %47 = vector.shape_cast %46 : vector<4xf32> to vector<4x1xf32>
    %c0_32 = arith.constant 0 : index
    %c0_33 = arith.constant 0 : index
    %c1 = arith.constant 1 : index
    %48 = vector.load %arg9[%c0_32, %c0_33, %c1] : memref<1x4x2xf32, #tpu.memory_space<vmem>>, vector<1x4x1xf32>
    %49 = vector.shape_cast %48 : vector<1x4x1xf32> to vector<4x1xf32>
    %50 = vector.shape_cast %47 : vector<4x1xf32> to vector<1x4x1xf32>
    tpu.vector_store %arg9[%c0_32, %c0_33, %c1], %50 {strides = array<i32>} : memref<1x4x2xf32, #tpu.memory_space<vmem>>, vector<1x4x1xf32>,
    %cst_34 = arith.constant 0.000000e+00 : f32
    %51 = vector.broadcast %cst_34 : f32 to vector<4x1190xf32>
    %c0_35 = arith.constant 0 : index
    %c0_36 = arith.constant 0 : index
    %c0_37 = arith.constant 0 : index
    %52 = vector.load %arg8[%c0_35, %c0_36, %c0_37] : memref<1x4x1190xf32, #tpu.memory_space<vmem>>, vector<1x4x1190xf32>
    %53 = vector.shape_cast %52 : vector<1x4x1190xf32> to vector<4x1190xf32>
    %54 = vector.shape_cast %51 : vector<4x1190xf32> to vector<1x4x1190xf32>
    tpu.vector_store %arg8[%c0_35, %c0_36, %c0_37], %54 {strides = array<i32>} : memref<1x4x1190xf32, #tpu.memory_space<vmem>>, vector<1x4x1190xf32>,
    %c0_38 = arith.constant 0 : index
    %c0_39 = arith.constant 0 : index
    %c35 = arith.constant 35 : index
    %55 = vector.load %arg8[%c0_38, %c0_39, %c35] : memref<1x4x1190xf32, #tpu.memory_space<vmem>>, vector<1x4x1088xf32>
    %56 = vector.shape_cast %55 : vector<1x4x1088xf32> to vector<4x1088xf32>
    %57 = vector.shape_cast %39 : vector<4x1088xf32> to vector<1x4x1088xf32>
    tpu.vector_store %arg8[%c0_38, %c0_39, %c35], %57 {strides = array<i32>} : memref<1x4x1190xf32, #tpu.memory_space<vmem>>, vector<1x4x1088xf32>,
    return
  }
  func.func @transform_0(%arg0: i32) -> (i32, i32, i32) {
    %c0_i32 = arith.constant 0 : i32
    %c0_i32_0 = arith.constant 0 : i32
    %c0_i32_1 = arith.constant 0 : i32
    return %arg0, %c0_i32, %c0_i32_0 : i32, i32, i32
  }
  func.func @transform_1(%arg0: i32) -> (i32, i32) {
    %c0_i32 = arith.constant 0 : i32
    %c0_i32_0 = arith.constant 0 : i32
    %c0_i32_1 = arith.constant 0 : i32
    return %c0_i32, %c0_i32_0 : i32, i32
  }
  func.func @transform_2(%arg0: i32) -> (i32, i32) {
    %c0_i32 = arith.constant 0 : i32
    %c0_i32_0 = arith.constant 0 : i32
    %c0_i32_1 = arith.constant 0 : i32
    return %c0_i32, %c0_i32_0 : i32, i32
  }
  func.func @transform_3(%arg0: i32) -> (i32, i32) {
    %c0_i32 = arith.constant 0 : i32
    %c0_i32_0 = arith.constant 0 : i32
    %c0_i32_1 = arith.constant 0 : i32
    return %c0_i32, %c0_i32_0 : i32, i32
  }
  func.func @transform_4(%arg0: i32) -> (i32, i32) {
    %c0_i32 = arith.constant 0 : i32
    %c0_i32_0 = arith.constant 0 : i32
    %c0_i32_1 = arith.constant 0 : i32
    return %c0_i32, %c0_i32_0 : i32, i32
  }
  func.func @transform_5(%arg0: i32) -> (i32, i32) {
    %c0_i32 = arith.constant 0 : i32
    %c0_i32_0 = arith.constant 0 : i32
    %c0_i32_1 = arith.constant 0 : i32
    return %c0_i32, %c0_i32_0 : i32, i32
  }
  func.func @transform_6(%arg0: i32) -> (i32, i32) {
    %c0_i32 = arith.constant 0 : i32
    %c0_i32_0 = arith.constant 0 : i32
    %c0_i32_1 = arith.constant 0 : i32
    return %c0_i32, %c0_i32_0 : i32, i32
  }
  func.func @transform_7(%arg0: i32) -> (i32, i32, i32) {
    %c0_i32 = arith.constant 0 : i32
    %c0_i32_0 = arith.constant 0 : i32
    %c0_i32_1 = arith.constant 0 : i32
    return %arg0, %c0_i32, %c0_i32_0 : i32, i32, i32
  }
  func.func @transform_8(%arg0: i32) -> (i32, i32, i32) {
    %c0_i32 = arith.constant 0 : i32
    %c0_i32_0 = arith.constant 0 : i32
    %c0_i32_1 = arith.constant 0 : i32
    return %arg0, %c0_i32, %c0_i32_0 : i32, i32, i32
  }
}

module attributes {stable_mosaic.version = 11 : i64} {
  func.func @_bn_relu_kernel(%arg0: i32, %arg1: memref<1x4x1190xf32, #tpu.memory_space<vmem>>, %arg2: memref<4x1xf32, #tpu.memory_space<vmem>>, %arg3: memref<4x1xf32, #tpu.memory_space<vmem>>, %arg4: memref<1x4x1190xf32, #tpu.memory_space<vmem>>) attributes {dimension_semantics = [#tpu.dimension_semantics<parallel>], iteration_bounds = array<i64: 2>, scalar_prefetch = 0 : i64, scratch_operands = 0 : i64, tpu.core_type = #tpu.core_type<tc>, window_params = [{transform_indices = @transform_0, window_bounds = array<i64: 1, 4, 1190>}, {pipeline_mode = #tpu.pipeline_mode<synchronous>, transform_indices = @transform_1, window_bounds = array<i64: 4, 1>}, {pipeline_mode = #tpu.pipeline_mode<synchronous>, transform_indices = @transform_2, window_bounds = array<i64: 4, 1>}, {transform_indices = @transform_3, window_bounds = array<i64: 1, 4, 1190>}]} {
    %c0 = arith.constant 0 : index
    %c0_0 = arith.constant 0 : index
    %c0_1 = arith.constant 0 : index
    %0 = vector.load %arg1[%c0, %c0_0, %c0_1] : memref<1x4x1190xf32, #tpu.memory_space<vmem>>, vector<1x4x1190xf32>
    %1 = vector.shape_cast %0 : vector<1x4x1190xf32> to vector<4x1190xf32>
    %c0_2 = arith.constant 0 : index
    %c0_3 = arith.constant 0 : index
    %2 = vector.load %arg2[%c0_2, %c0_3] : memref<4x1xf32, #tpu.memory_space<vmem>>, vector<4x1xf32>
    %3 = vector.broadcast %2 : vector<4x1xf32> to vector<4x1190xf32>
    %4 = arith.mulf %1, %3 : vector<4x1190xf32>
    %c0_4 = arith.constant 0 : index
    %c0_5 = arith.constant 0 : index
    %5 = vector.load %arg3[%c0_4, %c0_5] : memref<4x1xf32, #tpu.memory_space<vmem>>, vector<4x1xf32>
    %6 = vector.broadcast %5 : vector<4x1xf32> to vector<4x1190xf32>
    %7 = arith.addf %4, %6 : vector<4x1190xf32>
    %cst = arith.constant 0.000000e+00 : f32
    %8 = vector.broadcast %cst : f32 to vector<4x1190xf32>
    %9 = arith.maximumf %7, %8 : vector<4x1190xf32>
    %c0_6 = arith.constant 0 : index
    %c0_7 = arith.constant 0 : index
    %c0_8 = arith.constant 0 : index
    %10 = vector.load %arg4[%c0_6, %c0_7, %c0_8] : memref<1x4x1190xf32, #tpu.memory_space<vmem>>, vector<1x4x1190xf32>
    %11 = vector.shape_cast %10 : vector<1x4x1190xf32> to vector<4x1190xf32>
    %12 = vector.shape_cast %9 : vector<4x1190xf32> to vector<1x4x1190xf32>
    tpu.vector_store %arg4[%c0_6, %c0_7, %c0_8], %12 {strides = array<i32>} : memref<1x4x1190xf32, #tpu.memory_space<vmem>>, vector<1x4x1190xf32>,
    return
  }
  func.func @transform_0(%arg0: i32) -> (i32, i32, i32) {
    %c0_i32 = arith.constant 0 : i32
    %c0_i32_0 = arith.constant 0 : i32
    %c0_i32_1 = arith.constant 0 : i32
    return %arg0, %c0_i32, %c0_i32_0 : i32, i32, i32
  }
  func.func @transform_1(%arg0: i32) -> (i32, i32) {
    %c0_i32 = arith.constant 0 : i32
    %c0_i32_0 = arith.constant 0 : i32
    %c0_i32_1 = arith.constant 0 : i32
    return %c0_i32, %c0_i32_0 : i32, i32
  }
  func.func @transform_2(%arg0: i32) -> (i32, i32) {
    %c0_i32 = arith.constant 0 : i32
    %c0_i32_0 = arith.constant 0 : i32
    %c0_i32_1 = arith.constant 0 : i32
    return %c0_i32, %c0_i32_0 : i32, i32
  }
  func.func @transform_3(%arg0: i32) -> (i32, i32, i32) {
    %c0_i32 = arith.constant 0 : i32
    %c0_i32_0 = arith.constant 0 : i32
    %c0_i32_1 = arith.constant 0 : i32
    return %arg0, %c0_i32, %c0_i32_0 : i32, i32, i32
  }
}

</mosaic_0001>

<llo_original>
// kernel: unet_expansion_stack.7
$region0: #{unet_expansion_stack.7}
  #allocation0 [shape = 'u32[]', space=smem, size = 0x4, offset = 0x4, fixed_abs, tag = 'smem constant byte address 0x4 - core index']
  #allocation1 [shape = 'u32[72,128]{1,0:T(1,128)}', space=vmem, size = 0x9000, scoped, tag = 'internal scratch']
  %s0 = inlined_call_operand.vmem [shape: f32[2,4,1190], index: 0, kind: input, shape index: {}]
  %s1 = inlined_call_operand.vmem [shape: f32[4,1], index: 1, kind: input, shape index: {}]
  %s2 = inlined_call_operand.vmem [shape: f32[4,1], index: 2, kind: input, shape index: {}]
  %s3 = inlined_call_operand.vmem [shape: f32[2,4,1190], index: 3, kind: output, shape index: {}]
  %s4 = sld [smem:[#allocation0]]
  $region45: #{unet_expansion_stack.7} parent=0
    _
  %s6 = ssub.s32 1, %s4
  %s7 = scalar_select 0, %s6, %s4
  loop: start=0, step=1, limit=4
  $region2: #{unet_expansion_stack.7} parent=0 // loop_pre_header
    _
  $region3: #{unet_expansion_stack.7} parent=0 // loop_header
    %s9 = sphi 0, %s13
    %p10 = scmp.ge.s32.totalorder %s9, 4
    %s19 = sphi 0, %s21
    %s22 = sphi 0, %s19
    %s23 = sphi 0, %s22
    %s39 = sphi 0, %s23
    %s43 = sphi 0, %s43
    %s45 = sphi 0, %s43
    %s46 = sphi 0, %s45
    %s60 = sphi 0, %s46
    %s64 = sphi 0, %s64
    %s66 = sphi 0, %s64
    %s67 = sphi 0, %s66
    %s81 = sphi 0, %s67
    %s87 = sphi 0, %s89
    %s90 = sphi 0, %s87
    %s91 = sphi 0, %s90
    %s107 = sphi 0, %s91
  $region4: #{unet_expansion_stack.7} parent=0 // loop_header_branch
    %12 = sbr.rel (%p10) target = $region8
  $region5: #{unet_expansion_stack.7} parent=0 // loop_body
    %s14 = ssub.s32 %s9, 1
    %s15 = ssub.s32 %s9, 2
    %s16 = sadd.s32 %s9, 1
    %s17 = ssub.s32 %s9, %s16
    %p18 = scmp.eq.s32.totalorder %s17, 0
    %s20 = sadd.s32 %s19, 1
    %s21 = scalar_select %p18, %s19, %s20
    %p24 = pneg %p18
    %p25 = scmp.eq.s32.totalorder %s9, 1
    %p26 = por %p24, %p25
    %p27 = scmp.ne.s32.totalorder %s19, %s22
    %p28 = scmp.eq.s32.totalorder %s9, 0
    %p29 = por %p27, %p28
    %p30 = scmp.ne.s32.totalorder %s19, %s22
    %p31 = scmp.eq.s32.totalorder %s14, 1
    %p32 = por %p30, %p31
    %p33 = scmp.ne.s32.totalorder %s22, %s23
    %p34 = scmp.eq.s32.totalorder %s14, 0
    %p35 = por %p33, %p34
    %p36 = scmp.ne.s32.totalorder %s22, %s23
    %p37 = scmp.eq.s32.totalorder %s15, 1
    %p38 = por %p36, %p37
    %p40 = scmp.ne.s32.totalorder %s23, %s39
    %p41 = scmp.eq.s32.totalorder %s15, 0
    %p42 = por %p40, %p41
    %s44 = sadd.s32 %s43, 1
    %p47 = scmp.eq.s32.totalorder %s9, 1
    %p48 = scmp.ne.s32.totalorder %s43, %s45
    %p49 = scmp.eq.s32.totalorder %s9, 0
    %p50 = por %p48, %p49
    %p51 = scmp.ne.s32.totalorder %s43, %s45
    %p52 = scmp.eq.s32.totalorder %s14, 1
    %p53 = por %p51, %p52
    %p54 = scmp.ne.s32.totalorder %s45, %s46
    %p55 = scmp.eq.s32.totalorder %s14, 0
    %p56 = por %p54, %p55
    %p57 = scmp.ne.s32.totalorder %s45, %s46
    %p58 = scmp.eq.s32.totalorder %s15, 1
    %p59 = por %p57, %p58
    %p61 = scmp.ne.s32.totalorder %s46, %s60
    %p62 = scmp.eq.s32.totalorder %s15, 0
    %p63 = por %p61, %p62
    %s65 = sadd.s32 %s64, 1
    %p68 = scmp.eq.s32.totalorder %s9, 1
    %p69 = scmp.ne.s32.totalorder %s64, %s66
    %p70 = scmp.eq.s32.totalorder %s9, 0
    %p71 = por %p69, %p70
    %p72 = scmp.ne.s32.totalorder %s64, %s66
    %p73 = scmp.eq.s32.totalorder %s14, 1
    %p74 = por %p72, %p73
    %p75 = scmp.ne.s32.totalorder %s66, %s67
    %p76 = scmp.eq.s32.totalorder %s14, 0
    %p77 = por %p75, %p76
    %p78 = scmp.ne.s32.totalorder %s66, %s67
    %p79 = scmp.eq.s32.totalorder %s15, 1
    %p80 = por %p78, %p79
    %p82 = scmp.ne.s32.totalorder %s67, %s81
    %p83 = scmp.eq.s32.totalorder %s15, 0
    %p84 = por %p82, %p83
    %s85 = ssub.s32 %s9, %s16
    %p86 = scmp.eq.s32.totalorder %s85, 0
    %s88 = sadd.s32 %s87, 1
    %s89 = scalar_select %p86, %s87, %s88
    %p92 = pneg %p86
    %p93 = scmp.eq.s32.totalorder %s9, 1
    %p94 = por %p92, %p93
    %p95 = scmp.ne.s32.totalorder %s87, %s90
    %p96 = scmp.eq.s32.totalorder %s9, 0
    %p97 = por %p95, %p96
    %p98 = scmp.ne.s32.totalorder %s87, %s90
    %p99 = scmp.eq.s32.totalorder %s14, 1
    %p100 = por %p98, %p99
    %p101 = scmp.ne.s32.totalorder %s90, %s91
    %p102 = scmp.eq.s32.totalorder %s14, 0
    %p103 = por %p101, %p102
    %p104 = scmp.ne.s32.totalorder %s90, %s91
    %p105 = scmp.eq.s32.totalorder %s15, 1
    %p106 = por %p104, %p105
    %p108 = scmp.ne.s32.totalorder %s91, %s107
    %p109 = scmp.eq.s32.totalorder %s15, 0
    %p110 = por %p108, %p109
    %p111 = scmp.le.s32.totalorder 1, %s9
    %p112 = scmp.lt.s32.totalorder %s9, 3
    %p113 = pnand %p111, %p112
    %p114 = pneg %p113
    // Predicated region
    $region9: #{unet_expansion_stack.7} parent=5 // pred_check
      _
    $region10: #{unet_expansion_stack.7} parent=5 // pred_check_branch
      %116 = sbr.rel (%p113) target = $region12
    $region11: #{unet_expansion_stack.7} parent=5 // pred_region
      %s117 = ssub.s32 %s9, 1
      // Predicated region
      $region13: #{unet_expansion_stack.7} parent=11 // pred_check
        %p118 = pneg %p56
      $region14: #{unet_expansion_stack.7} parent=11 // pred_check_branch
        %120 = sbr.rel (%p118) target = $region16
      $region15: #{unet_expansion_stack.7} parent=11 // pred_region
        _
      $region16: #{unet_expansion_stack.7} parent=11 // pred_fallthru
        _
      // Predicated region
      $region17: #{unet_expansion_stack.7} parent=11 // pred_check
        %p121 = pneg %p77
      $region18: #{unet_expansion_stack.7} parent=11 // pred_check_branch
        %123 = sbr.rel (%p121) target = $region20
      $region19: #{unet_expansion_stack.7} parent=11 // pred_region
        _
      $region20: #{unet_expansion_stack.7} parent=11 // pred_fallthru
        _
    $region12: #{unet_expansion_stack.7} parent=5 // pred_fallthru
      _
    %p124 = scmp.lt.s32.totalorder %s9, 2
    // Predicated region
    $region21: #{unet_expansion_stack.7} parent=5 // pred_check
      %p125 = pneg %p124
    $region22: #{unet_expansion_stack.7} parent=5 // pred_check_branch
      %127 = sbr.rel (%p125) target = $region24
    $region23: #{unet_expansion_stack.7} parent=5 // pred_region
      // Predicated region
      $region25: #{unet_expansion_stack.7} parent=23 // pred_check
        %p128 = pneg %p29
      $region26: #{unet_expansion_stack.7} parent=23 // pred_check_branch
        %130 = sbr.rel (%p128) target = $region28
      $region27: #{unet_expansion_stack.7} parent=23 // pred_region
        %p131 = scmp.lt.s32.totalorder %s9, 1
        %s132 = scalar_select %p131, %s9, 1
        %s133 = smul.addr %s132, 10
        %s134 = smul.addr %s133, 4
        %s135 = scalar_lea.vmem %s0, %s134
      $region28: #{unet_expansion_stack.7} parent=23 // pred_fallthru
        _
    $region24: #{unet_expansion_stack.7} parent=5 // pred_fallthru
      _
    %p136 = scmp.le.s32.totalorder 1, %s9
    %p137 = scmp.lt.s32.totalorder %s9, 3
    %p138 = pnand %p136, %p137
    %p139 = pneg %p138
    // Predicated region
    $region29: #{unet_expansion_stack.7} parent=5 // pred_check
      _
    $region30: #{unet_expansion_stack.7} parent=5 // pred_check_branch
      %141 = sbr.rel (%p138) target = $region32
    $region31: #{unet_expansion_stack.7} parent=5 // pred_region
      %s142 = ssub.s32 %s9, 1
      %p143 = scmp.lt.s32.totalorder %s14, 1
      %s144 = scalar_select %p143, %s14, 1
      %s145 = smul.addr %s144, 10
      %s146 = smul.addr %s145, 4
      %s147 = scalar_lea.vmem %s0, %s146
      %p148 = pneg %p35
      %p149 = pneg %p32
      %p150 = pneg %p56
      %p151 = pneg %p53
      %p152 = pneg %p77
      %p153 = pneg %p74
      %p154 = pneg %p103
      %p155 = pneg %p100
      %p156 = scmp.lt.s32.totalorder %s14, 1
      %s157 = scalar_select %p156, %s14, 1
      %s158 = smul.addr %s157, 10
      %s159 = smul.addr %s158, 4
      %s160 = scalar_lea.vmem %s3, %s159
      %p161 = scmp.lt.s32.totalorder %s14, 1
      %s162 = scalar_select %p161, %s14, 1
      %s163 = smul.addr %s162, 10
      %s164 = smul.addr %s163, 4
      %s165 = scalar_lea.vmem %s0, %s164
      %p166 = scmp.lt.s32.totalorder %s14, 1
      %s167 = scalar_select %p166, %s14, 1
      %s168 = smul.addr %s167, 10
      %s169 = smul.addr %s168, 4
      %s170 = scalar_lea.vmem %s3, %s169
      %v171 = vld [vmem:[%s165] sm:$0xff]
      %v172 = vld [vmem:[%s165 + $0x8] sm:$0xff]
      %v173 = vld [vmem:[%s165 + $0x10] sm:$0xff]
      %v174 = vld [vmem:[%s165 + $0x18] sm:$0xff]
      %v175 = vld [vmem:[%s165 + $0x20] sm:$0xff]
      %v176 = vld [vmem:[%s1] sm:$0xf]
      %178 = vset.pattern.permute.xlu0 0
      %179 = vperm.xlu0 %178, %v176
      %v180 = vpop.permute.xlu0 %179
      %v182 = vunpack.c.l.s4 839922192
      %v183 = vunpack.c.0.s8 %v182
      %v184 = vperm.slane %v180, %v183
      %v186 = vmul.f32 %v171, %v184
      %v187 = vmul.f32 %v172, %v184
      %v188 = vmul.f32 %v173, %v184
      %v189 = vmul.f32 %v174, %v184
      %v190 = vmul.f32 %v175, %v184
      %v191 = vld [vmem:[%s2] sm:$0xf]
      %193 = vset.pattern.permute.xlu0 0
      %194 = vperm.xlu0 %193, %v191
      %v195 = vpop.permute.xlu0 %194
      %v197 = vunpack.c.l.s4 839922192
      %v198 = vunpack.c.0.s8 %v197
      %v199 = vperm.slane %v195, %v198
      %v201 = vadd.f32 %v186, %v199
      %v202 = vadd.f32 %v187, %v199
      %v203 = vadd.f32 %v188, %v199
      %v204 = vadd.f32 %v189, %v199
      %v205 = vadd.f32 %v190, %v199
      %v206 = vmax.f32 %v201, 0.0
      %v207 = vmax.f32 %v202, 0.0
      %v208 = vmax.f32 %v203, 0.0
      %v209 = vmax.f32 %v204, 0.0
      %v210 = vmax.f32 %v205, 0.0
      %211 = vst [vmem:[%s170] sm:$0xff] %v206
      %212 = vst [vmem:[%s170 + $0x8] sm:$0xff] %v207
      %213 = vst [vmem:[%s170 + $0x10] sm:$0xff] %v208
      %214 = vst [vmem:[%s170 + $0x18] sm:$0xff] %v209
      %vm215 = vcmask 1043456
      %vm216 = vcmask 310276
      %vm217 = vmor %vm216, %vm215
      %218 = vst.msk [vmem:[%s170 + $0x20] sm:$0xff] %vm217, %v210
      %p219 = scmp.lt.s32.totalorder %s14, 1
      %s220 = scalar_select %p219, %s14, 1
      %s221 = smul.addr %s220, 10
      %s222 = smul.addr %s221, 4
      %s223 = scalar_lea.vmem %s3, %s222
      // Predicated region
      $region33: #{unet_expansion_stack.7} parent=31 // pred_check
        %p224 = pneg %p100
      $region34: #{unet_expansion_stack.7} parent=31 // pred_check_branch
        %226 = sbr.rel (%p224) target = $region36
      $region35: #{unet_expansion_stack.7} parent=31 // pred_region
        _
      $region36: #{unet_expansion_stack.7} parent=31 // pred_fallthru
        _
    $region32: #{unet_expansion_stack.7} parent=5 // pred_fallthru
      _
    %p227 = scmp.le.s32.totalorder 2, %s9
    // Predicated region
    $region37: #{unet_expansion_stack.7} parent=5 // pred_check
      %p228 = pneg %p227
    $region38: #{unet_expansion_stack.7} parent=5 // pred_check_branch
      %230 = sbr.rel (%p228) target = $region40
    $region39: #{unet_expansion_stack.7} parent=5 // pred_region
      %s231 = ssub.s32 %s9, 2
      // Predicated region
      $region41: #{unet_expansion_stack.7} parent=39 // pred_check
        %p232 = pneg %p106
      $region42: #{unet_expansion_stack.7} parent=39 // pred_check_branch
        %234 = sbr.rel (%p232) target = $region44
      $region43: #{unet_expansion_stack.7} parent=39 // pred_region
        %p235 = scmp.lt.s32.totalorder %s15, 1
        %s236 = scalar_select %p235, %s15, 1
        %s237 = smul.addr %s236, 10
        %s238 = smul.addr %s237, 4
        %s239 = scalar_lea.vmem %s3, %s238
      $region44: #{unet_expansion_stack.7} parent=39 // pred_fallthru
        _
    $region40: #{unet_expansion_stack.7} parent=5 // pred_fallthru
      _
  $region6: #{unet_expansion_stack.7} parent=0 // loop_footer
    %s13 = sadd.s32 1, %s9
  $region7: #{unet_expansion_stack.7} parent=0 // loop_footer_branch
    %8 = sbr.rel target = $region3
  $region8: #{unet_expansion_stack.7} parent=0 // loop_exit
    _

// kernel: unet_expansion_stack.4
$region0: #{unet_expansion_stack.4}
  #allocation0 [shape = 'u32[]', space=smem, size = 0x4, offset = 0x4, fixed_abs, tag = 'smem constant byte address 0x4 - core index']
  #allocation1 [shape = 'u32[72,128]{1,0:T(1,128)}', space=vmem, size = 0x9000, scoped, tag = 'internal scratch']
  %s0 = inlined_call_operand.vmem [shape: f32[2,4,16,16], index: 0, kind: input, shape index: {}]
  %s1 = inlined_call_operand.vmem [shape: f32[2,4,32,32], index: 1, kind: input, shape index: {}]
  %s2 = inlined_call_operand.vmem [shape: f32[35,16], index: 2, kind: input, shape index: {}]
  %s3 = inlined_call_operand.vmem [shape: f32[16,34], index: 3, kind: input, shape index: {}]
  %s4 = inlined_call_operand.vmem [shape: f32[35,32], index: 4, kind: input, shape index: {}]
  %s5 = inlined_call_operand.vmem [shape: f32[32,34], index: 5, kind: input, shape index: {}]
  %s6 = inlined_call_operand.vmem [shape: f32[2,8,35,34], index: 6, kind: output, shape index: {}]
  %s7 = sld [smem:[#allocation0]]
  $region57: #{unet_expansion_stack.4} parent=0
    _
  %s9 = ssub.s32 1, %s7
  %s10 = scalar_select 0, %s9, %s7
  loop: start=0, step=1, limit=4
  $region2: #{unet_expansion_stack.4} parent=0 // loop_pre_header
    _
  $region3: #{unet_expansion_stack.4} parent=0 // loop_header
    %s12 = sphi 0, %s16
    %p13 = scmp.ge.s32.totalorder %s12, 4
    %s22 = sphi 0, %s24
    %s25 = sphi 0, %s22
    %s26 = sphi 0, %s25
    %s42 = sphi 0, %s26
    %s48 = sphi 0, %s50
    %s51 = sphi 0, %s48
    %s52 = sphi 0, %s51
    %s68 = sphi 0, %s52
    %s72 = sphi 0, %s72
    %s74 = sphi 0, %s72
    %s75 = sphi 0, %s74
    %s89 = sphi 0, %s75
    %s93 = sphi 0, %s93
    %s95 = sphi 0, %s93
    %s96 = sphi 0, %s95
    %s110 = sphi 0, %s96
    %s114 = sphi 0, %s114
    %s116 = sphi 0, %s114
    %s117 = sphi 0, %s116
    %s131 = sphi 0, %s117
    %s135 = sphi 0, %s135
    %s137 = sphi 0, %s135
    %s138 = sphi 0, %s137
    %s152 = sphi 0, %s138
    %s158 = sphi 0, %s160
    %s161 = sphi 0, %s158
    %s162 = sphi 0, %s161
    %s178 = sphi 0, %s162
  $region4: #{unet_expansion_stack.4} parent=0 // loop_header_branch
    %15 = sbr.rel (%p13) target = $region8
  $region5: #{unet_expansion_stack.4} parent=0 // loop_body
    %s17 = ssub.s32 %s12, 1
    %s18 = ssub.s32 %s12, 2
    %s19 = sadd.s32 %s12, 1
    %s20 = ssub.s32 %s12, %s19
    %p21 = scmp.eq.s32.totalorder %s20, 0
    %s23 = sadd.s32 %s22, 1
    %s24 = scalar_select %p21, %s22, %s23
    %p27 = pneg %p21
    %p28 = scmp.eq.s32.totalorder %s12, 1
    %p29 = por %p27, %p28
    %p30 = scmp.ne.s32.totalorder %s22, %s25
    %p31 = scmp.eq.s32.totalorder %s12, 0
    %p32 = por %p30, %p31
    %p33 = scmp.ne.s32.totalorder %s22, %s25
    %p34 = scmp.eq.s32.totalorder %s17, 1
    %p35 = por %p33, %p34
    %p36 = scmp.ne.s32.totalorder %s25, %s26
    %p37 = scmp.eq.s32.totalorder %s17, 0
    %p38 = por %p36, %p37
    %p39 = scmp.ne.s32.totalorder %s25, %s26
    %p40 = scmp.eq.s32.totalorder %s18, 1
    %p41 = por %p39, %p40
    %p43 = scmp.ne.s32.totalorder %s26, %s42
    %p44 = scmp.eq.s32.totalorder %s18, 0
    %p45 = por %p43, %p44
    %s46 = ssub.s32 %s12, %s19
    %p47 = scmp.eq.s32.totalorder %s46, 0
    %s49 = sadd.s32 %s48, 1
    %s50 = scalar_select %p47, %s48, %s49
    %p53 = pneg %p47
    %p54 = scmp.eq.s32.totalorder %s12, 1
    %p55 = por %p53, %p54
    %p56 = scmp.ne.s32.totalorder %s48, %s51
    %p57 = scmp.eq.s32.totalorder %s12, 0
    %p58 = por %p56, %p57
    %p59 = scmp.ne.s32.totalorder %s48, %s51
    %p60 = scmp.eq.s32.totalorder %s17, 1
    %p61 = por %p59, %p60
    %p62 = scmp.ne.s32.totalorder %s51, %s52
    %p63 = scmp.eq.s32.totalorder %s17, 0
    %p64 = por %p62, %p63
    %p65 = scmp.ne.s32.totalorder %s51, %s52
    %p66 = scmp.eq.s32.totalorder %s18, 1
    %p67 = por %p65, %p66
    %p69 = scmp.ne.s32.totalorder %s52, %s68
    %p70 = scmp.eq.s32.totalorder %s18, 0
    %p71 = por %p69, %p70
    %s73 = sadd.s32 %s72, 1
    %p76 = scmp.eq.s32.totalorder %s12, 1
    %p77 = scmp.ne.s32.totalorder %s72, %s74
    %p78 = scmp.eq.s32.totalorder %s12, 0
    %p79 = por %p77, %p78
    %p80 = scmp.ne.s32.totalorder %s72, %s74
    %p81 = scmp.eq.s32.totalorder %s17, 1
    %p82 = por %p80, %p81
    %p83 = scmp.ne.s32.totalorder %s74, %s75
    %p84 = scmp.eq.s32.totalorder %s17, 0
    %p85 = por %p83, %p84
    %p86 = scmp.ne.s32.totalorder %s74, %s75
    %p87 = scmp.eq.s32.totalorder %s18, 1
    %p88 = por %p86, %p87
    %p90 = scmp.ne.s32.totalorder %s75, %s89
    %p91 = scmp.eq.s32.totalorder %s18, 0
    %p92 = por %p90, %p91
    %s94 = sadd.s32 %s93, 1
    %p97 = scmp.eq.s32.totalorder %s12, 1
    %p98 = scmp.ne.s32.totalorder %s93, %s95
    %p99 = scmp.eq.s32.totalorder %s12, 0
    %p100 = por %p98, %p99
    %p101 = scmp.ne.s32.totalorder %s93, %s95
    %p102 = scmp.eq.s32.totalorder %s17, 1
    %p103 = por %p101, %p102
    %p104 = scmp.ne.s32.totalorder %s95, %s96
    %p105 = scmp.eq.s32.totalorder %s17, 0
    %p106 = por %p104, %p105
    %p107 = scmp.ne.s32.totalorder %s95, %s96
    %p108 = scmp.eq.s32.totalorder %s18, 1
    %p109 = por %p107, %p108
    %p111 = scmp.ne.s32.totalorder %s96, %s110
    %p112 = scmp.eq.s32.totalorder %s18, 0
    %p113 = por %p111, %p112
    %s115 = sadd.s32 %s114, 1
    %p118 = scmp.eq.s32.totalorder %s12, 1
    %p119 = scmp.ne.s32.totalorder %s114, %s116
    %p120 = scmp.eq.s32.totalorder %s12, 0
    %p121 = por %p119, %p120
    %p122 = scmp.ne.s32.totalorder %s114, %s116
    %p123 = scmp.eq.s32.totalorder %s17, 1
    %p124 = por %p122, %p123
    %p125 = scmp.ne.s32.totalorder %s116, %s117
    %p126 = scmp.eq.s32.totalorder %s17, 0
    %p127 = por %p125, %p126
    %p128 = scmp.ne.s32.totalorder %s116, %s117
    %p129 = scmp.eq.s32.totalorder %s18, 1
    %p130 = por %p128, %p129
    %p132 = scmp.ne.s32.totalorder %s117, %s131
    %p133 = scmp.eq.s32.totalorder %s18, 0
    %p134 = por %p132, %p133
    %s136 = sadd.s32 %s135, 1
    %p139 = scmp.eq.s32.totalorder %s12, 1
    %p140 = scmp.ne.s32.totalorder %s135, %s137
    %p141 = scmp.eq.s32.totalorder %s12, 0
    %p142 = por %p140, %p141
    %p143 = scmp.ne.s32.totalorder %s135, %s137
    %p144 = scmp.eq.s32.totalorder %s17, 1
    %p145 = por %p143, %p144
    %p146 = scmp.ne.s32.totalorder %s137, %s138
    %p147 = scmp.eq.s32.totalorder %s17, 0
    %p148 = por %p146, %p147
    %p149 = scmp.ne.s32.totalorder %s137, %s138
    %p150 = scmp.eq.s32.totalorder %s18, 1
    %p151 = por %p149, %p150
    %p153 = scmp.ne.s32.totalorder %s138, %s152
    %p154 = scmp.eq.s32.totalorder %s18, 0
    %p155 = por %p153, %p154
    %s156 = ssub.s32 %s12, %s19
    %p157 = scmp.eq.s32.totalorder %s156, 0
    %s159 = sadd.s32 %s158, 1
    %s160 = scalar_select %p157, %s158, %s159
    %p163 = pneg %p157
    %p164 = scmp.eq.s32.totalorder %s12, 1
    %p165 = por %p163, %p164
    %p166 = scmp.ne.s32.totalorder %s158, %s161
    %p167 = scmp.eq.s32.totalorder %s12, 0
    %p168 = por %p166, %p167
    %p169 = scmp.ne.s32.totalorder %s158, %s161
    %p170 = scmp.eq.s32.totalorder %s17, 1
    %p171 = por %p169, %p170
    %p172 = scmp.ne.s32.totalorder %s161, %s162
    %p173 = scmp.eq.s32.totalorder %s17, 0
    %p174 = por %p172, %p173
    %p175 = scmp.ne.s32.totalorder %s161, %s162
    %p176 = scmp.eq.s32.totalorder %s18, 1
    %p177 = por %p175, %p176
    %p179 = scmp.ne.s32.totalorder %s162, %s178
    %p180 = scmp.eq.s32.totalorder %s18, 0
    %p181 = por %p179, %p180
    %p182 = scmp.le.s32.totalorder 1, %s12
    %p183 = scmp.lt.s32.totalorder %s12, 3
    %p184 = pnand %p182, %p183
    %p185 = pneg %p184
    // Predicated region
    $region9: #{unet_expansion_stack.4} parent=5 // pred_check
      _
    $region10: #{unet_expansion_stack.4} parent=5 // pred_check_branch
      %187 = sbr.rel (%p184) target = $region12
    $region11: #{unet_expansion_stack.4} parent=5 // pred_region
      %s188 = ssub.s32 %s12, 1
      // Predicated region
      $region13: #{unet_expansion_stack.4} parent=11 // pred_check
        %p189 = pneg %p85
      $region14: #{unet_expansion_stack.4} parent=11 // pred_check_branch
        %191 = sbr.rel (%p189) target = $region16
      $region15: #{unet_expansion_stack.4} parent=11 // pred_region
        _
      $region16: #{unet_expansion_stack.4} parent=11 // pred_fallthru
        _
      // Predicated region
      $region17: #{unet_expansion_stack.4} parent=11 // pred_check
        %p192 = pneg %p106
      $region18: #{unet_expansion_stack.4} parent=11 // pred_check_branch
        %194 = sbr.rel (%p192) target = $region20
      $region19: #{unet_expansion_stack.4} parent=11 // pred_region
        _
      $region20: #{unet_expansion_stack.4} parent=11 // pred_fallthru
        _
      // Predicated region
      $region21: #{unet_expansion_stack.4} parent=11 // pred_check
        %p195 = pneg %p127
      $region22: #{unet_expansion_stack.4} parent=11 // pred_check_branch
        %197 = sbr.rel (%p195) target = $region24
      $region23: #{unet_expansion_stack.4} parent=11 // pred_region
        _
      $region24: #{unet_expansion_stack.4} parent=11 // pred_fallthru
        _
      // Predicated region
      $region25: #{unet_expansion_stack.4} parent=11 // pred_check
        %p198 = pneg %p148
      $region26: #{unet_expansion_stack.4} parent=11 // pred_check_branch
        %200 = sbr.rel (%p198) target = $region28
      $region27: #{unet_expansion_stack.4} parent=11 // pred_region
        _
      $region28: #{unet_expansion_stack.4} parent=11 // pred_fallthru
        _
    $region12: #{unet_expansion_stack.4} parent=5 // pred_fallthru
      _
    %p201 = scmp.lt.s32.totalorder %s12, 2
    // Predicated region
    $region29: #{unet_expansion_stack.4} parent=5 // pred_check
      %p202 = pneg %p201
    $region30: #{unet_expansion_stack.4} parent=5 // pred_check_branch
      %204 = sbr.rel (%p202) target = $region32
    $region31: #{unet_expansion_stack.4} parent=5 // pred_region
      // Predicated region
      $region33: #{unet_expansion_stack.4} parent=31 // pred_check
        %p205 = pneg %p32
      $region34: #{unet_expansion_stack.4} parent=31 // pred_check_branch
        %207 = sbr.rel (%p205) target = $region36
      $region35: #{unet_expansion_stack.4} parent=31 // pred_region
        %p208 = scmp.lt.s32.totalorder %s12, 1
        %s209 = scalar_select %p208, %s12, 1
        %s210 = smul.addr %s209, 8
        %s211 = smul.addr %s210, 8
        %s212 = scalar_lea.vmem %s0, %s211
      $region36: #{unet_expansion_stack.4} parent=31 // pred_fallthru
        _
      // Predicated region
      $region37: #{unet_expansion_stack.4} parent=31 // pred_check
        %p213 = pneg %p58
      $region38: #{unet_expansion_stack.4} parent=31 // pred_check_branch
        %215 = sbr.rel (%p213) target = $region40
      $region39: #{unet_expansion_stack.4} parent=31 // pred_region
        %p216 = scmp.lt.s32.totalorder %s12, 1
        %s217 = scalar_select %p216, %s12, 1
        %s218 = smul.addr %s217, 16
        %s219 = smul.addr %s218, 8
        %s220 = scalar_lea.vmem %s1, %s219
      $region40: #{unet_expansion_stack.4} parent=31 // pred_fallthru
        _
    $region32: #{unet_expansion_stack.4} parent=5 // pred_fallthru
      _
    %p221 = scmp.le.s32.totalorder 1, %s12
    %p222 = scmp.lt.s32.totalorder %s12, 3
    %p223 = pnand %p221, %p222
    %p224 = pneg %p223
    // Predicated region
    $region41: #{unet_expansion_stack.4} parent=5 // pred_check
      _
    $region42: #{unet_expansion_stack.4} parent=5 // pred_check_branch
      %226 = sbr.rel (%p223) target = $region44
    $region43: #{unet_expansion_stack.4} parent=5 // pred_region
      %s227 = ssub.s32 %s12, 1
      %p228 = scmp.lt.s32.totalorder %s17, 1
      %s229 = scalar_select %p228, %s17, 1
      %s230 = smul.addr %s229, 8
      %s231 = smul.addr %s230, 8
      %s232 = scalar_lea.vmem %s0, %s231
      %p233 = pneg %p38
      %p234 = pneg %p35
      %p235 = scmp.lt.s32.totalorder %s17, 1
      %s236 = scalar_select %p235, %s17, 1
      %s237 = smul.addr %s236, 16
      %s238 = smul.addr %s237, 8
      %s239 = scalar_lea.vmem %s1, %s238
      %p240 = pneg %p64
      %p241 = pneg %p61
      %p242 = pneg %p85
      %p243 = pneg %p82
      %p244 = pneg %p106
      %p245 = pneg %p103
      %p246 = pneg %p127
      %p247 = pneg %p124
      %p248 = pneg %p148
      %p249 = pneg %p145
      %p250 = pneg %p174
      %p251 = pneg %p171
      %p252 = scmp.lt.s32.totalorder %s17, 1
      %s253 = scalar_select %p252, %s17, 1
      %s254 = smul.addr %s253, 40
      %s255 = smul.addr %s254, 8
      %s256 = scalar_lea.vmem %s6, %s255
      %p257 = scmp.lt.s32.totalorder %s17, 1
      %s258 = scalar_select %p257, %s17, 1
      %s259 = smul.addr %s258, 8
      %s260 = smul.addr %s259, 8
      %s261 = scalar_lea.vmem %s0, %s260
      %p262 = scmp.lt.s32.totalorder %s17, 1
      %s263 = scalar_select %p262, %s17, 1
      %s264 = smul.addr %s263, 16
      %s265 = smul.addr %s264, 8
      %s266 = scalar_lea.vmem %s1, %s265
      %p267 = scmp.lt.s32.totalorder %s17, 1
      %s268 = scalar_select %p267, %s17, 1
      %s269 = smul.addr %s268, 40
      %s270 = smul.addr %s269, 8
      %s271 = scalar_lea.vmem %s6, %s270
      %v272 = vld [vmem:[%s261] sm:$0xff]
      %v273 = vld [vmem:[%s261 + $0x8] sm:$0xff]
      %v274 = vld [vmem:[%s261 + $0x10] sm:$0xff]
      %v275 = vld [vmem:[%s261 + $0x18] sm:$0xff]
      %v276 = vld [vmem:[%s261 + $0x20] sm:$0xff]
      %v277 = vld [vmem:[%s261 + $0x28] sm:$0xff]
      %v278 = vld [vmem:[%s261 + $0x30] sm:$0xff]
      %v279 = vld [vmem:[%s261 + $0x38] sm:$0xff]
      %v280 = vld [vmem:[%s3] sm:$0xff]
      %v281 = vld [vmem:[%s3 + $0x8] sm:$0xff]
      %vm282 = vcmask 130048
      %v284 = vsel %vm282, %v272, 0
      %v287 = vsel %vm282, %v273, 0
      %v290 = vsel %vm282, %v274, 0
      %v293 = vsel %vm282, %v275, 0
      %v296 = vsel %vm282, %v276, 0
      %v299 = vsel %vm282, %v277, 0
      %v302 = vsel %vm282, %v278, 0
      %v305 = vsel %vm282, %v279, 0
      %307 = vmatpush.msra.mxu0 0.0
      %308 = vmatpush.msra.mxu0 0.0
      %309 = vmatpush.msra.mxu0 0.0
      %310 = vmatpush.msra.mxu0 0.0
      %311 = vmatpush.msra.mxu0 0.0
      %312 = vmatpush.msra.mxu0 0.0
      %313 = vmatpush.msra.mxu0 0.0
      %314 = vmatpush.msra.mxu0 0.0
      %315 = vmatpush.msra.mxu0 0.0
      %316 = vmatpush.msra.mxu0 0.0
      %317 = vmatpush.msra.mxu0 0.0
      %318 = vmatpush.msra.mxu0 0.0
      %319 = vmatpush.msra.mxu0 0.0
      %320 = vmatpush.msra.mxu0 0.0
      %321 = vmatpush.msra.mxu0 %v281
      %322 = vmatpush.msra.mxu0 %v280
      %323 = vmatmul.f32.gmra.mxu0 %v284
      %v324 = vpop.f32.mrf.mxu0
      %v325 = vadd.f32 0.0, %v324
      %326 = vmatmul.f32.gmra.mxu0 %v287
      %v327 = vpop.f32.mrf.mxu0
      %v328 = vadd.f32 0.0, %v327
      %329 = vmatmul.f32.gmra.mxu0 %v290
      %v330 = vpop.f32.mrf.mxu0
      %v331 = vadd.f32 0.0, %v330
      %332 = vmatmul.f32.gmra.mxu0 %v293
      %v333 = vpop.f32.mrf.mxu0
      %v334 = vadd.f32 0.0, %v333
      %335 = vmatmul.f32.gmra.mxu0 %v296
      %v336 = vpop.f32.mrf.mxu0
      %v337 = vadd.f32 0.0, %v336
      %338 = vmatmul.f32.gmra.mxu0 %v299
      %v339 = vpop.f32.mrf.mxu0
      %v340 = vadd.f32 0.0, %v339
      %341 = vmatmul.f32.gmra.mxu0 %v302
      %v342 = vpop.f32.mrf.mxu0
      %v343 = vadd.f32 0.0, %v342
      %344 = vmatmul.f32.gmra.mxu0 %v305
      %v345 = vpop.f32.mrf.mxu0
      %v346 = vadd.f32 0.0, %v345
      %347 = vdwg.mxu0
      %v348 = vld [vmem:[%s2] sm:$0xff]
      %v349 = vld [vmem:[%s2 + $0x8] sm:$0xff]
      %v350 = vld [vmem:[%s2 + $0x10] sm:$0xff]
      %v351 = vld [vmem:[%s2 + $0x18] sm:$0xff]
      %v352 = vld [vmem:[%s2 + $0x20] sm:$0x7]
      %v354 = vsel %vm282, %v348, 0
      %v357 = vsel %vm282, %v349, 0
      %v360 = vsel %vm282, %v350, 0
      %v363 = vsel %vm282, %v351, 0
      %v366 = vsel %vm282, %v352, 0
      %368 = vmatpush.msra.mxu0 0.0
      %369 = vmatpush.msra.mxu0 0.0
      %370 = vmatpush.msra.mxu0 0.0
      %371 = vmatpush.msra.mxu0 0.0
      %372 = vmatpush.msra.mxu0 0.0
      %373 = vmatpush.msra.mxu0 0.0
      %374 = vmatpush.msra.mxu0 0.0
      %375 = vmatpush.msra.mxu0 0.0
      %376 = vmatpush.msra.mxu0 0.0
      %377 = vmatpush.msra.mxu0 0.0
      %378 = vmatpush.msra.mxu0 0.0
      %379 = vmatpush.msra.mxu0 0.0
      %380 = vmatpush.msra.mxu0 0.0
      %381 = vmatpush.msra.mxu0 0.0
      %382 = vmatpush.msra.mxu0 %v328
      %383 = vmatpush.msra.mxu0 %v325
      %384 = vmatmul.f32.gmra.mxu0 %v354
      %v385 = vpop.f32.mrf.mxu0
      %v386 = vadd.f32 0.0, %v385
      %387 = vmatmul.f32.gmra.mxu0 %v357
      %v388 = vpop.f32.mrf.mxu0
      %v389 = vadd.f32 0.0, %v388
      %390 = vmatmul.f32.gmra.mxu0 %v360
      %v391 = vpop.f32.mrf.mxu0
      %v392 = vadd.f32 0.0, %v391
      %393 = vmatmul.f32.gmra.mxu0 %v363
      %v394 = vpop.f32.mrf.mxu0
      %v395 = vadd.f32 0.0, %v394
      %396 = vmatmul.f32.gmra.mxu0 %v366
      %v397 = vpop.f32.mrf.mxu0
      %v398 = vadd.f32 0.0, %v397
      %399 = vdwg.mxu0
      %400 = vmatpush.msra.mxu0 0.0
      %401 = vmatpush.msra.mxu0 0.0
      %402 = vmatpush.msra.mxu0 0.0
      %403 = vmatpush.msra.mxu0 0.0
      %404 = vmatpush.msra.mxu0 0.0
      %405 = vmatpush.msra.mxu0 0.0
      %406 = vmatpush.msra.mxu0 0.0
      %407 = vmatpush.msra.mxu0 0.0
      %408 = vmatpush.msra.mxu0 0.0
      %409 = vmatpush.msra.mxu0 0.0
      %410 = vmatpush.msra.mxu0 0.0
      %411 = vmatpush.msra.mxu0 0.0
      %412 = vmatpush.msra.mxu0 0.0
      %413 = vmatpush.msra.mxu0 0.0
      %414 = vmatpush.msra.mxu0 %v334
      %415 = vmatpush.msra.mxu0 %v331
      %416 = vmatmul.f32.gmra.mxu0 %v354
      %v417 = vpop.f32.mrf.mxu0
      %v418 = vadd.f32 0.0, %v417
      %419 = vmatmul.f32.gmra.mxu0 %v357
      %v420 = vpop.f32.mrf.mxu0
      %v421 = vadd.f32 0.0, %v420
      %422 = vmatmul.f32.gmra.mxu0 %v360
      %v423 = vpop.f32.mrf.mxu0
      %v424 = vadd.f32 0.0, %v423
      %425 = vmatmul.f32.gmra.mxu0 %v363
      %v426 = vpop.f32.mrf.mxu0
      %v427 = vadd.f32 0.0, %v426
      %428 = vmatmul.f32.gmra.mxu0 %v366
      %v429 = vpop.f32.mrf.mxu0
      %v430 = vadd.f32 0.0, %v429
      %431 = vdwg.mxu0
      %432 = vmatpush.msra.mxu0 0.0
      %433 = vmatpush.msra.mxu0 0.0
      %434 = vmatpush.msra.mxu0 0.0
      %435 = vmatpush.msra.mxu0 0.0
      %436 = vmatpush.msra.mxu0 0.0
      %437 = vmatpush.msra.mxu0 0.0
      %438 = vmatpush.msra.mxu0 0.0
      %439 = vmatpush.msra.mxu0 0.0
      %440 = vmatpush.msra.mxu0 0.0
      %441 = vmatpush.msra.mxu0 0.0
      %442 = vmatpush.msra.mxu0 0.0
      %443 = vmatpush.msra.mxu0 0.0
      %444 = vmatpush.msra.mxu0 0.0
      %445 = vmatpush.msra.mxu0 0.0
      %446 = vmatpush.msra.mxu0 %v340
      %447 = vmatpush.msra.mxu0 %v337
      %448 = vmatmul.f32.gmra.mxu0 %v354
      %v449 = vpop.f32.mrf.mxu0
      %v450 = vadd.f32 0.0, %v449
      %451 = vmatmul.f32.gmra.mxu0 %v357
      %v452 = vpop.f32.mrf.mxu0
      %v453 = vadd.f32 0.0, %v452
      %454 = vmatmul.f32.gmra.mxu0 %v360
      %v455 = vpop.f32.mrf.mxu0
      %v456 = vadd.f32 0.0, %v455
      %457 = vmatmul.f32.gmra.mxu0 %v363
      %v458 = vpop.f32.mrf.mxu0
      %v459 = vadd.f32 0.0, %v458
      %460 = vmatmul.f32.gmra.mxu0 %v366
      %v461 = vpop.f32.mrf.mxu0
      %v462 = vadd.f32 0.0, %v461
      %463 = vdwg.mxu0
      %464 = vmatpush.msra.mxu0 0.0
      %465 = vmatpush.msra.mxu0 0.0
      %466 = vmatpush.msra.mxu0 0.0
      %467 = vmatpush.msra.mxu0 0.0
      %468 = vmatpush.msra.mxu0 0.0
      %469 = vmatpush.msra.mxu0 0.0
      %470 = vmatpush.msra.mxu0 0.0
      %471 = vmatpush.msra.mxu0 0.0
      %472 = vmatpush.msra.mxu0 0.0
      %473 = vmatpush.msra.mxu0 0.0
      %474 = vmatpush.msra.mxu0 0.0
      %475 = vmatpush.msra.mxu0 0.0
      %476 = vmatpush.msra.mxu0 0.0
      %477 = vmatpush.msra.mxu0 0.0
      %478 = vmatpush.msra.mxu0 %v346
      %479 = vmatpush.msra.mxu0 %v343
      %480 = vmatmul.f32.gmra.mxu0 %v354
      %v481 = vpop.f32.mrf.mxu0
      %v482 = vadd.f32 0.0, %v481
      %483 = vmatmul.f32.gmra.mxu0 %v357
      %v484 = vpop.f32.mrf.mxu0
      %v485 = vadd.f32 0.0, %v484
      %486 = vmatmul.f32.gmra.mxu0 %v360
      %v487 = vpop.f32.mrf.mxu0
      %v488 = vadd.f32 0.0, %v487
      %489 = vmatmul.f32.gmra.mxu0 %v363
      %v490 = vpop.f32.mrf.mxu0
      %v491 = vadd.f32 0.0, %v490
      %492 = vmatmul.f32.gmra.mxu0 %v366
      %v493 = vpop.f32.mrf.mxu0
      %v494 = vadd.f32 0.0, %v493
      %495 = vdwg.mxu0
      %vm496 = vcmask 277504
      %497 = vst.msk [vmem:[%s271] sm:$0xff] %vm496, %v386
      %498 = vst.msk [vmem:[%s271 + $0x8] sm:$0xff] %vm496, %v389
      %499 = vst.msk [vmem:[%s271 + $0x10] sm:$0xff] %vm496, %v392
      %500 = vst.msk [vmem:[%s271 + $0x18] sm:$0xff] %vm496, %v395
      %vm501 = vcmask 272384
      %502 = vst.msk [vmem:[%s271 + $0x20] sm:$0x7] %vm501, %v398
      %503 = vst.msk [vmem:[%s271 + $0x28] sm:$0xff] %vm496, %v418
      %504 = vst.msk [vmem:[%s271 + $0x30] sm:$0xff] %vm496, %v421
      %505 = vst.msk [vmem:[%s271 + $0x38] sm:$0xff] %vm496, %v424
      %506 = vst.msk [vmem:[%s271 + $0x40] sm:$0xff] %vm496, %v427
      %507 = vst.msk [vmem:[%s271 + $0x48] sm:$0x7] %vm501, %v430
      %508 = vst.msk [vmem:[%s271 + $0x50] sm:$0xff] %vm496, %v450
      %509 = vst.msk [vmem:[%s271 + $0x58] sm:$0xff] %vm496, %v453
      %510 = vst.msk [vmem:[%s271 + $0x60] sm:$0xff] %vm496, %v456
      %511 = vst.msk [vmem:[%s271 + $0x68] sm:$0xff] %vm496, %v459
      %512 = vst.msk [vmem:[%s271 + $0x70] sm:$0x7] %vm501, %v462
      %513 = vst.msk [vmem:[%s271 + $0x78] sm:$0xff] %vm496, %v482
      %514 = vst.msk [vmem:[%s271 + $0x80] sm:$0xff] %vm496, %v485
      %515 = vst.msk [vmem:[%s271 + $0x88] sm:$0xff] %vm496, %v488
      %516 = vst.msk [vmem:[%s271 + $0x90] sm:$0xff] %vm496, %v491
      %517 = vst.msk [vmem:[%s271 + $0x98] sm:$0x7] %vm501, %v494
      %v518 = vld [vmem:[%s266] sm:$0xff]
      %v519 = vld [vmem:[%s266 + $0x8] sm:$0xff]
      %v520 = vld [vmem:[%s266 + $0x10] sm:$0xff]
      %v521 = vld [vmem:[%s266 + $0x18] sm:$0xff]
      %v522 = vld [vmem:[%s266 + $0x20] sm:$0xff]
      %v523 = vld [vmem:[%s266 + $0x28] sm:$0xff]
      %v524 = vld [vmem:[%s266 + $0x30] sm:$0xff]
      %v525 = vld [vmem:[%s266 + $0x38] sm:$0xff]
      %v526 = vld [vmem:[%s266 + $0x40] sm:$0xff]
      %v527 = vld [vmem:[%s266 + $0x48] sm:$0xff]
      %v528 = vld [vmem:[%s266 + $0x50] sm:$0xff]
      %v529 = vld [vmem:[%s266 + $0x58] sm:$0xff]
      %v530 = vld [vmem:[%s266 + $0x60] sm:$0xff]
      %v531 = vld [vmem:[%s266 + $0x68] sm:$0xff]
      %v532 = vld [vmem:[%s266 + $0x70] sm:$0xff]
      %v533 = vld [vmem:[%s266 + $0x78] sm:$0xff]
      %v534 = vld [vmem:[%s5] sm:$0xff]
      %v535 = vld [vmem:[%s5 + $0x8] sm:$0xff]
      %v536 = vld [vmem:[%s5 + $0x10] sm:$0xff]
      %v537 = vld [vmem:[%s5 + $0x18] sm:$0xff]
      %vm538 = vcmask 261120
      %v540 = vsel %vm538, %v518, 0
      %v543 = vsel %vm538, %v519, 0
      %v546 = vsel %vm538, %v520, 0
      %v549 = vsel %vm538, %v521, 0
      %v552 = vsel %vm538, %v522, 0
      %v555 = vsel %vm538, %v523, 0
      %v558 = vsel %vm538, %v524, 0
      %v561 = vsel %vm538, %v525, 0
      %v564 = vsel %vm538, %v526, 0
      %v567 = vsel %vm538, %v527, 0
      %v570 = vsel %vm538, %v528, 0
      %v573 = vsel %vm538, %v529, 0
      %v576 = vsel %vm538, %v530, 0
      %v579 = vsel %vm538, %v531, 0
      %v582 = vsel %vm538, %v532, 0
      %v585 = vsel %vm538, %v533, 0
      %587 = vmatpush.msra.mxu0 0.0
      %588 = vmatpush.msra.mxu0 0.0
      %589 = vmatpush.msra.mxu0 0.0
      %590 = vmatpush.msra.mxu0 0.0
      %591 = vmatpush.msra.mxu0 0.0
      %592 = vmatpush.msra.mxu0 0.0
      %593 = vmatpush.msra.mxu0 0.0
      %594 = vmatpush.msra.mxu0 0.0
      %595 = vmatpush.msra.mxu0 0.0
      %596 = vmatpush.msra.mxu0 0.0
      %597 = vmatpush.msra.mxu0 0.0
      %598 = vmatpush.msra.mxu0 0.0
      %599 = vmatpush.msra.mxu0 %v537
      %600 = vmatpush.msra.mxu0 %v536
      %601 = vmatpush.msra.mxu0 %v535
      %602 = vmatpush.msra.mxu0 %v534
      %603 = vmatmul.f32.gmra.mxu0 %v540
      %v604 = vpop.f32.mrf.mxu0
      %v605 = vadd.f32 0.0, %v604
      %606 = vmatmul.f32.gmra.mxu0 %v543
      %v607 = vpop.f32.mrf.mxu0
      %v608 = vadd.f32 0.0, %v607
      %609 = vmatmul.f32.gmra.mxu0 %v546
      %v610 = vpop.f32.mrf.mxu0
      %v611 = vadd.f32 0.0, %v610
      %612 = vmatmul.f32.gmra.mxu0 %v549
      %v613 = vpop.f32.mrf.mxu0
      %v614 = vadd.f32 0.0, %v613
      %615 = vmatmul.f32.gmra.mxu0 %v552
      %v616 = vpop.f32.mrf.mxu0
      %v617 = vadd.f32 0.0, %v616
      %618 = vmatmul.f32.gmra.mxu0 %v555
      %v619 = vpop.f32.mrf.mxu0
      %v620 = vadd.f32 0.0, %v619
      %621 = vmatmul.f32.gmra.mxu0 %v558
      %v622 = vpop.f32.mrf.mxu0
      %v623 = vadd.f32 0.0, %v622
      %624 = vmatmul.f32.gmra.mxu0 %v561
      %v625 = vpop.f32.mrf.mxu0
      %v626 = vadd.f32 0.0, %v625
      %627 = vmatmul.f32.gmra.mxu0 %v564
      %v628 = vpop.f32.mrf.mxu0
      %v629 = vadd.f32 0.0, %v628
      %630 = vmatmul.f32.gmra.mxu0 %v567
      %v631 = vpop.f32.mrf.mxu0
      %v632 = vadd.f32 0.0, %v631
      %633 = vmatmul.f32.gmra.mxu0 %v570
      %v634 = vpop.f32.mrf.mxu0
      %v635 = vadd.f32 0.0, %v634
      %636 = vmatmul.f32.gmra.mxu0 %v573
      %v637 = vpop.f32.mrf.mxu0
      %v638 = vadd.f32 0.0, %v637
      %639 = vmatmul.f32.gmra.mxu0 %v576
      %v640 = vpop.f32.mrf.mxu0
      %v641 = vadd.f32 0.0, %v640
      %642 = vmatmul.f32.gmra.mxu0 %v579
      %v643 = vpop.f32.mrf.mxu0
      %v644 = vadd.f32 0.0, %v643
      %645 = vmatmul.f32.gmra.mxu0 %v582
      %v646 = vpop.f32.mrf.mxu0
      %v647 = vadd.f32 0.0, %v646
      %648 = vmatmul.f32.gmra.mxu0 %v585
      %v649 = vpop.f32.mrf.mxu0
      %v650 = vadd.f32 0.0, %v649
      %651 = vdwg.mxu0
      %v652 = vld [vmem:[%s4] sm:$0xff]
      %v653 = vld [vmem:[%s4 + $0x8] sm:$0xff]
      %v654 = vld [vmem:[%s4 + $0x10] sm:$0xff]
      %v655 = vld [vmem:[%s4 + $0x18] sm:$0xff]
      %v656 = vld [vmem:[%s4 + $0x20] sm:$0x7]
      %v658 = vsel %vm538, %v652, 0
      %v661 = vsel %vm538, %v653, 0
      %v664 = vsel %vm538, %v654, 0
      %v667 = vsel %vm538, %v655, 0
      %v670 = vsel %vm538, %v656, 0
      %672 = vmatpush.msra.mxu0 0.0
      %673 = vmatpush.msra.mxu0 0.0
      %674 = vmatpush.msra.mxu0 0.0
      %675 = vmatpush.msra.mxu0 0.0
      %676 = vmatpush.msra.mxu0 0.0
      %677 = vmatpush.msra.mxu0 0.0
      %678 = vmatpush.msra.mxu0 0.0
      %679 = vmatpush.msra.mxu0 0.0
      %680 = vmatpush.msra.mxu0 0.0
      %681 = vmatpush.msra.mxu0 0.0
      %682 = vmatpush.msra.mxu0 0.0
      %683 = vmatpush.msra.mxu0 0.0
      %684 = vmatpush.msra.mxu0 %v614
      %685 = vmatpush.msra.mxu0 %v611
      %686 = vmatpush.msra.mxu0 %v608
      %687 = vmatpush.msra.mxu0 %v605
      %688 = vmatmul.f32.gmra.mxu0 %v658
      %v689 = vpop.f32.mrf.mxu0
      %v690 = vadd.f32 0.0, %v689
      %691 = vmatmul.f32.gmra.mxu0 %v661
      %v692 = vpop.f32.mrf.mxu0
      %v693 = vadd.f32 0.0, %v692
      %694 = vmatmul.f32.gmra.mxu0 %v664
      %v695 = vpop.f32.mrf.mxu0
      %v696 = vadd.f32 0.0, %v695
      %697 = vmatmul.f32.gmra.mxu0 %v667
      %v698 = vpop.f32.mrf.mxu0
      %v699 = vadd.f32 0.0, %v698
      %700 = vmatmul.f32.gmra.mxu0 %v670
      %v701 = vpop.f32.mrf.mxu0
      %v702 = vadd.f32 0.0, %v701
      %703 = vdwg.mxu0
      %704 = vmatpush.msra.mxu0 0.0
      %705 = vmatpush.msra.mxu0 0.0
      %706 = vmatpush.msra.mxu0 0.0
      %707 = vmatpush.msra.mxu0 0.0
      %708 = vmatpush.msra.mxu0 0.0
      %709 = vmatpush.msra.mxu0 0.0
      %710 = vmatpush.msra.mxu0 0.0
      %711 = vmatpush.msra.mxu0 0.0
      %712 = vmatpush.msra.mxu0 0.0
      %713 = vmatpush.msra.mxu0 0.0
      %714 = vmatpush.msra.mxu0 0.0
      %715 = vmatpush.msra.mxu0 0.0
      %716 = vmatpush.msra.mxu0 %v626
      %717 = vmatpush.msra.mxu0 %v623
      %718 = vmatpush.msra.mxu0 %v620
      %719 = vmatpush.msra.mxu0 %v617
      %720 = vmatmul.f32.gmra.mxu0 %v658
      %v721 = vpop.f32.mrf.mxu0
      %v722 = vadd.f32 0.0, %v721
      %723 = vmatmul.f32.gmra.mxu0 %v661
      %v724 = vpop.f32.mrf.mxu0
      %v725 = vadd.f32 0.0, %v724
      %726 = vmatmul.f32.gmra.mxu0 %v664
      %v727 = vpop.f32.mrf.mxu0
      %v728 = vadd.f32 0.0, %v727
      %729 = vmatmul.f32.gmra.mxu0 %v667
      %v730 = vpop.f32.mrf.mxu0
      %v731 = vadd.f32 0.0, %v730
      %732 = vmatmul.f32.gmra.mxu0 %v670
      %v733 = vpop.f32.mrf.mxu0
      %v734 = vadd.f32 0.0, %v733
      %735 = vdwg.mxu0
      %736 = vmatpush.msra.mxu0 0.0
      %737 = vmatpush.msra.mxu0 0.0
      %738 = vmatpush.msra.mxu0 0.0
      %739 = vmatpush.msra.mxu0 0.0
      %740 = vmatpush.msra.mxu0 0.0
      %741 = vmatpush.msra.mxu0 0.0
      %742 = vmatpush.msra.mxu0 0.0
      %743 = vmatpush.msra.mxu0 0.0
      %744 = vmatpush.msra.mxu0 0.0
      %745 = vmatpush.msra.mxu0 0.0
      %746 = vmatpush.msra.mxu0 0.0
      %747 = vmatpush.msra.mxu0 0.0
      %748 = vmatpush.msra.mxu0 %v638
      %749 = vmatpush.msra.mxu0 %v635
      %750 = vmatpush.msra.mxu0 %v632
      %751 = vmatpush.msra.mxu0 %v629
      %752 = vmatmul.f32.gmra.mxu0 %v658
      %v753 = vpop.f32.mrf.mxu0
      %v754 = vadd.f32 0.0, %v753
      %755 = vmatmul.f32.gmra.mxu0 %v661
      %v756 = vpop.f32.mrf.mxu0
      %v757 = vadd.f32 0.0, %v756
      %758 = vmatmul.f32.gmra.mxu0 %v664
      %v759 = vpop.f32.mrf.mxu0
      %v760 = vadd.f32 0.0, %v759
      %761 = vmatmul.f32.gmra.mxu0 %v667
      %v762 = vpop.f32.mrf.mxu0
      %v763 = vadd.f32 0.0, %v762
      %764 = vmatmul.f32.gmra.mxu0 %v670
      %v765 = vpop.f32.mrf.mxu0
      %v766 = vadd.f32 0.0, %v765
      %767 = vdwg.mxu0
      %768 = vmatpush.msra.mxu0 0.0
      %769 = vmatpush.msra.mxu0 0.0
      %770 = vmatpush.msra.mxu0 0.0
      %771 = vmatpush.msra.mxu0 0.0
      %772 = vmatpush.msra.mxu0 0.0
      %773 = vmatpush.msra.mxu0 0.0
      %774 = vmatpush.msra.mxu0 0.0
      %775 = vmatpush.msra.mxu0 0.0
      %776 = vmatpush.msra.mxu0 0.0
      %777 = vmatpush.msra.mxu0 0.0
      %778 = vmatpush.msra.mxu0 0.0
      %779 = vmatpush.msra.mxu0 0.0
      %780 = vmatpush.msra.mxu0 %v650
      %781 = vmatpush.msra.mxu0 %v647
      %782 = vmatpush.msra.mxu0 %v644
      %783 = vmatpush.msra.mxu0 %v641
      %784 = vmatmul.f32.gmra.mxu0 %v658
      %v785 = vpop.f32.mrf.mxu0
      %v786 = vadd.f32 0.0, %v785
      %787 = vmatmul.f32.gmra.mxu0 %v661
      %v788 = vpop.f32.mrf.mxu0
      %v789 = vadd.f32 0.0, %v788
      %790 = vmatmul.f32.gmra.mxu0 %v664
      %v791 = vpop.f32.mrf.mxu0
      %v792 = vadd.f32 0.0, %v791
      %793 = vmatmul.f32.gmra.mxu0 %v667
      %v794 = vpop.f32.mrf.mxu0
      %v795 = vadd.f32 0.0, %v794
      %796 = vmatmul.f32.gmra.mxu0 %v670
      %v797 = vpop.f32.mrf.mxu0
      %v798 = vadd.f32 0.0, %v797
      %799 = vdwg.mxu0
      %s800 = scalar_lea.vmem %s271, 160
      %801 = vst.msk [vmem:[%s800] sm:$0xff] %vm496, %v690
      %802 = vst.msk [vmem:[%s800 + $0x8] sm:$0xff] %vm496, %v693
      %803 = vst.msk [vmem:[%s800 + $0x10] sm:$0xff] %vm496, %v696
      %804 = vst.msk [vmem:[%s800 + $0x18] sm:$0xff] %vm496, %v699
      %805 = vst.msk [vmem:[%s800 + $0x20] sm:$0x7] %vm501, %v702
      %806 = vst.msk [vmem:[%s800 + $0x28] sm:$0xff] %vm496, %v722
      %807 = vst.msk [vmem:[%s800 + $0x30] sm:$0xff] %vm496, %v725
      %808 = vst.msk [vmem:[%s800 + $0x38] sm:$0xff] %vm496, %v728
      %809 = vst.msk [vmem:[%s800 + $0x40] sm:$0xff] %vm496, %v731
      %810 = vst.msk [vmem:[%s800 + $0x48] sm:$0x7] %vm501, %v734
      %811 = vst.msk [vmem:[%s800 + $0x50] sm:$0xff] %vm496, %v754
      %812 = vst.msk [vmem:[%s800 + $0x58] sm:$0xff] %vm496, %v757
      %813 = vst.msk [vmem:[%s800 + $0x60] sm:$0xff] %vm496, %v760
      %814 = vst.msk [vmem:[%s800 + $0x68] sm:$0xff] %vm496, %v763
      %815 = vst.msk [vmem:[%s800 + $0x70] sm:$0x7] %vm501, %v766
      %816 = vst.msk [vmem:[%s800 + $0x78] sm:$0xff] %vm496, %v786
      %817 = vst.msk [vmem:[%s800 + $0x80] sm:$0xff] %vm496, %v789
      %818 = vst.msk [vmem:[%s800 + $0x88] sm:$0xff] %vm496, %v792
      %819 = vst.msk [vmem:[%s800 + $0x90] sm:$0xff] %vm496, %v795
      %820 = vst.msk [vmem:[%s800 + $0x98] sm:$0x7] %vm501, %v798
      %p821 = scmp.lt.s32.totalorder %s17, 1
      %s822 = scalar_select %p821, %s17, 1
      %s823 = smul.addr %s822, 40
      %s824 = smul.addr %s823, 8
      %s825 = scalar_lea.vmem %s6, %s824
      // Predicated region
      $region45: #{unet_expansion_stack.4} parent=43 // pred_check
        %p826 = pneg %p171
      $region46: #{unet_expansion_stack.4} parent=43 // pred_check_branch
        %828 = sbr.rel (%p826) target = $region48
      $region47: #{unet_expansion_stack.4} parent=43 // pred_region
        _
      $region48: #{unet_expansion_stack.4} parent=43 // pred_fallthru
        _
    $region44: #{unet_expansion_stack.4} parent=5 // pred_fallthru
      _
    %p829 = scmp.le.s32.totalorder 2, %s12
    // Predicated region
    $region49: #{unet_expansion_stack.4} parent=5 // pred_check
      %p830 = pneg %p829
    $region50: #{unet_expansion_stack.4} parent=5 // pred_check_branch
      %832 = sbr.rel (%p830) target = $region52
    $region51: #{unet_expansion_stack.4} parent=5 // pred_region
      %s833 = ssub.s32 %s12, 2
      // Predicated region
      $region53: #{unet_expansion_stack.4} parent=51 // pred_check
        %p834 = pneg %p177
      $region54: #{unet_expansion_stack.4} parent=51 // pred_check_branch
        %836 = sbr.rel (%p834) target = $region56
      $region55: #{unet_expansion_stack.4} parent=51 // pred_region
        %p837 = scmp.lt.s32.totalorder %s18, 1
        %s838 = scalar_select %p837, %s18, 1
        %s839 = smul.addr %s838, 40
        %s840 = smul.addr %s839, 8
        %s841 = scalar_lea.vmem %s6, %s840
      $region56: #{unet_expansion_stack.4} parent=51 // pred_fallthru
        _
    $region52: #{unet_expansion_stack.4} parent=5 // pred_fallthru
      _
  $region6: #{unet_expansion_stack.4} parent=0 // loop_footer
    %s16 = sadd.s32 1, %s12
  $region7: #{unet_expansion_stack.4} parent=0 // loop_footer_branch
    %11 = sbr.rel target = $region3
  $region8: #{unet_expansion_stack.4} parent=0 // loop_exit
    _

// kernel: unet_expansion_stack.5
$region0: #{unet_expansion_stack.5}
  #allocation0 [shape = 'u32[]', space=smem, size = 0x4, offset = 0x4, fixed_abs, tag = 'smem constant byte address 0x4 - core index']
  #allocation1 [shape = 'u32[72,128]{1,0:T(1,128)}', space=vmem, size = 0x9000, scoped, tag = 'internal scratch']
  #allocation2 [shape = 'f32[72,1088]{1,0:T(8,128)}', space=vmem, size = 0x51000, scoped, tag = 'scratch operand']
  %s0 = inlined_call_operand.vmem [shape: f32[2,8,1190], index: 0, kind: input, shape index: {}]
  %s1 = inlined_call_operand.vmem [shape: f32[4,72], index: 1, kind: input, shape index: {}]
  %s2 = inlined_call_operand.vmem [shape: f32[4,1], index: 2, kind: input, shape index: {}]
  %s3 = inlined_call_operand.vmem [shape: f32[1,1088], index: 3, kind: input, shape index: {}]
  %s4 = inlined_call_operand.vmem [shape: f32[2,4,1190], index: 4, kind: output, shape index: {0}]
  %s5 = inlined_call_operand.vmem [shape: f32[2,4,2], index: 5, kind: output, shape index: {1}]
  %6 = xla_tuple %s4, %s5
  %s7 = sld [smem:[#allocation0]]
  $region57: #{unet_expansion_stack.5} parent=0
    _
  %s9 = ssub.s32 1, %s7
  %s10 = scalar_select 0, %s9, %s7
  loop: start=0, step=1, limit=4
  $region2: #{unet_expansion_stack.5} parent=0 // loop_pre_header
    _
  $region3: #{unet_expansion_stack.5} parent=0 // loop_header
    %s12 = sphi 0, %s16
    %p13 = scmp.ge.s32.totalorder %s12, 4
    %s22 = sphi 0, %s24
    %s25 = sphi 0, %s22
    %s26 = sphi 0, %s25
    %s42 = sphi 0, %s26
    %s46 = sphi 0, %s46
    %s48 = sphi 0, %s46
    %s49 = sphi 0, %s48
    %s63 = sphi 0, %s49
    %s67 = sphi 0, %s67
    %s69 = sphi 0, %s67
    %s70 = sphi 0, %s69
    %s84 = sphi 0, %s70
    %s88 = sphi 0, %s88
    %s90 = sphi 0, %s88
    %s91 = sphi 0, %s90
    %s105 = sphi 0, %s91
    %s111 = sphi 0, %s113
    %s114 = sphi 0, %s111
    %s115 = sphi 0, %s114
    %s131 = sphi 0, %s115
    %s137 = sphi 0, %s139
    %s140 = sphi 0, %s137
    %s141 = sphi 0, %s140
    %s157 = sphi 0, %s141
  $region4: #{unet_expansion_stack.5} parent=0 // loop_header_branch
    %15 = sbr.rel (%p13) target = $region8
  $region5: #{unet_expansion_stack.5} parent=0 // loop_body
    %s17 = ssub.s32 %s12, 1
    %s18 = ssub.s32 %s12, 2
    %s19 = sadd.s32 %s12, 1
    %s20 = ssub.s32 %s12, %s19
    %p21 = scmp.eq.s32.totalorder %s20, 0
    %s23 = sadd.s32 %s22, 1
    %s24 = scalar_select %p21, %s22, %s23
    %p27 = pneg %p21
    %p28 = scmp.eq.s32.totalorder %s12, 1
    %p29 = por %p27, %p28
    %p30 = scmp.ne.s32.totalorder %s22, %s25
    %p31 = scmp.eq.s32.totalorder %s12, 0
    %p32 = por %p30, %p31
    %p33 = scmp.ne.s32.totalorder %s22, %s25
    %p34 = scmp.eq.s32.totalorder %s17, 1
    %p35 = por %p33, %p34
    %p36 = scmp.ne.s32.totalorder %s25, %s26
    %p37 = scmp.eq.s32.totalorder %s17, 0
    %p38 = por %p36, %p37
    %p39 = scmp.ne.s32.totalorder %s25, %s26
    %p40 = scmp.eq.s32.totalorder %s18, 1
    %p41 = por %p39, %p40
    %p43 = scmp.ne.s32.totalorder %s26, %s42
    %p44 = scmp.eq.s32.totalorder %s18, 0
    %p45 = por %p43, %p44
    %s47 = sadd.s32 %s46, 1
    %p50 = scmp.eq.s32.totalorder %s12, 1
    %p51 = scmp.ne.s32.totalorder %s46, %s48
    %p52 = scmp.eq.s32.totalorder %s12, 0
    %p53 = por %p51, %p52
    %p54 = scmp.ne.s32.totalorder %s46, %s48
    %p55 = scmp.eq.s32.totalorder %s17, 1
    %p56 = por %p54, %p55
    %p57 = scmp.ne.s32.totalorder %s48, %s49
    %p58 = scmp.eq.s32.totalorder %s17, 0
    %p59 = por %p57, %p58
    %p60 = scmp.ne.s32.totalorder %s48, %s49
    %p61 = scmp.eq.s32.totalorder %s18, 1
    %p62 = por %p60, %p61
    %p64 = scmp.ne.s32.totalorder %s49, %s63
    %p65 = scmp.eq.s32.totalorder %s18, 0
    %p66 = por %p64, %p65
    %s68 = sadd.s32 %s67, 1
    %p71 = scmp.eq.s32.totalorder %s12, 1
    %p72 = scmp.ne.s32.totalorder %s67, %s69
    %p73 = scmp.eq.s32.totalorder %s12, 0
    %p74 = por %p72, %p73
    %p75 = scmp.ne.s32.totalorder %s67, %s69
    %p76 = scmp.eq.s32.totalorder %s17, 1
    %p77 = por %p75, %p76
    %p78 = scmp.ne.s32.totalorder %s69, %s70
    %p79 = scmp.eq.s32.totalorder %s17, 0
    %p80 = por %p78, %p79
    %p81 = scmp.ne.s32.totalorder %s69, %s70
    %p82 = scmp.eq.s32.totalorder %s18, 1
    %p83 = por %p81, %p82
    %p85 = scmp.ne.s32.totalorder %s70, %s84
    %p86 = scmp.eq.s32.totalorder %s18, 0
    %p87 = por %p85, %p86
    %s89 = sadd.s32 %s88, 1
    %p92 = scmp.eq.s32.totalorder %s12, 1
    %p93 = scmp.ne.s32.totalorder %s88, %s90
    %p94 = scmp.eq.s32.totalorder %s12, 0
    %p95 = por %p93, %p94
    %p96 = scmp.ne.s32.totalorder %s88, %s90
    %p97 = scmp.eq.s32.totalorder %s17, 1
    %p98 = por %p96, %p97
    %p99 = scmp.ne.s32.totalorder %s90, %s91
    %p100 = scmp.eq.s32.totalorder %s17, 0
    %p101 = por %p99, %p100
    %p102 = scmp.ne.s32.totalorder %s90, %s91
    %p103 = scmp.eq.s32.totalorder %s18, 1
    %p104 = por %p102, %p103
    %p106 = scmp.ne.s32.totalorder %s91, %s105
    %p107 = scmp.eq.s32.totalorder %s18, 0
    %p108 = por %p106, %p107
    %s109 = ssub.s32 %s12, %s19
    %p110 = scmp.eq.s32.totalorder %s109, 0
    %s112 = sadd.s32 %s111, 1
    %s113 = scalar_select %p110, %s111, %s112
    %p116 = pneg %p110
    %p117 = scmp.eq.s32.totalorder %s12, 1
    %p118 = por %p116, %p117
    %p119 = scmp.ne.s32.totalorder %s111, %s114
    %p120 = scmp.eq.s32.totalorder %s12, 0
    %p121 = por %p119, %p120
    %p122 = scmp.ne.s32.totalorder %s111, %s114
    %p123 = scmp.eq.s32.totalorder %s17, 1
    %p124 = por %p122, %p123
    %p125 = scmp.ne.s32.totalorder %s114, %s115
    %p126 = scmp.eq.s32.totalorder %s17, 0
    %p127 = por %p125, %p126
    %p128 = scmp.ne.s32.totalorder %s114, %s115
    %p129 = scmp.eq.s32.totalorder %s18, 1
    %p130 = por %p128, %p129
    %p132 = scmp.ne.s32.totalorder %s115, %s131
    %p133 = scmp.eq.s32.totalorder %s18, 0
    %p134 = por %p132, %p133
    %s135 = ssub.s32 %s12, %s19
    %p136 = scmp.eq.s32.totalorder %s135, 0
    %s138 = sadd.s32 %s137, 1
    %s139 = scalar_select %p136, %s137, %s138
    %p142 = pneg %p136
    %p143 = scmp.eq.s32.totalorder %s12, 1
    %p144 = por %p142, %p143
    %p145 = scmp.ne.s32.totalorder %s137, %s140
    %p146 = scmp.eq.s32.totalorder %s12, 0
    %p147 = por %p145, %p146
    %p148 = scmp.ne.s32.totalorder %s137, %s140
    %p149 = scmp.eq.s32.totalorder %s17, 1
    %p150 = por %p148, %p149
    %p151 = scmp.ne.s32.totalorder %s140, %s141
    %p152 = scmp.eq.s32.totalorder %s17, 0
    %p153 = por %p151, %p152
    %p154 = scmp.ne.s32.totalorder %s140, %s141
    %p155 = scmp.eq.s32.totalorder %s18, 1
    %p156 = por %p154, %p155
    %p158 = scmp.ne.s32.totalorder %s141, %s157
    %p159 = scmp.eq.s32.totalorder %s18, 0
    %p160 = por %p158, %p159
    %p161 = scmp.le.s32.totalorder 1, %s12
    %p162 = scmp.lt.s32.totalorder %s12, 3
    %p163 = pnand %p161, %p162
    %p164 = pneg %p163
    // Predicated region
    $region9: #{unet_expansion_stack.5} parent=5 // pred_check
      _
    $region10: #{unet_expansion_stack.5} parent=5 // pred_check_branch
      %166 = sbr.rel (%p163) target = $region12
    $region11: #{unet_expansion_stack.5} parent=5 // pred_region
      %s167 = ssub.s32 %s12, 1
      // Predicated region
      $region13: #{unet_expansion_stack.5} parent=11 // pred_check
        %p168 = pneg %p59
      $region14: #{unet_expansion_stack.5} parent=11 // pred_check_branch
        %170 = sbr.rel (%p168) target = $region16
      $region15: #{unet_expansion_stack.5} parent=11 // pred_region
        _
      $region16: #{unet_expansion_stack.5} parent=11 // pred_fallthru
        _
      // Predicated region
      $region17: #{unet_expansion_stack.5} parent=11 // pred_check
        %p171 = pneg %p80
      $region18: #{unet_expansion_stack.5} parent=11 // pred_check_branch
        %173 = sbr.rel (%p171) target = $region20
      $region19: #{unet_expansion_stack.5} parent=11 // pred_region
        _
      $region20: #{unet_expansion_stack.5} parent=11 // pred_fallthru
        _
      // Predicated region
      $region21: #{unet_expansion_stack.5} parent=11 // pred_check
        %p174 = pneg %p101
      $region22: #{unet_expansion_stack.5} parent=11 // pred_check_branch
        %176 = sbr.rel (%p174) target = $region24
      $region23: #{unet_expansion_stack.5} parent=11 // pred_region
        _
      $region24: #{unet_expansion_stack.5} parent=11 // pred_fallthru
        _
    $region12: #{unet_expansion_stack.5} parent=5 // pred_fallthru
      _
    %p177 = scmp.lt.s32.totalorder %s12, 2
    // Predicated region
    $region25: #{unet_expansion_stack.5} parent=5 // pred_check
      %p178 = pneg %p177
    $region26: #{unet_expansion_stack.5} parent=5 // pred_check_branch
      %180 = sbr.rel (%p178) target = $region28
    $region27: #{unet_expansion_stack.5} parent=5 // pred_region
      // Predicated region
      $region29: #{unet_expansion_stack.5} parent=27 // pred_check
        %p181 = pneg %p32
      $region30: #{unet_expansion_stack.5} parent=27 // pred_check_branch
        %183 = sbr.rel (%p181) target = $region32
      $region31: #{unet_expansion_stack.5} parent=27 // pred_region
        %p184 = scmp.lt.s32.totalorder %s12, 1
        %s185 = scalar_select %p184, %s12, 1
        %s186 = smul.addr %s185, 10
        %s187 = smul.addr %s186, 8
        %s188 = scalar_lea.vmem %s0, %s187
      $region32: #{unet_expansion_stack.5} parent=27 // pred_fallthru
        _
    $region28: #{unet_expansion_stack.5} parent=5 // pred_fallthru
      _
    %p189 = scmp.le.s32.totalorder 1, %s12
    %p190 = scmp.lt.s32.totalorder %s12, 3
    %p191 = pnand %p189, %p190
    %p192 = pneg %p191
    // Predicated region
    $region33: #{unet_expansion_stack.5} parent=5 // pred_check
      _
    $region34: #{unet_expansion_stack.5} parent=5 // pred_check_branch
      %194 = sbr.rel (%p191) target = $region36
    $region35: #{unet_expansion_stack.5} parent=5 // pred_region
      %s195 = ssub.s32 %s12, 1
      %p196 = scmp.lt.s32.totalorder %s17, 1
      %s197 = scalar_select %p196, %s17, 1
      %s198 = smul.addr %s197, 10
      %s199 = smul.addr %s198, 8
      %s200 = scalar_lea.vmem %s0, %s199
      %p201 = pneg %p38
      %p202 = pneg %p35
      %p203 = pneg %p59
      %p204 = pneg %p56
      %p205 = pneg %p80
      %p206 = pneg %p77
      %p207 = pneg %p101
      %p208 = pneg %p98
      %p209 = pneg %p127
      %p210 = pneg %p124
      %p211 = scmp.lt.s32.totalorder %s17, 1
      %s212 = scalar_select %p211, %s17, 1
      %s213 = smul.addr %s212, 10
      %s214 = smul.addr %s213, 4
      %s215 = scalar_lea.vmem %s4, %s214
      %p216 = pneg %p153
      %p217 = pneg %p150
      %p218 = scmp.lt.s32.totalorder %s17, 1
      %s219 = scalar_select %p218, %s17, 1
      %s220 = smul.addr %s219, 4
      %s221 = scalar_lea.vmem %s5, %s220
      %p222 = scmp.lt.s32.totalorder %s17, 1
      %s223 = scalar_select %p222, %s17, 1
      %s224 = smul.addr %s223, 10
      %s225 = smul.addr %s224, 8
      %s226 = scalar_lea.vmem %s0, %s225
      %p227 = scmp.lt.s32.totalorder %s17, 1
      %s228 = scalar_select %p227, %s17, 1
      %s229 = smul.addr %s228, 10
      %s230 = smul.addr %s229, 4
      %s231 = scalar_lea.vmem %s4, %s230
      %p232 = scmp.lt.s32.totalorder %s17, 1
      %s233 = scalar_select %p232, %s17, 1
      %s234 = smul.addr %s233, 4
      %s235 = scalar_lea.vmem %s5, %s234
      %v236 = vld [vmem:[%s226] sm:$0xff]
      %v237 = vld [vmem:[%s226 + $0x8] sm:$0xff]
      %v238 = vld [vmem:[%s226 + $0x10] sm:$0xff]
      %v239 = vld [vmem:[%s226 + $0x18] sm:$0xff]
      %v240 = vld [vmem:[%s226 + $0x20] sm:$0xff]
      %v241 = vld [vmem:[%s226 + $0x28] sm:$0xff]
      %v242 = vld [vmem:[%s226 + $0x30] sm:$0xff]
      %v243 = vld [vmem:[%s226 + $0x38] sm:$0xff]
      %v244 = vld [vmem:[%s226 + $0x40] sm:$0xff]
      %v245 = vld [vmem:[%s226 + $0x48] sm:$0xff]
      %246 = vst [vmem:[#allocation2] sm:$0xff] %v236
      %247 = vst [vmem:[#allocation2 + $0x8] sm:$0xff] %v237
      %248 = vst [vmem:[#allocation2 + $0x10] sm:$0xff] %v238
      %249 = vst [vmem:[#allocation2 + $0x18] sm:$0xff] %v239
      %250 = vst [vmem:[#allocation2 + $0x20] sm:$0xff] %v240
      %251 = vst [vmem:[#allocation2 + $0x28] sm:$0xff] %v241
      %252 = vst [vmem:[#allocation2 + $0x30] sm:$0xff] %v242
      %253 = vst [vmem:[#allocation2 + $0x38] sm:$0xff] %v243
      %vm254 = vcmask 523264
      %255 = vst.msk [vmem:[#allocation2 + $0x40] sm:$0xff] %vm254, %v244
      %265 = vrot.lane.b32.xlu0 %v236, 127
      %v266 = vpop.permute.xlu0 %265
      %267 = vrot.lane.b32.xlu0 %v237, 127
      %v268 = vpop.permute.xlu0 %267
      %269 = vrot.lane.b32.xlu0 %v238, 127
      %v270 = vpop.permute.xlu0 %269
      %271 = vrot.lane.b32.xlu0 %v239, 127
      %v272 = vpop.permute.xlu0 %271
      %273 = vrot.lane.b32.xlu0 %v240, 127
      %v274 = vpop.permute.xlu0 %273
      %275 = vrot.lane.b32.xlu0 %v241, 127
      %v276 = vpop.permute.xlu0 %275
      %277 = vrot.lane.b32.xlu0 %v242, 127
      %v278 = vpop.permute.xlu0 %277
      %279 = vrot.lane.b32.xlu0 %v243, 127
      %v280 = vpop.permute.xlu0 %279
      %281 = vrot.lane.b32.xlu0 %v244, 127
      %v282 = vpop.permute.xlu0 %281
      %vm283 = vcmask 1039360
      %v284 = vsel %vm283, %v266, %v268
      %v285 = vsel %vm283, %v268, %v270
      %v286 = vsel %vm283, %v270, %v272
      %v287 = vsel %vm283, %v272, %v274
      %v288 = vsel %vm283, %v274, %v276
      %v289 = vsel %vm283, %v276, %v278
      %v290 = vsel %vm283, %v278, %v280
      %v291 = vsel %vm283, %v280, %v282
      %301 = vst [vmem:[#allocation2 + $0x48] sm:$0xff] %v284
      %302 = vst [vmem:[#allocation2 + $0x50] sm:$0xff] %v285
      %303 = vst [vmem:[#allocation2 + $0x58] sm:$0xff] %v286
      %304 = vst [vmem:[#allocation2 + $0x60] sm:$0xff] %v287
      %305 = vst [vmem:[#allocation2 + $0x68] sm:$0xff] %v288
      %306 = vst [vmem:[#allocation2 + $0x70] sm:$0xff] %v289
      %307 = vst [vmem:[#allocation2 + $0x78] sm:$0xff] %v290
      %308 = vst [vmem:[#allocation2 + $0x80] sm:$0xff] %v291
      %309 = vst.msk [vmem:[#allocation2 + $0x88] sm:$0xff] %vm254, %v282
      %310 = vrot.lane.b32.xlu0 %v236, 126
      %v311 = vpop.permute.xlu0 %310
      %312 = vrot.lane.b32.xlu0 %v237, 126
      %v313 = vpop.permute.xlu0 %312
      %314 = vrot.lane.b32.xlu0 %v238, 126
      %v315 = vpop.permute.xlu0 %314
      %316 = vrot.lane.b32.xlu0 %v239, 126
      %v317 = vpop.permute.xlu0 %316
      %318 = vrot.lane.b32.xlu0 %v240, 126
      %v319 = vpop.permute.xlu0 %318
      %320 = vrot.lane.b32.xlu0 %v241, 126
      %v321 = vpop.permute.xlu0 %320
      %322 = vrot.lane.b32.xlu0 %v242, 126
      %v323 = vpop.permute.xlu0 %322
      %324 = vrot.lane.b32.xlu0 %v243, 126
      %v325 = vpop.permute.xlu0 %324
      %326 = vrot.lane.b32.xlu0 %v244, 126
      %v327 = vpop.permute.xlu0 %326
      %vm328 = vcmask 1031168
      %v329 = vsel %vm328, %v311, %v313
      %v330 = vsel %vm328, %v313, %v315
      %v331 = vsel %vm328, %v315, %v317
      %v332 = vsel %vm328, %v317, %v319
      %v333 = vsel %vm328, %v319, %v321
      %v334 = vsel %vm328, %v321, %v323
      %v335 = vsel %vm328, %v323, %v325
      %v336 = vsel %vm328, %v325, %v327
      %346 = vst [vmem:[#allocation2 + $0x90] sm:$0xff] %v329
      %347 = vst [vmem:[#allocation2 + $0x98] sm:$0xff] %v330
      %348 = vst [vmem:[#allocation2 + $0xa0] sm:$0xff] %v331
      %349 = vst [vmem:[#allocation2 + $0xa8] sm:$0xff] %v332
      %350 = vst [vmem:[#allocation2 + $0xb0] sm:$0xff] %v333
      %351 = vst [vmem:[#allocation2 + $0xb8] sm:$0xff] %v334
      %352 = vst [vmem:[#allocation2 + $0xc0] sm:$0xff] %v335
      %353 = vst [vmem:[#allocation2 + $0xc8] sm:$0xff] %v336
      %354 = vst.msk [vmem:[#allocation2 + $0xd0] sm:$0xff] %vm254, %v327
      %355 = vrot.lane.b32.xlu0 %v236, 94
      %v356 = vpop.permute.xlu0 %355
      %357 = vrot.lane.b32.xlu0 %v237, 94
      %v358 = vpop.permute.xlu0 %357
      %359 = vrot.lane.b32.xlu0 %v238, 94
      %v360 = vpop.permute.xlu0 %359
      %361 = vrot.lane.b32.xlu0 %v239, 94
      %v362 = vpop.permute.xlu0 %361
      %363 = vrot.lane.b32.xlu0 %v240, 94
      %v364 = vpop.permute.xlu0 %363
      %365 = vrot.lane.b32.xlu0 %v241, 94
      %v366 = vpop.permute.xlu0 %365
      %367 = vrot.lane.b32.xlu0 %v242, 94
      %v368 = vpop.permute.xlu0 %367
      %369 = vrot.lane.b32.xlu0 %v243, 94
      %v370 = vpop.permute.xlu0 %369
      %371 = vrot.lane.b32.xlu0 %v244, 94
      %v372 = vpop.permute.xlu0 %371
      %vm373 = vcmask 769024
      %v374 = vsel %vm373, %v356, %v358
      %v375 = vsel %vm373, %v358, %v360
      %v376 = vsel %vm373, %v360, %v362
      %v377 = vsel %vm373, %v362, %v364
      %v378 = vsel %vm373, %v364, %v366
      %v379 = vsel %vm373, %v366, %v368
      %v380 = vsel %vm373, %v368, %v370
      %v381 = vsel %vm373, %v370, %v372
      %391 = vst [vmem:[#allocation2 + $0xd8] sm:$0xff] %v374
      %392 = vst [vmem:[#allocation2 + $0xe0] sm:$0xff] %v375
      %393 = vst [vmem:[#allocation2 + $0xe8] sm:$0xff] %v376
      %394 = vst [vmem:[#allocation2 + $0xf0] sm:$0xff] %v377
      %395 = vst [vmem:[#allocation2 + $0xf8] sm:$0xff] %v378
      %396 = vst [vmem:[#allocation2 + $0x100] sm:$0xff] %v379
      %397 = vst [vmem:[#allocation2 + $0x108] sm:$0xff] %v380
      %398 = vst [vmem:[#allocation2 + $0x110] sm:$0xff] %v381
      %399 = vst.msk [vmem:[#allocation2 + $0x118] sm:$0xff] %vm254, %v372
      %400 = vrot.lane.b32.xlu0 %v236, 93
      %v401 = vpop.permute.xlu0 %400
      %402 = vrot.lane.b32.xlu0 %v237, 93
      %v403 = vpop.permute.xlu0 %402
      %404 = vrot.lane.b32.xlu0 %v238, 93
      %v405 = vpop.permute.xlu0 %404
      %406 = vrot.lane.b32.xlu0 %v239, 93
      %v407 = vpop.permute.xlu0 %406
      %408 = vrot.lane.b32.xlu0 %v240, 93
      %v409 = vpop.permute.xlu0 %408
      %410 = vrot.lane.b32.xlu0 %v241, 93
      %v411 = vpop.permute.xlu0 %410
      %412 = vrot.lane.b32.xlu0 %v242, 93
      %v413 = vpop.permute.xlu0 %412
      %414 = vrot.lane.b32.xlu0 %v243, 93
      %v415 = vpop.permute.xlu0 %414
      %416 = vrot.lane.b32.xlu0 %v244, 93
      %v417 = vpop.permute.xlu0 %416
      %vm418 = vcmask 760832
      %v419 = vsel %vm418, %v401, %v403
      %v420 = vsel %vm418, %v403, %v405
      %v421 = vsel %vm418, %v405, %v407
      %v422 = vsel %vm418, %v407, %v409
      %v423 = vsel %vm418, %v409, %v411
      %v424 = vsel %vm418, %v411, %v413
      %v425 = vsel %vm418, %v413, %v415
      %v426 = vsel %vm418, %v415, %v417
      %436 = vst [vmem:[#allocation2 + $0x120] sm:$0xff] %v419
      %437 = vst [vmem:[#allocation2 + $0x128] sm:$0xff] %v420
      %438 = vst [vmem:[#allocation2 + $0x130] sm:$0xff] %v421
      %439 = vst [vmem:[#allocation2 + $0x138] sm:$0xff] %v422
      %440 = vst [vmem:[#allocation2 + $0x140] sm:$0xff] %v423
      %441 = vst [vmem:[#allocation2 + $0x148] sm:$0xff] %v424
      %442 = vst [vmem:[#allocation2 + $0x150] sm:$0xff] %v425
      %443 = vst [vmem:[#allocation2 + $0x158] sm:$0xff] %v426
      %444 = vst.msk [vmem:[#allocation2 + $0x160] sm:$0xff] %vm254, %v417
      %445 = vrot.lane.b32.xlu0 %v236, 92
      %v446 = vpop.permute.xlu0 %445
      %447 = vrot.lane.b32.xlu0 %v237, 92
      %v448 = vpop.permute.xlu0 %447
      %449 = vrot.lane.b32.xlu0 %v238, 92
      %v450 = vpop.permute.xlu0 %449
      %451 = vrot.lane.b32.xlu0 %v239, 92
      %v452 = vpop.permute.xlu0 %451
      %453 = vrot.lane.b32.xlu0 %v240, 92
      %v454 = vpop.permute.xlu0 %453
      %455 = vrot.lane.b32.xlu0 %v241, 92
      %v456 = vpop.permute.xlu0 %455
      %457 = vrot.lane.b32.xlu0 %v242, 92
      %v458 = vpop.permute.xlu0 %457
      %459 = vrot.lane.b32.xlu0 %v243, 92
      %v460 = vpop.permute.xlu0 %459
      %461 = vrot.lane.b32.xlu0 %v244, 92
      %v462 = vpop.permute.xlu0 %461
      %vm463 = vcmask 752640
      %v464 = vsel %vm463, %v446, %v448
      %v465 = vsel %vm463, %v448, %v450
      %v466 = vsel %vm463, %v450, %v452
      %v467 = vsel %vm463, %v452, %v454
      %v468 = vsel %vm463, %v454, %v456
      %v469 = vsel %vm463, %v456, %v458
      %v470 = vsel %vm463, %v458, %v460
      %v471 = vsel %vm463, %v460, %v462
      %481 = vst [vmem:[#allocation2 + $0x168] sm:$0xff] %v464
      %482 = vst [vmem:[#allocation2 + $0x170] sm:$0xff] %v465
      %483 = vst [vmem:[#allocation2 + $0x178] sm:$0xff] %v466
      %484 = vst [vmem:[#allocation2 + $0x180] sm:$0xff] %v467
      %485 = vst [vmem:[#allocation2 + $0x188] sm:$0xff] %v468
      %486 = vst [vmem:[#allocation2 + $0x190] sm:$0xff] %v469
      %487 = vst [vmem:[#allocation2 + $0x198] sm:$0xff] %v470
      %488 = vst [vmem:[#allocation2 + $0x1a0] sm:$0xff] %v471
      %489 = vst.msk [vmem:[#allocation2 + $0x1a8] sm:$0xff] %vm254, %v462
      %491 = vrot.lane.b32.xlu0 %v236, 60
      %v492 = vpop.permute.xlu0 %491
      %493 = vrot.lane.b32.xlu0 %v237, 60
      %v494 = vpop.permute.xlu0 %493
      %495 = vrot.lane.b32.xlu0 %v238, 60
      %v496 = vpop.permute.xlu0 %495
      %497 = vrot.lane.b32.xlu0 %v239, 60
      %v498 = vpop.permute.xlu0 %497
      %499 = vrot.lane.b32.xlu0 %v240, 60
      %v500 = vpop.permute.xlu0 %499
      %501 = vrot.lane.b32.xlu0 %v241, 60
      %v502 = vpop.permute.xlu0 %501
      %503 = vrot.lane.b32.xlu0 %v242, 60
      %v504 = vpop.permute.xlu0 %503
      %505 = vrot.lane.b32.xlu0 %v243, 60
      %v506 = vpop.permute.xlu0 %505
      %507 = vrot.lane.b32.xlu0 %v244, 60
      %v508 = vpop.permute.xlu0 %507
      %509 = vrot.lane.b32.xlu0 %v245, 60
      %v510 = vpop.permute.xlu0 %509
      %vm511 = vcmask 490496
      %v512 = vsel %vm511, %v492, %v494
      %v513 = vsel %vm511, %v494, %v496
      %v514 = vsel %vm511, %v496, %v498
      %v515 = vsel %vm511, %v498, %v500
      %v516 = vsel %vm511, %v500, %v502
      %v517 = vsel %vm511, %v502, %v504
      %v518 = vsel %vm511, %v504, %v506
      %v519 = vsel %vm511, %v506, %v508
      %v520 = vsel %vm511, %v508, %v510
      %530 = vst [vmem:[#allocation2 + $0x1b0] sm:$0xff] %v512
      %531 = vst [vmem:[#allocation2 + $0x1b8] sm:$0xff] %v513
      %532 = vst [vmem:[#allocation2 + $0x1c0] sm:$0xff] %v514
      %533 = vst [vmem:[#allocation2 + $0x1c8] sm:$0xff] %v515
      %534 = vst [vmem:[#allocation2 + $0x1d0] sm:$0xff] %v516
      %535 = vst [vmem:[#allocation2 + $0x1d8] sm:$0xff] %v517
      %536 = vst [vmem:[#allocation2 + $0x1e0] sm:$0xff] %v518
      %537 = vst [vmem:[#allocation2 + $0x1e8] sm:$0xff] %v519
      %538 = vst.msk [vmem:[#allocation2 + $0x1f0] sm:$0xff] %vm254, %v520
      %539 = vrot.lane.b32.xlu0 %v236, 59
      %v540 = vpop.permute.xlu0 %539
      %541 = vrot.lane.b32.xlu0 %v237, 59
      %v542 = vpop.permute.xlu0 %541
      %543 = vrot.lane.b32.xlu0 %v238, 59
      %v544 = vpop.permute.xlu0 %543
      %545 = vrot.lane.b32.xlu0 %v239, 59
      %v546 = vpop.permute.xlu0 %545
      %547 = vrot.lane.b32.xlu0 %v240, 59
      %v548 = vpop.permute.xlu0 %547
      %549 = vrot.lane.b32.xlu0 %v241, 59
      %v550 = vpop.permute.xlu0 %549
      %551 = vrot.lane.b32.xlu0 %v242, 59
      %v552 = vpop.permute.xlu0 %551
      %553 = vrot.lane.b32.xlu0 %v243, 59
      %v554 = vpop.permute.xlu0 %553
      %555 = vrot.lane.b32.xlu0 %v244, 59
      %v556 = vpop.permute.xlu0 %555
      %557 = vrot.lane.b32.xlu0 %v245, 59
      %v558 = vpop.permute.xlu0 %557
      %vm559 = vcmask 482304
      %v560 = vsel %vm559, %v540, %v542
      %v561 = vsel %vm559, %v542, %v544
      %v562 = vsel %vm559, %v544, %v546
      %v563 = vsel %vm559, %v546, %v548
      %v564 = vsel %vm559, %v548, %v550
      %v565 = vsel %vm559, %v550, %v552
      %v566 = vsel %vm559, %v552, %v554
      %v567 = vsel %vm559, %v554, %v556
      %v568 = vsel %vm559, %v556, %v558
      %578 = vst [vmem:[#allocation2 + $0x1f8] sm:$0xff] %v560
      %579 = vst [vmem:[#allocation2 + $0x200] sm:$0xff] %v561
      %580 = vst [vmem:[#allocation2 + $0x208] sm:$0xff] %v562
      %581 = vst [vmem:[#allocation2 + $0x210] sm:$0xff] %v563
      %582 = vst [vmem:[#allocation2 + $0x218] sm:$0xff] %v564
      %583 = vst [vmem:[#allocation2 + $0x220] sm:$0xff] %v565
      %584 = vst [vmem:[#allocation2 + $0x228] sm:$0xff] %v566
      %585 = vst [vmem:[#allocation2 + $0x230] sm:$0xff] %v567
      %586 = vst.msk [vmem:[#allocation2 + $0x238] sm:$0xff] %vm254, %v568
      %587 = vrot.lane.b32.xlu0 %v236, 58
      %v588 = vpop.permute.xlu0 %587
      %589 = vrot.lane.b32.xlu0 %v237, 58
      %v590 = vpop.permute.xlu0 %589
      %591 = vrot.lane.b32.xlu0 %v238, 58
      %v592 = vpop.permute.xlu0 %591
      %593 = vrot.lane.b32.xlu0 %v239, 58
      %v594 = vpop.permute.xlu0 %593
      %595 = vrot.lane.b32.xlu0 %v240, 58
      %v596 = vpop.permute.xlu0 %595
      %597 = vrot.lane.b32.xlu0 %v241, 58
      %v598 = vpop.permute.xlu0 %597
      %599 = vrot.lane.b32.xlu0 %v242, 58
      %v600 = vpop.permute.xlu0 %599
      %601 = vrot.lane.b32.xlu0 %v243, 58
      %v602 = vpop.permute.xlu0 %601
      %603 = vrot.lane.b32.xlu0 %v244, 58
      %v604 = vpop.permute.xlu0 %603
      %605 = vrot.lane.b32.xlu0 %v245, 58
      %v606 = vpop.permute.xlu0 %605
      %vm607 = vcmask 474112
      %v608 = vsel %vm607, %v588, %v590
      %v609 = vsel %vm607, %v590, %v592
      %v610 = vsel %vm607, %v592, %v594
      %v611 = vsel %vm607, %v594, %v596
      %v612 = vsel %vm607, %v596, %v598
      %v613 = vsel %vm607, %v598, %v600
      %v614 = vsel %vm607, %v600, %v602
      %v615 = vsel %vm607, %v602, %v604
      %v616 = vsel %vm607, %v604, %v606
      %626 = vst [vmem:[#allocation2 + $0x240] sm:$0xff] %v608
      %627 = vst [vmem:[#allocation2 + $0x248] sm:$0xff] %v609
      %628 = vst [vmem:[#allocation2 + $0x250] sm:$0xff] %v610
      %629 = vst [vmem:[#allocation2 + $0x258] sm:$0xff] %v611
      %630 = vst [vmem:[#allocation2 + $0x260] sm:$0xff] %v612
      %631 = vst [vmem:[#allocation2 + $0x268] sm:$0xff] %v613
      %632 = vst [vmem:[#allocation2 + $0x270] sm:$0xff] %v614
      %633 = vst [vmem:[#allocation2 + $0x278] sm:$0xff] %v615
      %634 = vst.msk [vmem:[#allocation2 + $0x280] sm:$0xff] %vm254, %v616
      %v635 = vld [vmem:[%s1] sm:$0xf]
      %v636 = vld [vmem:[#allocation2] sm:$0xff]
      %v637 = vld [vmem:[#allocation2 + $0x8] sm:$0xff]
      %v638 = vld [vmem:[#allocation2 + $0x10] sm:$0xff]
      %v639 = vld [vmem:[#allocation2 + $0x18] sm:$0xff]
      %v640 = vld [vmem:[#allocation2 + $0x20] sm:$0xff]
      %v641 = vld [vmem:[#allocation2 + $0x28] sm:$0xff]
      %v642 = vld [vmem:[#allocation2 + $0x30] sm:$0xff]
      %v643 = vld [vmem:[#allocation2 + $0x38] sm:$0xff]
      %v644 = vld [vmem:[#allocation2 + $0x40] sm:$0xff]
      %v645 = vld [vmem:[#allocation2 + $0x48] sm:$0xff]
      %v646 = vld [vmem:[#allocation2 + $0x50] sm:$0xff]
      %v647 = vld [vmem:[#allocation2 + $0x58] sm:$0xff]
      %v648 = vld [vmem:[#allocation2 + $0x60] sm:$0xff]
      %v649 = vld [vmem:[#allocation2 + $0x68] sm:$0xff]
      %v650 = vld [vmem:[#allocation2 + $0x70] sm:$0xff]
      %v651 = vld [vmem:[#allocation2 + $0x78] sm:$0xff]
      %v652 = vld [vmem:[#allocation2 + $0x80] sm:$0xff]
      %v653 = vld [vmem:[#allocation2 + $0x88] sm:$0xff]
      %v654 = vld [vmem:[#allocation2 + $0x90] sm:$0xff]
      %v655 = vld [vmem:[#allocation2 + $0x98] sm:$0xff]
      %v656 = vld [vmem:[#allocation2 + $0xa0] sm:$0xff]
      %v657 = vld [vmem:[#allocation2 + $0xa8] sm:$0xff]
      %v658 = vld [vmem:[#allocation2 + $0xb0] sm:$0xff]
      %v659 = vld [vmem:[#allocation2 + $0xb8] sm:$0xff]
      %v660 = vld [vmem:[#allocation2 + $0xc0] sm:$0xff]
      %v661 = vld [vmem:[#allocation2 + $0xc8] sm:$0xff]
      %v662 = vld [vmem:[#allocation2 + $0xd0] sm:$0xff]
      %v663 = vld [vmem:[#allocation2 + $0xd8] sm:$0xff]
      %v664 = vld [vmem:[#allocation2 + $0xe0] sm:$0xff]
      %v665 = vld [vmem:[#allocation2 + $0xe8] sm:$0xff]
      %v666 = vld [vmem:[#allocation2 + $0xf0] sm:$0xff]
      %v667 = vld [vmem:[#allocation2 + $0xf8] sm:$0xff]
      %v668 = vld [vmem:[#allocation2 + $0x100] sm:$0xff]
      %v669 = vld [vmem:[#allocation2 + $0x108] sm:$0xff]
      %v670 = vld [vmem:[#allocation2 + $0x110] sm:$0xff]
      %v671 = vld [vmem:[#allocation2 + $0x118] sm:$0xff]
      %v672 = vld [vmem:[#allocation2 + $0x120] sm:$0xff]
      %v673 = vld [vmem:[#allocation2 + $0x128] sm:$0xff]
      %v674 = vld [vmem:[#allocation2 + $0x130] sm:$0xff]
      %v675 = vld [vmem:[#allocation2 + $0x138] sm:$0xff]
      %v676 = vld [vmem:[#allocation2 + $0x140] sm:$0xff]
      %v677 = vld [vmem:[#allocation2 + $0x148] sm:$0xff]
      %v678 = vld [vmem:[#allocation2 + $0x150] sm:$0xff]
      %v679 = vld [vmem:[#allocation2 + $0x158] sm:$0xff]
      %v680 = vld [vmem:[#allocation2 + $0x160] sm:$0xff]
      %v681 = vld [vmem:[#allocation2 + $0x168] sm:$0xff]
      %v682 = vld [vmem:[#allocation2 + $0x170] sm:$0xff]
      %v683 = vld [vmem:[#allocation2 + $0x178] sm:$0xff]
      %v684 = vld [vmem:[#allocation2 + $0x180] sm:$0xff]
      %v685 = vld [vmem:[#allocation2 + $0x188] sm:$0xff]
      %v686 = vld [vmem:[#allocation2 + $0x190] sm:$0xff]
      %v687 = vld [vmem:[#allocation2 + $0x198] sm:$0xff]
      %v688 = vld [vmem:[#allocation2 + $0x1a0] sm:$0xff]
      %v689 = vld [vmem:[#allocation2 + $0x1a8] sm:$0xff]
      %v690 = vld [vmem:[#allocation2 + $0x1b0] sm:$0xff]
      %v691 = vld [vmem:[#allocation2 + $0x1b8] sm:$0xff]
      %v692 = vld [vmem:[#allocation2 + $0x1c0] sm:$0xff]
      %v693 = vld [vmem:[#allocation2 + $0x1c8] sm:$0xff]
      %v694 = vld [vmem:[#allocation2 + $0x1d0] sm:$0xff]
      %v695 = vld [vmem:[#allocation2 + $0x1d8] sm:$0xff]
      %v696 = vld [vmem:[#allocation2 + $0x1e0] sm:$0xff]
      %v697 = vld [vmem:[#allocation2 + $0x1e8] sm:$0xff]
      %v698 = vld [vmem:[#allocation2 + $0x1f0] sm:$0xff]
      %v699 = vld [vmem:[#allocation2 + $0x1f8] sm:$0xff]
      %v700 = vld [vmem:[#allocation2 + $0x200] sm:$0xff]
      %v701 = vld [vmem:[#allocation2 + $0x208] sm:$0xff]
      %v702 = vld [vmem:[#allocation2 + $0x210] sm:$0xff]
      %v703 = vld [vmem:[#allocation2 + $0x218] sm:$0xff]
      %v704 = vld [vmem:[#allocation2 + $0x220] sm:$0xff]
      %v705 = vld [vmem:[#allocation2 + $0x228] sm:$0xff]
      %v706 = vld [vmem:[#allocation2 + $0x230] sm:$0xff]
      %v707 = vld [vmem:[#allocation2 + $0x238] sm:$0xff]
      %v708 = vld [vmem:[#allocation2 + $0x240] sm:$0xff]
      %v709 = vld [vmem:[#allocation2 + $0x248] sm:$0xff]
      %v710 = vld [vmem:[#allocation2 + $0x250] sm:$0xff]
      %v711 = vld [vmem:[#allocation2 + $0x258] sm:$0xff]
      %v712 = vld [vmem:[#allocation2 + $0x260] sm:$0xff]
      %v713 = vld [vmem:[#allocation2 + $0x268] sm:$0xff]
      %v714 = vld [vmem:[#allocation2 + $0x270] sm:$0xff]
      %v715 = vld [vmem:[#allocation2 + $0x278] sm:$0xff]
      %v716 = vld [vmem:[#allocation2 + $0x280] sm:$0xff]
      %v717 = vld [vmem:[%s2] sm:$0xf]
      %719 = vset.pattern.permute.xlu0 0
      %720 = vperm.xlu0 %719, %v717
      %v721 = vpop.permute.xlu0 %720
      %vm723 = vcmask 588800
      %v725 = vsel %vm723, %v635, 0
      %727 = vmatpush.msra.mxu0 0.0
      %728 = vmatpush.msra.mxu0 0.0
      %729 = vmatpush.msra.mxu0 0.0
      %730 = vmatpush.msra.mxu0 0.0
      %731 = vmatpush.msra.mxu0 0.0
      %732 = vmatpush.msra.mxu0 0.0
      %733 = vmatpush.msra.mxu0 0.0
      %734 = vmatpush.msra.mxu0 %v708
      %735 = vmatpush.msra.mxu0 %v699
      %736 = vmatpush.msra.mxu0 %v690
      %737 = vmatpush.msra.mxu0 %v681
      %738 = vmatpush.msra.mxu0 %v672
      %739 = vmatpush.msra.mxu0 %v663
      %740 = vmatpush.msra.mxu0 %v654
      %741 = vmatpush.msra.mxu0 %v645
      %742 = vmatpush.msra.mxu0 %v636
      %743 = vmatmul.f32.gmra.mxu0 %v725
      %v744 = vpop.f32.mrf.mxu0
      %v745 = vadd.f32 %v721, %v744
      %746 = vdwg.mxu0
      %747 = vmatpush.msra.mxu0 0.0
      %748 = vmatpush.msra.mxu0 0.0
      %749 = vmatpush.msra.mxu0 0.0
      %750 = vmatpush.msra.mxu0 0.0
      %751 = vmatpush.msra.mxu0 0.0
      %752 = vmatpush.msra.mxu0 0.0
      %753 = vmatpush.msra.mxu0 0.0
      %754 = vmatpush.msra.mxu0 %v709
      %755 = vmatpush.msra.mxu0 %v700
      %756 = vmatpush.msra.mxu0 %v691
      %757 = vmatpush.msra.mxu0 %v682
      %758 = vmatpush.msra.mxu0 %v673
      %759 = vmatpush.msra.mxu0 %v664
      %760 = vmatpush.msra.mxu0 %v655
      %761 = vmatpush.msra.mxu0 %v646
      %762 = vmatpush.msra.mxu0 %v637
      %763 = vmatmul.f32.gmra.mxu0 %v725
      %v764 = vpop.f32.mrf.mxu0
      %v765 = vadd.f32 %v721, %v764
      %766 = vdwg.mxu0
      %767 = vmatpush.msra.mxu0 0.0
      %768 = vmatpush.msra.mxu0 0.0
      %769 = vmatpush.msra.mxu0 0.0
      %770 = vmatpush.msra.mxu0 0.0
      %771 = vmatpush.msra.mxu0 0.0
      %772 = vmatpush.msra.mxu0 0.0
      %773 = vmatpush.msra.mxu0 0.0
      %774 = vmatpush.msra.mxu0 %v710
      %775 = vmatpush.msra.mxu0 %v701
      %776 = vmatpush.msra.mxu0 %v692
      %777 = vmatpush.msra.mxu0 %v683
      %778 = vmatpush.msra.mxu0 %v674
      %779 = vmatpush.msra.mxu0 %v665
      %780 = vmatpush.msra.mxu0 %v656
      %781 = vmatpush.msra.mxu0 %v647
      %782 = vmatpush.msra.mxu0 %v638
      %783 = vmatmul.f32.gmra.mxu0 %v725
      %v784 = vpop.f32.mrf.mxu0
      %v785 = vadd.f32 %v721, %v784
      %786 = vdwg.mxu0
      %787 = vmatpush.msra.mxu0 0.0
      %788 = vmatpush.msra.mxu0 0.0
      %789 = vmatpush.msra.mxu0 0.0
      %790 = vmatpush.msra.mxu0 0.0
      %791 = vmatpush.msra.mxu0 0.0
      %792 = vmatpush.msra.mxu0 0.0
      %793 = vmatpush.msra.mxu0 0.0
      %794 = vmatpush.msra.mxu0 %v711
      %795 = vmatpush.msra.mxu0 %v702
      %796 = vmatpush.msra.mxu0 %v693
      %797 = vmatpush.msra.mxu0 %v684
      %798 = vmatpush.msra.mxu0 %v675
      %799 = vmatpush.msra.mxu0 %v666
      %800 = vmatpush.msra.mxu0 %v657
      %801 = vmatpush.msra.mxu0 %v648
      %802 = vmatpush.msra.mxu0 %v639
      %803 = vmatmul.f32.gmra.mxu0 %v725
      %v804 = vpop.f32.mrf.mxu0
      %v805 = vadd.f32 %v721, %v804
      %806 = vdwg.mxu0
      %807 = vmatpush.msra.mxu0 0.0
      %808 = vmatpush.msra.mxu0 0.0
      %809 = vmatpush.msra.mxu0 0.0
      %810 = vmatpush.msra.mxu0 0.0
      %811 = vmatpush.msra.mxu0 0.0
      %812 = vmatpush.msra.mxu0 0.0
      %813 = vmatpush.msra.mxu0 0.0
      %814 = vmatpush.msra.mxu0 %v712
      %815 = vmatpush.msra.mxu0 %v703
      %816 = vmatpush.msra.mxu0 %v694
      %817 = vmatpush.msra.mxu0 %v685
      %818 = vmatpush.msra.mxu0 %v676
      %819 = vmatpush.msra.mxu0 %v667
      %820 = vmatpush.msra.mxu0 %v658
      %821 = vmatpush.msra.mxu0 %v649
      %822 = vmatpush.msra.mxu0 %v640
      %823 = vmatmul.f32.gmra.mxu0 %v725
      %v824 = vpop.f32.mrf.mxu0
      %v825 = vadd.f32 %v721, %v824
      %826 = vdwg.mxu0
      %827 = vmatpush.msra.mxu0 0.0
      %828 = vmatpush.msra.mxu0 0.0
      %829 = vmatpush.msra.mxu0 0.0
      %830 = vmatpush.msra.mxu0 0.0
      %831 = vmatpush.msra.mxu0 0.0
      %832 = vmatpush.msra.mxu0 0.0
      %833 = vmatpush.msra.mxu0 0.0
      %834 = vmatpush.msra.mxu0 %v713
      %835 = vmatpush.msra.mxu0 %v704
      %836 = vmatpush.msra.mxu0 %v695
      %837 = vmatpush.msra.mxu0 %v686
      %838 = vmatpush.msra.mxu0 %v677
      %839 = vmatpush.msra.mxu0 %v668
      %840 = vmatpush.msra.mxu0 %v659
      %841 = vmatpush.msra.mxu0 %v650
      %842 = vmatpush.msra.mxu0 %v641
      %843 = vmatmul.f32.gmra.mxu0 %v725
      %v844 = vpop.f32.mrf.mxu0
      %v845 = vadd.f32 %v721, %v844
      %846 = vdwg.mxu0
      %847 = vmatpush.msra.mxu0 0.0
      %848 = vmatpush.msra.mxu0 0.0
      %849 = vmatpush.msra.mxu0 0.0
      %850 = vmatpush.msra.mxu0 0.0
      %851 = vmatpush.msra.mxu0 0.0
      %852 = vmatpush.msra.mxu0 0.0
      %853 = vmatpush.msra.mxu0 0.0
      %854 = vmatpush.msra.mxu0 %v714
      %855 = vmatpush.msra.mxu0 %v705
      %856 = vmatpush.msra.mxu0 %v696
      %857 = vmatpush.msra.mxu0 %v687
      %858 = vmatpush.msra.mxu0 %v678
      %859 = vmatpush.msra.mxu0 %v669
      %860 = vmatpush.msra.mxu0 %v660
      %861 = vmatpush.msra.mxu0 %v651
      %862 = vmatpush.msra.mxu0 %v642
      %863 = vmatmul.f32.gmra.mxu0 %v725
      %v864 = vpop.f32.mrf.mxu0
      %v865 = vadd.f32 %v721, %v864
      %866 = vdwg.mxu0
      %867 = vmatpush.msra.mxu0 0.0
      %868 = vmatpush.msra.mxu0 0.0
      %869 = vmatpush.msra.mxu0 0.0
      %870 = vmatpush.msra.mxu0 0.0
      %871 = vmatpush.msra.mxu0 0.0
      %872 = vmatpush.msra.mxu0 0.0
      %873 = vmatpush.msra.mxu0 0.0
      %874 = vmatpush.msra.mxu0 %v715
      %875 = vmatpush.msra.mxu0 %v706
      %876 = vmatpush.msra.mxu0 %v697
      %877 = vmatpush.msra.mxu0 %v688
      %878 = vmatpush.msra.mxu0 %v679
      %879 = vmatpush.msra.mxu0 %v670
      %880 = vmatpush.msra.mxu0 %v661
      %881 = vmatpush.msra.mxu0 %v652
      %882 = vmatpush.msra.mxu0 %v643
      %883 = vmatmul.f32.gmra.mxu0 %v725
      %v884 = vpop.f32.mrf.mxu0
      %v885 = vadd.f32 %v721, %v884
      %886 = vdwg.mxu0
      %887 = vmatpush.msra.mxu0 0.0
      %888 = vmatpush.msra.mxu0 0.0
      %889 = vmatpush.msra.mxu0 0.0
      %890 = vmatpush.msra.mxu0 0.0
      %891 = vmatpush.msra.mxu0 0.0
      %892 = vmatpush.msra.mxu0 0.0
      %893 = vmatpush.msra.mxu0 0.0
      %894 = vmatpush.msra.mxu0 %v716
      %895 = vmatpush.msra.mxu0 %v707
      %896 = vmatpush.msra.mxu0 %v698
      %897 = vmatpush.msra.mxu0 %v689
      %898 = vmatpush.msra.mxu0 %v680
      %899 = vmatpush.msra.mxu0 %v671
      %900 = vmatpush.msra.mxu0 %v662
      %901 = vmatpush.msra.mxu0 %v653
      %902 = vmatpush.msra.mxu0 %v644
      %903 = vmatmul.f32.gmra.mxu0 %v725
      %v904 = vpop.f32.mrf.mxu0
      %v905 = vadd.f32 %v721, %v904
      %906 = vdwg.mxu0
      %v907 = vld [vmem:[%s3] sm:$0xff]
      %v908 = vld [vmem:[%s3 + $0x8] sm:$0x1]
      %v911 = vperm.slane %v907, 0
      %v912 = vperm.slane %v907, 1
      %v913 = vperm.slane %v907, 2
      %v914 = vperm.slane %v907, 3
      %v915 = vperm.slane %v907, 4
      %v916 = vperm.slane %v907, 5
      %v917 = vperm.slane %v907, 6
      %v918 = vperm.slane %v907, 7
      %v919 = vperm.slane %v908, 0
      %v929 = vmul.f32 %v745, %v911
      %v930 = vmul.f32 %v765, %v912
      %v931 = vmul.f32 %v785, %v913
      %v932 = vmul.f32 %v805, %v914
      %v933 = vmul.f32 %v825, %v915
      %v934 = vmul.f32 %v845, %v916
      %v935 = vmul.f32 %v865, %v917
      %v936 = vmul.f32 %v885, %v918
      %v937 = vmul.f32 %v905, %v919
      %vm938 = vcmask 1043456
      %v939 = vsel %vm938, %v929, 0.0
      %v940 = vsel %vm938, %v930, 0.0
      %v941 = vadd.f32 %v939, %v940
      %v942 = vsel %vm938, %v931, 0.0
      %v943 = vadd.f32 %v941, %v942
      %v944 = vsel %vm938, %v932, 0.0
      %v945 = vadd.f32 %v943, %v944
      %v946 = vsel %vm938, %v933, 0.0
      %v947 = vadd.f32 %v945, %v946
      %v948 = vsel %vm938, %v934, 0.0
      %v949 = vadd.f32 %v947, %v948
      %v950 = vsel %vm938, %v935, 0.0
      %v951 = vadd.f32 %v949, %v950
      %v952 = vsel %vm938, %v936, 0.0
      %v953 = vadd.f32 %v951, %v952
      %vm954 = vcmask 519168
      %v955 = vsel %vm954, %v937, 0.0
      %v956 = vadd.f32 %v953, %v955
      %957 = vadd.xlane.f32.xlu0 %v956
      %v958 = vpop.xlane.xlu0 %957
      %vm959 = vcmask 3072
      %960 = vst.msk [vmem:[%s235] sm:$0xf] %vm959, %v958
      %v961 = vmul.f32 %v929, %v929
      %v962 = vmul.f32 %v930, %v930
      %v963 = vmul.f32 %v931, %v931
      %v964 = vmul.f32 %v932, %v932
      %v965 = vmul.f32 %v933, %v933
      %v966 = vmul.f32 %v934, %v934
      %v967 = vmul.f32 %v935, %v935
      %v968 = vmul.f32 %v936, %v936
      %v969 = vmul.f32 %v937, %v937
      %v970 = vsel %vm938, %v961, 0.0
      %v971 = vsel %vm938, %v962, 0.0
      %v972 = vadd.f32 %v970, %v971
      %v973 = vsel %vm938, %v963, 0.0
      %v974 = vadd.f32 %v972, %v973
      %v975 = vsel %vm938, %v964, 0.0
      %v976 = vadd.f32 %v974, %v975
      %v977 = vsel %vm938, %v965, 0.0
      %v978 = vadd.f32 %v976, %v977
      %v979 = vsel %vm938, %v966, 0.0
      %v980 = vadd.f32 %v978, %v979
      %v981 = vsel %vm938, %v967, 0.0
      %v982 = vadd.f32 %v980, %v981
      %v983 = vsel %vm938, %v968, 0.0
      %v984 = vadd.f32 %v982, %v983
      %v985 = vsel %vm954, %v969, 0.0
      %v986 = vadd.f32 %v984, %v985
      %987 = vadd.xlane.f32.xlu0 %v986
      %v988 = vpop.xlane.xlu0 %987
      %vm989 = vcmask 11272
      %990 = vst.msk [vmem:[%s235] sm:$0xf] %vm989, %v988
      %991 = vst [vmem:[%s231] sm:$0xff] 0.0
      %992 = vst [vmem:[%s231 + $0x8] sm:$0xff] 0.0
      %993 = vst [vmem:[%s231 + $0x10] sm:$0xff] 0.0
      %994 = vst [vmem:[%s231 + $0x18] sm:$0xff] 0.0
      %vm995 = vcmask 310276
      %vm996 = vmor %vm995, %vm938
      %997 = vst.msk [vmem:[%s231 + $0x20] sm:$0xff] %vm996, 0.0
      %v1007 = vrot.slane %v930, 4
      %v1008 = vrot.slane %v932, 4
      %v1009 = vrot.slane %v934, 4
      %v1010 = vrot.slane %v936, 4
      %v1011 = vsel %vm938, %v929, %v1007
      %v1012 = vsel %vm938, %v931, %v1008
      %v1013 = vsel %vm938, %v933, %v1009
      %v1014 = vsel %vm938, %v935, %v1010
      %1015 = vrot.lane.b32.xlu0 %v1011, 35
      %v1016 = vpop.permute.xlu0 %1015
      %1017 = vrot.lane.b32.xlu0 %v1012, 35
      %v1018 = vpop.permute.xlu0 %1017
      %1019 = vrot.lane.b32.xlu0 %v1013, 35
      %v1020 = vpop.permute.xlu0 %1019
      %1021 = vrot.lane.b32.xlu0 %v1014, 35
      %v1022 = vpop.permute.xlu0 %1021
      %1023 = vrot.lane.b32.xlu0 %v937, 35
      %v1024 = vpop.permute.xlu0 %1023
      %v1025 = vrot.slane %v1016, 4
      %v1026 = vrot.slane %v1018, 4
      %v1027 = vrot.slane %v1020, 4
      %v1028 = vrot.slane %v1022, 4
      %vm1029 = vcmask 285696
      %v1030 = vsel %vm1029, %v1025, %v1016
      %v1031 = vsel %vm938, %v1025, %v1026
      %v1032 = vsel %vm1029, %v1031, %v1018
      %v1033 = vsel %vm938, %v1026, %v1027
      %v1034 = vsel %vm1029, %v1033, %v1020
      %v1035 = vsel %vm938, %v1027, %v1028
      %v1036 = vsel %vm1029, %v1035, %v1022
      %v1037 = vsel %vm1029, %v1028, %v1024
      %vm1043 = vcmask 1043736
      %vm1044 = vcmask 1047556
      %vm1045 = vmor %vm1044, %vm1043
      %1046 = vst.msk [vmem:[%s231] sm:$0xff] %vm1045, %v1030
      %1047 = vst [vmem:[%s231 + $0x8] sm:$0xff] %v1032
      %1048 = vst [vmem:[%s231 + $0x10] sm:$0xff] %v1034
      %1049 = vst [vmem:[%s231 + $0x18] sm:$0xff] %v1036
      %vm1050 = vcmask 805888
      %1051 = vst.msk [vmem:[%s231 + $0x20] sm:$0xf] %vm1050, %v1037
      %p1052 = scmp.lt.s32.totalorder %s17, 1
      %s1053 = scalar_select %p1052, %s17, 1
      %s1054 = smul.addr %s1053, 10
      %s1055 = smul.addr %s1054, 4
      %s1056 = scalar_lea.vmem %s4, %s1055
      %p1057 = scmp.lt.s32.totalorder %s17, 1
      %s1058 = scalar_select %p1057, %s17, 1
      %s1059 = smul.addr %s1058, 4
      %s1060 = scalar_lea.vmem %s5, %s1059
      // Predicated region
      $region37: #{unet_expansion_stack.5} parent=35 // pred_check
        %p1061 = pneg %p124
      $region38: #{unet_expansion_stack.5} parent=35 // pred_check_branch
        %1063 = sbr.rel (%p1061) target = $region40
      $region39: #{unet_expansion_stack.5} parent=35 // pred_region
        _
      $region40: #{unet_expansion_stack.5} parent=35 // pred_fallthru
        _
      // Predicated region
      $region41: #{unet_expansion_stack.5} parent=35 // pred_check
        %p1064 = pneg %p150
      $region42: #{unet_expansion_stack.5} parent=35 // pred_check_branch
        %1066 = sbr.rel (%p1064) target = $region44
      $region43: #{unet_expansion_stack.5} parent=35 // pred_region
        _
      $region44: #{unet_expansion_stack.5} parent=35 // pred_fallthru
        _
    $region36: #{unet_expansion_stack.5} parent=5 // pred_fallthru
      _
    %p1067 = scmp.le.s32.totalorder 2, %s12
    // Predicated region
    $region45: #{unet_expansion_stack.5} parent=5 // pred_check
      %p1068 = pneg %p1067
    $region46: #{unet_expansion_stack.5} parent=5 // pred_check_branch
      %1070 = sbr.rel (%p1068) target = $region48
    $region47: #{unet_expansion_stack.5} parent=5 // pred_region
      %s1071 = ssub.s32 %s12, 2
      // Predicated region
      $region49: #{unet_expansion_stack.5} parent=47 // pred_check
        %p1072 = pneg %p130
      $region50: #{unet_expansion_stack.5} parent=47 // pred_check_branch
        %1074 = sbr.rel (%p1072) target = $region52
      $region51: #{unet_expansion_stack.5} parent=47 // pred_region
        %p1075 = scmp.lt.s32.totalorder %s18, 1
        %s1076 = scalar_select %p1075, %s18, 1
        %s1077 = smul.addr %s1076, 10
        %s1078 = smul.addr %s1077, 4
        %s1079 = scalar_lea.vmem %s4, %s1078
      $region52: #{unet_expansion_stack.5} parent=47 // pred_fallthru
        _
      // Predicated region
      $region53: #{unet_expansion_stack.5} parent=47 // pred_check
        %p1080 = pneg %p156
      $region54: #{unet_expansion_stack.5} parent=47 // pred_check_branch
        %1082 = sbr.rel (%p1080) target = $region56
      $region55: #{unet_expansion_stack.5} parent=47 // pred_region
        %p1083 = scmp.lt.s32.totalorder %s18, 1
        %s1084 = scalar_select %p1083, %s18, 1
        %s1085 = smul.addr %s1084, 4
        %s1086 = scalar_lea.vmem %s5, %s1085
      $region56: #{unet_expansion_stack.5} parent=47 // pred_fallthru
        _
    $region48: #{unet_expansion_stack.5} parent=5 // pred_fallthru
      _
  $region6: #{unet_expansion_stack.5} parent=0 // loop_footer
    %s16 = sadd.s32 1, %s12
  $region7: #{unet_expansion_stack.5} parent=0 // loop_footer_branch
    %11 = sbr.rel target = $region3
  $region8: #{unet_expansion_stack.5} parent=0 // loop_exit
    _

// kernel: unet_expansion_stack.6
$region0: #{unet_expansion_stack.6}
  #allocation0 [shape = 'u32[]', space=smem, size = 0x4, offset = 0x4, fixed_abs, tag = 'smem constant byte address 0x4 - core index']
  #allocation1 [shape = 'u32[72,128]{1,0:T(1,128)}', space=vmem, size = 0x9000, scoped, tag = 'internal scratch']
  #allocation2 [shape = 'f32[36,1088]{1,0:T(8,128)}', space=vmem, size = 0x2d000, scoped, tag = 'scratch operand']
  %s0 = inlined_call_operand.vmem [shape: f32[2,4,1190], index: 0, kind: input, shape index: {}]
  %s1 = inlined_call_operand.vmem [shape: f32[4,1], index: 1, kind: input, shape index: {}]
  %s2 = inlined_call_operand.vmem [shape: f32[4,1], index: 2, kind: input, shape index: {}]
  %s3 = inlined_call_operand.vmem [shape: f32[1,1190], index: 3, kind: input, shape index: {}]
  %s4 = inlined_call_operand.vmem [shape: f32[4,36], index: 4, kind: input, shape index: {}]
  %s5 = inlined_call_operand.vmem [shape: f32[4,1], index: 5, kind: input, shape index: {}]
  %s6 = inlined_call_operand.vmem [shape: f32[1,1088], index: 6, kind: input, shape index: {}]
  %s7 = inlined_call_operand.vmem [shape: f32[2,4,1190], index: 7, kind: output, shape index: {0}]
  %s8 = inlined_call_operand.vmem [shape: f32[2,4,2], index: 8, kind: output, shape index: {1}]
  %9 = xla_tuple %s7, %s8
  %s10 = sld [smem:[#allocation0]]
  $region69: #{unet_expansion_stack.6} parent=0
    _
  %s12 = ssub.s32 1, %s10
  %s13 = scalar_select 0, %s12, %s10
  loop: start=0, step=1, limit=4
  $region2: #{unet_expansion_stack.6} parent=0 // loop_pre_header
    _
  $region3: #{unet_expansion_stack.6} parent=0 // loop_header
    %s15 = sphi 0, %s19
    %p16 = scmp.ge.s32.totalorder %s15, 4
    %s25 = sphi 0, %s27
    %s28 = sphi 0, %s25
    %s29 = sphi 0, %s28
    %s45 = sphi 0, %s29
    %s49 = sphi 0, %s49
    %s51 = sphi 0, %s49
    %s52 = sphi 0, %s51
    %s66 = sphi 0, %s52
    %s70 = sphi 0, %s70
    %s72 = sphi 0, %s70
    %s73 = sphi 0, %s72
    %s87 = sphi 0, %s73
    %s91 = sphi 0, %s91
    %s93 = sphi 0, %s91
    %s94 = sphi 0, %s93
    %s108 = sphi 0, %s94
    %s112 = sphi 0, %s112
    %s114 = sphi 0, %s112
    %s115 = sphi 0, %s114
    %s129 = sphi 0, %s115
    %s133 = sphi 0, %s133
    %s135 = sphi 0, %s133
    %s136 = sphi 0, %s135
    %s150 = sphi 0, %s136
    %s154 = sphi 0, %s154
    %s156 = sphi 0, %s154
    %s157 = sphi 0, %s156
    %s171 = sphi 0, %s157
    %s177 = sphi 0, %s179
    %s180 = sphi 0, %s177
    %s181 = sphi 0, %s180
    %s197 = sphi 0, %s181
    %s203 = sphi 0, %s205
    %s206 = sphi 0, %s203
    %s207 = sphi 0, %s206
    %s223 = sphi 0, %s207
  $region4: #{unet_expansion_stack.6} parent=0 // loop_header_branch
    %18 = sbr.rel (%p16) target = $region8
  $region5: #{unet_expansion_stack.6} parent=0 // loop_body
    %s20 = ssub.s32 %s15, 1
    %s21 = ssub.s32 %s15, 2
    %s22 = sadd.s32 %s15, 1
    %s23 = ssub.s32 %s15, %s22
    %p24 = scmp.eq.s32.totalorder %s23, 0
    %s26 = sadd.s32 %s25, 1
    %s27 = scalar_select %p24, %s25, %s26
    %p30 = pneg %p24
    %p31 = scmp.eq.s32.totalorder %s15, 1
    %p32 = por %p30, %p31
    %p33 = scmp.ne.s32.totalorder %s25, %s28
    %p34 = scmp.eq.s32.totalorder %s15, 0
    %p35 = por %p33, %p34
    %p36 = scmp.ne.s32.totalorder %s25, %s28
    %p37 = scmp.eq.s32.totalorder %s20, 1
    %p38 = por %p36, %p37
    %p39 = scmp.ne.s32.totalorder %s28, %s29
    %p40 = scmp.eq.s32.totalorder %s20, 0
    %p41 = por %p39, %p40
    %p42 = scmp.ne.s32.totalorder %s28, %s29
    %p43 = scmp.eq.s32.totalorder %s21, 1
    %p44 = por %p42, %p43
    %p46 = scmp.ne.s32.totalorder %s29, %s45
    %p47 = scmp.eq.s32.totalorder %s21, 0
    %p48 = por %p46, %p47
    %s50 = sadd.s32 %s49, 1
    %p53 = scmp.eq.s32.totalorder %s15, 1
    %p54 = scmp.ne.s32.totalorder %s49, %s51
    %p55 = scmp.eq.s32.totalorder %s15, 0
    %p56 = por %p54, %p55
    %p57 = scmp.ne.s32.totalorder %s49, %s51
    %p58 = scmp.eq.s32.totalorder %s20, 1
    %p59 = por %p57, %p58
    %p60 = scmp.ne.s32.totalorder %s51, %s52
    %p61 = scmp.eq.s32.totalorder %s20, 0
    %p62 = por %p60, %p61
    %p63 = scmp.ne.s32.totalorder %s51, %s52
    %p64 = scmp.eq.s32.totalorder %s21, 1
    %p65 = por %p63, %p64
    %p67 = scmp.ne.s32.totalorder %s52, %s66
    %p68 = scmp.eq.s32.totalorder %s21, 0
    %p69 = por %p67, %p68
    %s71 = sadd.s32 %s70, 1
    %p74 = scmp.eq.s32.totalorder %s15, 1
    %p75 = scmp.ne.s32.totalorder %s70, %s72
    %p76 = scmp.eq.s32.totalorder %s15, 0
    %p77 = por %p75, %p76
    %p78 = scmp.ne.s32.totalorder %s70, %s72
    %p79 = scmp.eq.s32.totalorder %s20, 1
    %p80 = por %p78, %p79
    %p81 = scmp.ne.s32.totalorder %s72, %s73
    %p82 = scmp.eq.s32.totalorder %s20, 0
    %p83 = por %p81, %p82
    %p84 = scmp.ne.s32.totalorder %s72, %s73
    %p85 = scmp.eq.s32.totalorder %s21, 1
    %p86 = por %p84, %p85
    %p88 = scmp.ne.s32.totalorder %s73, %s87
    %p89 = scmp.eq.s32.totalorder %s21, 0
    %p90 = por %p88, %p89
    %s92 = sadd.s32 %s91, 1
    %p95 = scmp.eq.s32.totalorder %s15, 1
    %p96 = scmp.ne.s32.totalorder %s91, %s93
    %p97 = scmp.eq.s32.totalorder %s15, 0
    %p98 = por %p96, %p97
    %p99 = scmp.ne.s32.totalorder %s91, %s93
    %p100 = scmp.eq.s32.totalorder %s20, 1
    %p101 = por %p99, %p100
    %p102 = scmp.ne.s32.totalorder %s93, %s94
    %p103 = scmp.eq.s32.totalorder %s20, 0
    %p104 = por %p102, %p103
    %p105 = scmp.ne.s32.totalorder %s93, %s94
    %p106 = scmp.eq.s32.totalorder %s21, 1
    %p107 = por %p105, %p106
    %p109 = scmp.ne.s32.totalorder %s94, %s108
    %p110 = scmp.eq.s32.totalorder %s21, 0
    %p111 = por %p109, %p110
    %s113 = sadd.s32 %s112, 1
    %p116 = scmp.eq.s32.totalorder %s15, 1
    %p117 = scmp.ne.s32.totalorder %s112, %s114
    %p118 = scmp.eq.s32.totalorder %s15, 0
    %p119 = por %p117, %p118
    %p120 = scmp.ne.s32.totalorder %s112, %s114
    %p121 = scmp.eq.s32.totalorder %s20, 1
    %p122 = por %p120, %p121
    %p123 = scmp.ne.s32.totalorder %s114, %s115
    %p124 = scmp.eq.s32.totalorder %s20, 0
    %p125 = por %p123, %p124
    %p126 = scmp.ne.s32.totalorder %s114, %s115
    %p127 = scmp.eq.s32.totalorder %s21, 1
    %p128 = por %p126, %p127
    %p130 = scmp.ne.s32.totalorder %s115, %s129
    %p131 = scmp.eq.s32.totalorder %s21, 0
    %p132 = por %p130, %p131
    %s134 = sadd.s32 %s133, 1
    %p137 = scmp.eq.s32.totalorder %s15, 1
    %p138 = scmp.ne.s32.totalorder %s133, %s135
    %p139 = scmp.eq.s32.totalorder %s15, 0
    %p140 = por %p138, %p139
    %p141 = scmp.ne.s32.totalorder %s133, %s135
    %p142 = scmp.eq.s32.totalorder %s20, 1
    %p143 = por %p141, %p142
    %p144 = scmp.ne.s32.totalorder %s135, %s136
    %p145 = scmp.eq.s32.totalorder %s20, 0
    %p146 = por %p144, %p145
    %p147 = scmp.ne.s32.totalorder %s135, %s136
    %p148 = scmp.eq.s32.totalorder %s21, 1
    %p149 = por %p147, %p148
    %p151 = scmp.ne.s32.totalorder %s136, %s150
    %p152 = scmp.eq.s32.totalorder %s21, 0
    %p153 = por %p151, %p152
    %s155 = sadd.s32 %s154, 1
    %p158 = scmp.eq.s32.totalorder %s15, 1
    %p159 = scmp.ne.s32.totalorder %s154, %s156
    %p160 = scmp.eq.s32.totalorder %s15, 0
    %p161 = por %p159, %p160
    %p162 = scmp.ne.s32.totalorder %s154, %s156
    %p163 = scmp.eq.s32.totalorder %s20, 1
    %p164 = por %p162, %p163
    %p165 = scmp.ne.s32.totalorder %s156, %s157
    %p166 = scmp.eq.s32.totalorder %s20, 0
    %p167 = por %p165, %p166
    %p168 = scmp.ne.s32.totalorder %s156, %s157
    %p169 = scmp.eq.s32.totalorder %s21, 1
    %p170 = por %p168, %p169
    %p172 = scmp.ne.s32.totalorder %s157, %s171
    %p173 = scmp.eq.s32.totalorder %s21, 0
    %p174 = por %p172, %p173
    %s175 = ssub.s32 %s15, %s22
    %p176 = scmp.eq.s32.totalorder %s175, 0
    %s178 = sadd.s32 %s177, 1
    %s179 = scalar_select %p176, %s177, %s178
    %p182 = pneg %p176
    %p183 = scmp.eq.s32.totalorder %s15, 1
    %p184 = por %p182, %p183
    %p185 = scmp.ne.s32.totalorder %s177, %s180
    %p186 = scmp.eq.s32.totalorder %s15, 0
    %p187 = por %p185, %p186
    %p188 = scmp.ne.s32.totalorder %s177, %s180
    %p189 = scmp.eq.s32.totalorder %s20, 1
    %p190 = por %p188, %p189
    %p191 = scmp.ne.s32.totalorder %s180, %s181
    %p192 = scmp.eq.s32.totalorder %s20, 0
    %p193 = por %p191, %p192
    %p194 = scmp.ne.s32.totalorder %s180, %s181
    %p195 = scmp.eq.s32.totalorder %s21, 1
    %p196 = por %p194, %p195
    %p198 = scmp.ne.s32.totalorder %s181, %s197
    %p199 = scmp.eq.s32.totalorder %s21, 0
    %p200 = por %p198, %p199
    %s201 = ssub.s32 %s15, %s22
    %p202 = scmp.eq.s32.totalorder %s201, 0
    %s204 = sadd.s32 %s203, 1
    %s205 = scalar_select %p202, %s203, %s204
    %p208 = pneg %p202
    %p209 = scmp.eq.s32.totalorder %s15, 1
    %p210 = por %p208, %p209
    %p211 = scmp.ne.s32.totalorder %s203, %s206
    %p212 = scmp.eq.s32.totalorder %s15, 0
    %p213 = por %p211, %p212
    %p214 = scmp.ne.s32.totalorder %s203, %s206
    %p215 = scmp.eq.s32.totalorder %s20, 1
    %p216 = por %p214, %p215
    %p217 = scmp.ne.s32.totalorder %s206, %s207
    %p218 = scmp.eq.s32.totalorder %s20, 0
    %p219 = por %p217, %p218
    %p220 = scmp.ne.s32.totalorder %s206, %s207
    %p221 = scmp.eq.s32.totalorder %s21, 1
    %p222 = por %p220, %p221
    %p224 = scmp.ne.s32.totalorder %s207, %s223
    %p225 = scmp.eq.s32.totalorder %s21, 0
    %p226 = por %p224, %p225
    %p227 = scmp.le.s32.totalorder 1, %s15
    %p228 = scmp.lt.s32.totalorder %s15, 3
    %p229 = pnand %p227, %p228
    %p230 = pneg %p229
    // Predicated region
    $region9: #{unet_expansion_stack.6} parent=5 // pred_check
      _
    $region10: #{unet_expansion_stack.6} parent=5 // pred_check_branch
      %232 = sbr.rel (%p229) target = $region12
    $region11: #{unet_expansion_stack.6} parent=5 // pred_region
      %s233 = ssub.s32 %s15, 1
      // Predicated region
      $region13: #{unet_expansion_stack.6} parent=11 // pred_check
        %p234 = pneg %p62
      $region14: #{unet_expansion_stack.6} parent=11 // pred_check_branch
        %236 = sbr.rel (%p234) target = $region16
      $region15: #{unet_expansion_stack.6} parent=11 // pred_region
        _
      $region16: #{unet_expansion_stack.6} parent=11 // pred_fallthru
        _
      // Predicated region
      $region17: #{unet_expansion_stack.6} parent=11 // pred_check
        %p237 = pneg %p83
      $region18: #{unet_expansion_stack.6} parent=11 // pred_check_branch
        %239 = sbr.rel (%p237) target = $region20
      $region19: #{unet_expansion_stack.6} parent=11 // pred_region
        _
      $region20: #{unet_expansion_stack.6} parent=11 // pred_fallthru
        _
      // Predicated region
      $region21: #{unet_expansion_stack.6} parent=11 // pred_check
        %p240 = pneg %p104
      $region22: #{unet_expansion_stack.6} parent=11 // pred_check_branch
        %242 = sbr.rel (%p240) target = $region24
      $region23: #{unet_expansion_stack.6} parent=11 // pred_region
        _
      $region24: #{unet_expansion_stack.6} parent=11 // pred_fallthru
        _
      // Predicated region
      $region25: #{unet_expansion_stack.6} parent=11 // pred_check
        %p243 = pneg %p125
      $region26: #{unet_expansion_stack.6} parent=11 // pred_check_branch
        %245 = sbr.rel (%p243) target = $region28
      $region27: #{unet_expansion_stack.6} parent=11 // pred_region
        _
      $region28: #{unet_expansion_stack.6} parent=11 // pred_fallthru
        _
      // Predicated region
      $region29: #{unet_expansion_stack.6} parent=11 // pred_check
        %p246 = pneg %p146
      $region30: #{unet_expansion_stack.6} parent=11 // pred_check_branch
        %248 = sbr.rel (%p246) target = $region32
      $region31: #{unet_expansion_stack.6} parent=11 // pred_region
        _
      $region32: #{unet_expansion_stack.6} parent=11 // pred_fallthru
        _
      // Predicated region
      $region33: #{unet_expansion_stack.6} parent=11 // pred_check
        %p249 = pneg %p167
      $region34: #{unet_expansion_stack.6} parent=11 // pred_check_branch
        %251 = sbr.rel (%p249) target = $region36
      $region35: #{unet_expansion_stack.6} parent=11 // pred_region
        _
      $region36: #{unet_expansion_stack.6} parent=11 // pred_fallthru
        _
    $region12: #{unet_expansion_stack.6} parent=5 // pred_fallthru
      _
    %p252 = scmp.lt.s32.totalorder %s15, 2
    // Predicated region
    $region37: #{unet_expansion_stack.6} parent=5 // pred_check
      %p253 = pneg %p252
    $region38: #{unet_expansion_stack.6} parent=5 // pred_check_branch
      %255 = sbr.rel (%p253) target = $region40
    $region39: #{unet_expansion_stack.6} parent=5 // pred_region
      // Predicated region
      $region41: #{unet_expansion_stack.6} parent=39 // pred_check
        %p256 = pneg %p35
      $region42: #{unet_expansion_stack.6} parent=39 // pred_check_branch
        %258 = sbr.rel (%p256) target = $region44
      $region43: #{unet_expansion_stack.6} parent=39 // pred_region
        %p259 = scmp.lt.s32.totalorder %s15, 1
        %s260 = scalar_select %p259, %s15, 1
        %s261 = smul.addr %s260, 10
        %s262 = smul.addr %s261, 4
        %s263 = scalar_lea.vmem %s0, %s262
      $region44: #{unet_expansion_stack.6} parent=39 // pred_fallthru
        _
    $region40: #{unet_expansion_stack.6} parent=5 // pred_fallthru
      _
    %p264 = scmp.le.s32.totalorder 1, %s15
    %p265 = scmp.lt.s32.totalorder %s15, 3
    %p266 = pnand %p264, %p265
    %p267 = pneg %p266
    // Predicated region
    $region45: #{unet_expansion_stack.6} parent=5 // pred_check
      _
    $region46: #{unet_expansion_stack.6} parent=5 // pred_check_branch
      %269 = sbr.rel (%p266) target = $region48
    $region47: #{unet_expansion_stack.6} parent=5 // pred_region
      %s270 = ssub.s32 %s15, 1
      %p271 = scmp.lt.s32.totalorder %s20, 1
      %s272 = scalar_select %p271, %s20, 1
      %s273 = smul.addr %s272, 10
      %s274 = smul.addr %s273, 4
      %s275 = scalar_lea.vmem %s0, %s274
      %p276 = pneg %p41
      %p277 = pneg %p38
      %p278 = pneg %p62
      %p279 = pneg %p59
      %p280 = pneg %p83
      %p281 = pneg %p80
      %p282 = pneg %p104
      %p283 = pneg %p101
      %p284 = pneg %p125
      %p285 = pneg %p122
      %p286 = pneg %p146
      %p287 = pneg %p143
      %p288 = pneg %p167
      %p289 = pneg %p164
      %p290 = pneg %p193
      %p291 = pneg %p190
      %p292 = scmp.lt.s32.totalorder %s20, 1
      %s293 = scalar_select %p292, %s20, 1
      %s294 = smul.addr %s293, 10
      %s295 = smul.addr %s294, 4
      %s296 = scalar_lea.vmem %s7, %s295
      %p297 = pneg %p219
      %p298 = pneg %p216
      %p299 = scmp.lt.s32.totalorder %s20, 1
      %s300 = scalar_select %p299, %s20, 1
      %s301 = smul.addr %s300, 4
      %s302 = scalar_lea.vmem %s8, %s301
      %p303 = scmp.lt.s32.totalorder %s20, 1
      %s304 = scalar_select %p303, %s20, 1
      %s305 = smul.addr %s304, 10
      %s306 = smul.addr %s305, 4
      %s307 = scalar_lea.vmem %s0, %s306
      %p308 = scmp.lt.s32.totalorder %s20, 1
      %s309 = scalar_select %p308, %s20, 1
      %s310 = smul.addr %s309, 10
      %s311 = smul.addr %s310, 4
      %s312 = scalar_lea.vmem %s7, %s311
      %p313 = scmp.lt.s32.totalorder %s20, 1
      %s314 = scalar_select %p313, %s20, 1
      %s315 = smul.addr %s314, 4
      %s316 = scalar_lea.vmem %s8, %s315
      %v317 = vld [vmem:[%s307] sm:$0xff]
      %v318 = vld [vmem:[%s307 + $0x8] sm:$0xff]
      %v319 = vld [vmem:[%s307 + $0x10] sm:$0xff]
      %v320 = vld [vmem:[%s307 + $0x18] sm:$0xff]
      %v321 = vld [vmem:[%s307 + $0x20] sm:$0xff]
      %v322 = vld [vmem:[%s1] sm:$0xf]
      %324 = vset.pattern.permute.xlu0 0
      %325 = vperm.xlu0 %324, %v322
      %v326 = vpop.permute.xlu0 %325
      %v328 = vunpack.c.l.s4 839922192
      %v329 = vunpack.c.0.s8 %v328
      %v330 = vperm.slane %v326, %v329
      %v332 = vmul.f32 %v317, %v330
      %v333 = vmul.f32 %v318, %v330
      %v334 = vmul.f32 %v319, %v330
      %v335 = vmul.f32 %v320, %v330
      %v336 = vmul.f32 %v321, %v330
      %v337 = vld [vmem:[%s2] sm:$0xf]
      %339 = vset.pattern.permute.xlu0 0
      %340 = vperm.xlu0 %339, %v337
      %v341 = vpop.permute.xlu0 %340
      %v343 = vunpack.c.l.s4 839922192
      %v344 = vunpack.c.0.s8 %v343
      %v345 = vperm.slane %v341, %v344
      %v347 = vadd.f32 %v332, %v345
      %v348 = vadd.f32 %v333, %v345
      %v349 = vadd.f32 %v334, %v345
      %v350 = vadd.f32 %v335, %v345
      %v351 = vadd.f32 %v336, %v345
      %v352 = vmax.f32 %v347, 0.0
      %v353 = vmax.f32 %v348, 0.0
      %v354 = vmax.f32 %v349, 0.0
      %v355 = vmax.f32 %v350, 0.0
      %v356 = vmax.f32 %v351, 0.0
      %v357 = vld [vmem:[%s3] sm:$0xff]
      %v358 = vld [vmem:[%s3 + $0x8] sm:$0x3]
      %v361 = vperm.slane %v357, 0
      %v362 = vperm.slane %v357, 1
      %v363 = vperm.slane %v357, 2
      %v364 = vperm.slane %v357, 3
      %v365 = vperm.slane %v357, 4
      %v366 = vperm.slane %v357, 5
      %v367 = vperm.slane %v357, 6
      %v368 = vperm.slane %v357, 7
      %v369 = vperm.slane %v358, 0
      %v370 = vperm.slane %v358, 1
      %v371 = vrot.slane %v362, 4
      %v372 = vrot.slane %v364, 4
      %v373 = vrot.slane %v366, 4
      %v374 = vrot.slane %v368, 4
      %v375 = vrot.slane %v370, 4
      %vm376 = vcmask 1043456
      %v377 = vsel %vm376, %v361, %v371
      %v378 = vsel %vm376, %v363, %v372
      %v379 = vsel %vm376, %v365, %v373
      %v380 = vsel %vm376, %v367, %v374
      %v381 = vsel %vm376, %v369, %v375
      %v387 = vmul.f32 %v352, %v377
      %v388 = vmul.f32 %v353, %v378
      %v389 = vmul.f32 %v354, %v379
      %v390 = vmul.f32 %v355, %v380
      %v391 = vmul.f32 %v356, %v381
      %397 = vst [vmem:[#allocation1] ss:$2 sm:$0xff] %v387
      %s398 = scalar_lea.vmem [#allocation1], 16
      %399 = vst [vmem:[%s398] ss:$2 sm:$0xff] %v388
      %s400 = scalar_lea.vmem [#allocation1], 32
      %401 = vst [vmem:[%s400] ss:$2 sm:$0xff] %v389
      %s402 = scalar_lea.vmem [#allocation1], 48
      %403 = vst [vmem:[%s402] ss:$2 sm:$0xff] %v390
      %v404 = vld.sshfl [vmem:[#allocation1] sm:$0xff pattern:$0x75316420]
      %v405 = vld.sshfl [vmem:[#allocation1 + $0x8] sm:$0xff pattern:$0x75316420]
      %v406 = vld.sshfl [vmem:[#allocation1 + $0x10] sm:$0xff pattern:$0x75316420]
      %v407 = vld.sshfl [vmem:[#allocation1 + $0x18] sm:$0xff pattern:$0x75316420]
      %v408 = vld.sshfl [vmem:[#allocation1 + $0x20] sm:$0xff pattern:$0x75316420]
      %v409 = vld.sshfl [vmem:[#allocation1 + $0x28] sm:$0xff pattern:$0x75316420]
      %v410 = vld.sshfl [vmem:[#allocation1 + $0x30] sm:$0xff pattern:$0x75316420]
      %v411 = vld.sshfl [vmem:[#allocation1 + $0x38] sm:$0xff pattern:$0x75316420]
      %412 = vst [vmem:[#allocation1] ss:$2 sm:$0xff] %v391
      %v413 = vld.sshfl [vmem:[#allocation1] sm:$0xff pattern:$0x75316420]
      %423 = vst [vmem:[#allocation2] sm:$0xf] %v404
      %424 = vst [vmem:[#allocation2 + $0x8] sm:$0xf] %v405
      %425 = vst [vmem:[#allocation2 + $0x10] sm:$0xf] %v406
      %426 = vst [vmem:[#allocation2 + $0x18] sm:$0xf] %v407
      %427 = vst [vmem:[#allocation2 + $0x20] sm:$0xf] %v408
      %428 = vst [vmem:[#allocation2 + $0x28] sm:$0xf] %v409
      %429 = vst [vmem:[#allocation2 + $0x30] sm:$0xf] %v410
      %430 = vst [vmem:[#allocation2 + $0x38] sm:$0xf] %v411
      %vm431 = vcmask 519168
      %432 = vst.msk [vmem:[#allocation2 + $0x40] sm:$0xf] %vm431, %v413
      %s433 = scalar_lea.vmem [#allocation1], 1
      %434 = vst [vmem:[%s433] ss:$2 sm:$0xff] %v387
      %s435 = scalar_lea.vmem [#allocation1], 17
      %436 = vst [vmem:[%s435] ss:$2 sm:$0xff] %v388
      %s437 = scalar_lea.vmem [#allocation1], 33
      %438 = vst [vmem:[%s437] ss:$2 sm:$0xff] %v389
      %s439 = scalar_lea.vmem [#allocation1], 49
      %440 = vst [vmem:[%s439] ss:$2 sm:$0xff] %v390
      %v441 = vld.sshfl [vmem:[#allocation1] sm:$0xff pattern:$0x75316420]
      %v442 = vld.sshfl [vmem:[#allocation1 + $0x8] sm:$0xff pattern:$0x75316420]
      %v443 = vld.sshfl [vmem:[#allocation1 + $0x10] sm:$0xff pattern:$0x75316420]
      %v444 = vld.sshfl [vmem:[#allocation1 + $0x18] sm:$0xff pattern:$0x75316420]
      %v445 = vld.sshfl [vmem:[#allocation1 + $0x20] sm:$0xff pattern:$0x75316420]
      %v446 = vld.sshfl [vmem:[#allocation1 + $0x28] sm:$0xff pattern:$0x75316420]
      %v447 = vld.sshfl [vmem:[#allocation1 + $0x30] sm:$0xff pattern:$0x75316420]
      %v448 = vld.sshfl [vmem:[#allocation1 + $0x38] sm:$0xff pattern:$0x75316420]
      %449 = vst [vmem:[%s433] ss:$2 sm:$0xff] %v391
      %v450 = vld.sshfl [vmem:[#allocation1] sm:$0xff pattern:$0x75316420]
      %451 = vrot.lane.b32.xlu0 %v441, 127
      %v452 = vpop.permute.xlu0 %451
      %453 = vrot.lane.b32.xlu0 %v442, 127
      %v454 = vpop.permute.xlu0 %453
      %455 = vrot.lane.b32.xlu0 %v443, 127
      %v456 = vpop.permute.xlu0 %455
      %457 = vrot.lane.b32.xlu0 %v444, 127
      %v458 = vpop.permute.xlu0 %457
      %459 = vrot.lane.b32.xlu0 %v445, 127
      %v460 = vpop.permute.xlu0 %459
      %461 = vrot.lane.b32.xlu0 %v446, 127
      %v462 = vpop.permute.xlu0 %461
      %463 = vrot.lane.b32.xlu0 %v447, 127
      %v464 = vpop.permute.xlu0 %463
      %465 = vrot.lane.b32.xlu0 %v448, 127
      %v466 = vpop.permute.xlu0 %465
      %467 = vrot.lane.b32.xlu0 %v450, 127
      %v468 = vpop.permute.xlu0 %467
      %vm469 = vcmask 1039360
      %v470 = vsel %vm469, %v452, %v454
      %v471 = vsel %vm469, %v454, %v456
      %v472 = vsel %vm469, %v456, %v458
      %v473 = vsel %vm469, %v458, %v460
      %v474 = vsel %vm469, %v460, %v462
      %v475 = vsel %vm469, %v462, %v464
      %v476 = vsel %vm469, %v464, %v466
      %v477 = vsel %vm469, %v466, %v468
      %487 = vst [vmem:[#allocation2] sm:$0xf0] %v470
      %488 = vst [vmem:[#allocation2 + $0x8] sm:$0xf0] %v471
      %489 = vst [vmem:[#allocation2 + $0x10] sm:$0xf0] %v472
      %490 = vst [vmem:[#allocation2 + $0x18] sm:$0xf0] %v473
      %491 = vst [vmem:[#allocation2 + $0x20] sm:$0xf0] %v474
      %492 = vst [vmem:[#allocation2 + $0x28] sm:$0xf0] %v475
      %493 = vst [vmem:[#allocation2 + $0x30] sm:$0xf0] %v476
      %494 = vst [vmem:[#allocation2 + $0x38] sm:$0xf0] %v477
      %vm495 = vcmask 523268
      %496 = vst.msk [vmem:[#allocation2 + $0x40] sm:$0xf0] %vm495, %v468
      %497 = vst [vmem:[#allocation1] ss:$2 sm:$0xff] %v387
      %s498 = scalar_lea.vmem [#allocation1], 16
      %499 = vst [vmem:[%s498] ss:$2 sm:$0xff] %v388
      %s500 = scalar_lea.vmem [#allocation1], 32
      %501 = vst [vmem:[%s500] ss:$2 sm:$0xff] %v389
      %s502 = scalar_lea.vmem [#allocation1], 48
      %503 = vst [vmem:[%s502] ss:$2 sm:$0xff] %v390
      %v504 = vld.sshfl [vmem:[#allocation1] sm:$0xff pattern:$0x75316420]
      %v505 = vld.sshfl [vmem:[#allocation1 + $0x8] sm:$0xff pattern:$0x75316420]
      %v506 = vld.sshfl [vmem:[#allocation1 + $0x10] sm:$0xff pattern:$0x75316420]
      %v507 = vld.sshfl [vmem:[#allocation1 + $0x18] sm:$0xff pattern:$0x75316420]
      %v508 = vld.sshfl [vmem:[#allocation1 + $0x20] sm:$0xff pattern:$0x75316420]
      %v509 = vld.sshfl [vmem:[#allocation1 + $0x28] sm:$0xff pattern:$0x75316420]
      %v510 = vld.sshfl [vmem:[#allocation1 + $0x30] sm:$0xff pattern:$0x75316420]
      %v511 = vld.sshfl [vmem:[#allocation1 + $0x38] sm:$0xff pattern:$0x75316420]
      %512 = vst [vmem:[#allocation1] ss:$2 sm:$0xff] %v391
      %v513 = vld.sshfl [vmem:[#allocation1] sm:$0xff pattern:$0x75316420]
      %514 = vrot.lane.b32.xlu0 %v504, 126
      %v515 = vpop.permute.xlu0 %514
      %516 = vrot.lane.b32.xlu0 %v505, 126
      %v517 = vpop.permute.xlu0 %516
      %518 = vrot.lane.b32.xlu0 %v506, 126
      %v519 = vpop.permute.xlu0 %518
      %520 = vrot.lane.b32.xlu0 %v507, 126
      %v521 = vpop.permute.xlu0 %520
      %522 = vrot.lane.b32.xlu0 %v508, 126
      %v523 = vpop.permute.xlu0 %522
      %524 = vrot.lane.b32.xlu0 %v509, 126
      %v525 = vpop.permute.xlu0 %524
      %526 = vrot.lane.b32.xlu0 %v510, 126
      %v527 = vpop.permute.xlu0 %526
      %528 = vrot.lane.b32.xlu0 %v511, 126
      %v529 = vpop.permute.xlu0 %528
      %530 = vrot.lane.b32.xlu0 %v513, 126
      %v531 = vpop.permute.xlu0 %530
      %vm532 = vcmask 1031168
      %v533 = vsel %vm532, %v515, %v517
      %v534 = vsel %vm532, %v517, %v519
      %v535 = vsel %vm532, %v519, %v521
      %v536 = vsel %vm532, %v521, %v523
      %v537 = vsel %vm532, %v523, %v525
      %v538 = vsel %vm532, %v525, %v527
      %v539 = vsel %vm532, %v527, %v529
      %v540 = vsel %vm532, %v529, %v531
      %550 = vst [vmem:[#allocation2 + $0x48] sm:$0xf] %v533
      %551 = vst [vmem:[#allocation2 + $0x50] sm:$0xf] %v534
      %552 = vst [vmem:[#allocation2 + $0x58] sm:$0xf] %v535
      %553 = vst [vmem:[#allocation2 + $0x60] sm:$0xf] %v536
      %554 = vst [vmem:[#allocation2 + $0x68] sm:$0xf] %v537
      %555 = vst [vmem:[#allocation2 + $0x70] sm:$0xf] %v538
      %556 = vst [vmem:[#allocation2 + $0x78] sm:$0xf] %v539
      %557 = vst [vmem:[#allocation2 + $0x80] sm:$0xf] %v540
      %558 = vst.msk [vmem:[#allocation2 + $0x88] sm:$0xf] %vm431, %v531
      %s559 = scalar_lea.vmem [#allocation1], 1
      %560 = vst [vmem:[%s559] ss:$2 sm:$0xff] %v387
      %s561 = scalar_lea.vmem [#allocation1], 17
      %562 = vst [vmem:[%s561] ss:$2 sm:$0xff] %v388
      %s563 = scalar_lea.vmem [#allocation1], 33
      %564 = vst [vmem:[%s563] ss:$2 sm:$0xff] %v389
      %s565 = scalar_lea.vmem [#allocation1], 49
      %566 = vst [vmem:[%s565] ss:$2 sm:$0xff] %v390
      %v567 = vld.sshfl [vmem:[#allocation1] sm:$0xff pattern:$0x75316420]
      %v568 = vld.sshfl [vmem:[#allocation1 + $0x8] sm:$0xff pattern:$0x75316420]
      %v569 = vld.sshfl [vmem:[#allocation1 + $0x10] sm:$0xff pattern:$0x75316420]
      %v570 = vld.sshfl [vmem:[#allocation1 + $0x18] sm:$0xff pattern:$0x75316420]
      %v571 = vld.sshfl [vmem:[#allocation1 + $0x20] sm:$0xff pattern:$0x75316420]
      %v572 = vld.sshfl [vmem:[#allocation1 + $0x28] sm:$0xff pattern:$0x75316420]
      %v573 = vld.sshfl [vmem:[#allocation1 + $0x30] sm:$0xff pattern:$0x75316420]
      %v574 = vld.sshfl [vmem:[#allocation1 + $0x38] sm:$0xff pattern:$0x75316420]
      %575 = vst [vmem:[%s559] ss:$2 sm:$0xff] %v391
      %v576 = vld.sshfl [vmem:[#allocation1] sm:$0xff pattern:$0x75316420]
      %577 = vrot.lane.b32.xlu0 %v567, 94
      %v578 = vpop.permute.xlu0 %577
      %579 = vrot.lane.b32.xlu0 %v568, 94
      %v580 = vpop.permute.xlu0 %579
      %581 = vrot.lane.b32.xlu0 %v569, 94
      %v582 = vpop.permute.xlu0 %581
      %583 = vrot.lane.b32.xlu0 %v570, 94
      %v584 = vpop.permute.xlu0 %583
      %585 = vrot.lane.b32.xlu0 %v571, 94
      %v586 = vpop.permute.xlu0 %585
      %587 = vrot.lane.b32.xlu0 %v572, 94
      %v588 = vpop.permute.xlu0 %587
      %589 = vrot.lane.b32.xlu0 %v573, 94
      %v590 = vpop.permute.xlu0 %589
      %591 = vrot.lane.b32.xlu0 %v574, 94
      %v592 = vpop.permute.xlu0 %591
      %593 = vrot.lane.b32.xlu0 %v576, 94
      %v594 = vpop.permute.xlu0 %593
      %vm595 = vcmask 769024
      %v596 = vsel %vm595, %v578, %v580
      %v597 = vsel %vm595, %v580, %v582
      %v598 = vsel %vm595, %v582, %v584
      %v599 = vsel %vm595, %v584, %v586
      %v600 = vsel %vm595, %v586, %v588
      %v601 = vsel %vm595, %v588, %v590
      %v602 = vsel %vm595, %v590, %v592
      %v603 = vsel %vm595, %v592, %v594
      %613 = vst [vmem:[#allocation2 + $0x48] sm:$0xf0] %v596
      %614 = vst [vmem:[#allocation2 + $0x50] sm:$0xf0] %v597
      %615 = vst [vmem:[#allocation2 + $0x58] sm:$0xf0] %v598
      %616 = vst [vmem:[#allocation2 + $0x60] sm:$0xf0] %v599
      %617 = vst [vmem:[#allocation2 + $0x68] sm:$0xf0] %v600
      %618 = vst [vmem:[#allocation2 + $0x70] sm:$0xf0] %v601
      %619 = vst [vmem:[#allocation2 + $0x78] sm:$0xf0] %v602
      %620 = vst [vmem:[#allocation2 + $0x80] sm:$0xf0] %v603
      %621 = vst.msk [vmem:[#allocation2 + $0x88] sm:$0xf0] %vm495, %v594
      %622 = vst [vmem:[#allocation1] ss:$2 sm:$0xff] %v387
      %s623 = scalar_lea.vmem [#allocation1], 16
      %624 = vst [vmem:[%s623] ss:$2 sm:$0xff] %v388
      %s625 = scalar_lea.vmem [#allocation1], 32
      %626 = vst [vmem:[%s625] ss:$2 sm:$0xff] %v389
      %s627 = scalar_lea.vmem [#allocation1], 48
      %628 = vst [vmem:[%s627] ss:$2 sm:$0xff] %v390
      %v629 = vld.sshfl [vmem:[#allocation1] sm:$0xff pattern:$0x75316420]
      %v630 = vld.sshfl [vmem:[#allocation1 + $0x8] sm:$0xff pattern:$0x75316420]
      %v631 = vld.sshfl [vmem:[#allocation1 + $0x10] sm:$0xff pattern:$0x75316420]
      %v632 = vld.sshfl [vmem:[#allocation1 + $0x18] sm:$0xff pattern:$0x75316420]
      %v633 = vld.sshfl [vmem:[#allocation1 + $0x20] sm:$0xff pattern:$0x75316420]
      %v634 = vld.sshfl [vmem:[#allocation1 + $0x28] sm:$0xff pattern:$0x75316420]
      %v635 = vld.sshfl [vmem:[#allocation1 + $0x30] sm:$0xff pattern:$0x75316420]
      %v636 = vld.sshfl [vmem:[#allocation1 + $0x38] sm:$0xff pattern:$0x75316420]
      %637 = vst [vmem:[#allocation1] ss:$2 sm:$0xff] %v391
      %v638 = vld.sshfl [vmem:[#allocation1] sm:$0xff pattern:$0x75316420]
      %639 = vrot.lane.b32.xlu0 %v629, 93
      %v640 = vpop.permute.xlu0 %639
      %641 = vrot.lane.b32.xlu0 %v630, 93
      %v642 = vpop.permute.xlu0 %641
      %643 = vrot.lane.b32.xlu0 %v631, 93
      %v644 = vpop.permute.xlu0 %643
      %645 = vrot.lane.b32.xlu0 %v632, 93
      %v646 = vpop.permute.xlu0 %645
      %647 = vrot.lane.b32.xlu0 %v633, 93
      %v648 = vpop.permute.xlu0 %647
      %649 = vrot.lane.b32.xlu0 %v634, 93
      %v650 = vpop.permute.xlu0 %649
      %651 = vrot.lane.b32.xlu0 %v635, 93
      %v652 = vpop.permute.xlu0 %651
      %653 = vrot.lane.b32.xlu0 %v636, 93
      %v654 = vpop.permute.xlu0 %653
      %655 = vrot.lane.b32.xlu0 %v638, 93
      %v656 = vpop.permute.xlu0 %655
      %vm657 = vcmask 760832
      %v658 = vsel %vm657, %v640, %v642
      %v659 = vsel %vm657, %v642, %v644
      %v660 = vsel %vm657, %v644, %v646
      %v661 = vsel %vm657, %v646, %v648
      %v662 = vsel %vm657, %v648, %v650
      %v663 = vsel %vm657, %v650, %v652
      %v664 = vsel %vm657, %v652, %v654
      %v665 = vsel %vm657, %v654, %v656
      %675 = vst [vmem:[#allocation2 + $0x90] sm:$0xf] %v658
      %676 = vst [vmem:[#allocation2 + $0x98] sm:$0xf] %v659
      %677 = vst [vmem:[#allocation2 + $0xa0] sm:$0xf] %v660
      %678 = vst [vmem:[#allocation2 + $0xa8] sm:$0xf] %v661
      %679 = vst [vmem:[#allocation2 + $0xb0] sm:$0xf] %v662
      %680 = vst [vmem:[#allocation2 + $0xb8] sm:$0xf] %v663
      %681 = vst [vmem:[#allocation2 + $0xc0] sm:$0xf] %v664
      %682 = vst [vmem:[#allocation2 + $0xc8] sm:$0xf] %v665
      %683 = vst.msk [vmem:[#allocation2 + $0xd0] sm:$0xf] %vm431, %v656
      %s684 = scalar_lea.vmem [#allocation1], 1
      %685 = vst [vmem:[%s684] ss:$2 sm:$0xff] %v387
      %s686 = scalar_lea.vmem [#allocation1], 17
      %687 = vst [vmem:[%s686] ss:$2 sm:$0xff] %v388
      %s688 = scalar_lea.vmem [#allocation1], 33
      %689 = vst [vmem:[%s688] ss:$2 sm:$0xff] %v389
      %s690 = scalar_lea.vmem [#allocation1], 49
      %691 = vst [vmem:[%s690] ss:$2 sm:$0xff] %v390
      %v692 = vld.sshfl [vmem:[#allocation1] sm:$0xff pattern:$0x75316420]
      %v693 = vld.sshfl [vmem:[#allocation1 + $0x8] sm:$0xff pattern:$0x75316420]
      %v694 = vld.sshfl [vmem:[#allocation1 + $0x10] sm:$0xff pattern:$0x75316420]
      %v695 = vld.sshfl [vmem:[#allocation1 + $0x18] sm:$0xff pattern:$0x75316420]
      %v696 = vld.sshfl [vmem:[#allocation1 + $0x20] sm:$0xff pattern:$0x75316420]
      %v697 = vld.sshfl [vmem:[#allocation1 + $0x28] sm:$0xff pattern:$0x75316420]
      %v698 = vld.sshfl [vmem:[#allocation1 + $0x30] sm:$0xff pattern:$0x75316420]
      %v699 = vld.sshfl [vmem:[#allocation1 + $0x38] sm:$0xff pattern:$0x75316420]
      %700 = vst [vmem:[%s684] ss:$2 sm:$0xff] %v391
      %v701 = vld.sshfl [vmem:[#allocation1] sm:$0xff pattern:$0x75316420]
      %702 = vrot.lane.b32.xlu0 %v692, 92
      %v703 = vpop.permute.xlu0 %702
      %704 = vrot.lane.b32.xlu0 %v693, 92
      %v705 = vpop.permute.xlu0 %704
      %706 = vrot.lane.b32.xlu0 %v694, 92
      %v707 = vpop.permute.xlu0 %706
      %708 = vrot.lane.b32.xlu0 %v695, 92
      %v709 = vpop.permute.xlu0 %708
      %710 = vrot.lane.b32.xlu0 %v696, 92
      %v711 = vpop.permute.xlu0 %710
      %712 = vrot.lane.b32.xlu0 %v697, 92
      %v713 = vpop.permute.xlu0 %712
      %714 = vrot.lane.b32.xlu0 %v698, 92
      %v715 = vpop.permute.xlu0 %714
      %716 = vrot.lane.b32.xlu0 %v699, 92
      %v717 = vpop.permute.xlu0 %716
      %718 = vrot.lane.b32.xlu0 %v701, 92
      %v719 = vpop.permute.xlu0 %718
      %vm720 = vcmask 752640
      %v721 = vsel %vm720, %v703, %v705
      %v722 = vsel %vm720, %v705, %v707
      %v723 = vsel %vm720, %v707, %v709
      %v724 = vsel %vm720, %v709, %v711
      %v725 = vsel %vm720, %v711, %v713
      %v726 = vsel %vm720, %v713, %v715
      %v727 = vsel %vm720, %v715, %v717
      %v728 = vsel %vm720, %v717, %v719
      %738 = vst [vmem:[#allocation2 + $0x90] sm:$0xf0] %v721
      %739 = vst [vmem:[#allocation2 + $0x98] sm:$0xf0] %v722
      %740 = vst [vmem:[#allocation2 + $0xa0] sm:$0xf0] %v723
      %741 = vst [vmem:[#allocation2 + $0xa8] sm:$0xf0] %v724
      %742 = vst [vmem:[#allocation2 + $0xb0] sm:$0xf0] %v725
      %743 = vst [vmem:[#allocation2 + $0xb8] sm:$0xf0] %v726
      %744 = vst [vmem:[#allocation2 + $0xc0] sm:$0xf0] %v727
      %745 = vst [vmem:[#allocation2 + $0xc8] sm:$0xf0] %v728
      %746 = vst.msk [vmem:[#allocation2 + $0xd0] sm:$0xf0] %vm495, %v719
      %747 = vst [vmem:[#allocation1] ss:$2 sm:$0xff] %v387
      %s748 = scalar_lea.vmem [#allocation1], 16
      %749 = vst [vmem:[%s748] ss:$2 sm:$0xff] %v388
      %s750 = scalar_lea.vmem [#allocation1], 32
      %751 = vst [vmem:[%s750] ss:$2 sm:$0xff] %v389
      %s752 = scalar_lea.vmem [#allocation1], 48
      %753 = vst [vmem:[%s752] ss:$2 sm:$0xff] %v390
      %v754 = vld.sshfl [vmem:[#allocation1] sm:$0xff pattern:$0x75316420]
      %v755 = vld.sshfl [vmem:[#allocation1 + $0x8] sm:$0xff pattern:$0x75316420]
      %v756 = vld.sshfl [vmem:[#allocation1 + $0x10] sm:$0xff pattern:$0x75316420]
      %v757 = vld.sshfl [vmem:[#allocation1 + $0x18] sm:$0xff pattern:$0x75316420]
      %v758 = vld.sshfl [vmem:[#allocation1 + $0x20] sm:$0xff pattern:$0x75316420]
      %v759 = vld.sshfl [vmem:[#allocation1 + $0x28] sm:$0xff pattern:$0x75316420]
      %v760 = vld.sshfl [vmem:[#allocation1 + $0x30] sm:$0xff pattern:$0x75316420]
      %v761 = vld.sshfl [vmem:[#allocation1 + $0x38] sm:$0xff pattern:$0x75316420]
      %762 = vst [vmem:[#allocation1] ss:$2 sm:$0xff] %v391
      %v763 = vld.sshfl [vmem:[#allocation1] sm:$0xff pattern:$0x75316420]
      %v764 = vld.sshfl [vmem:[#allocation1 + $0x8] sm:$0xff pattern:$0x75316420]
      %765 = vrot.lane.b32.xlu0 %v754, 60
      %v766 = vpop.permute.xlu0 %765
      %767 = vrot.lane.b32.xlu0 %v755, 60
      %v768 = vpop.permute.xlu0 %767
      %769 = vrot.lane.b32.xlu0 %v756, 60
      %v770 = vpop.permute.xlu0 %769
      %771 = vrot.lane.b32.xlu0 %v757, 60
      %v772 = vpop.permute.xlu0 %771
      %773 = vrot.lane.b32.xlu0 %v758, 60
      %v774 = vpop.permute.xlu0 %773
      %775 = vrot.lane.b32.xlu0 %v759, 60
      %v776 = vpop.permute.xlu0 %775
      %777 = vrot.lane.b32.xlu0 %v760, 60
      %v778 = vpop.permute.xlu0 %777
      %779 = vrot.lane.b32.xlu0 %v761, 60
      %v780 = vpop.permute.xlu0 %779
      %781 = vrot.lane.b32.xlu0 %v763, 60
      %v782 = vpop.permute.xlu0 %781
      %783 = vrot.lane.b32.xlu0 %v764, 60
      %v784 = vpop.permute.xlu0 %783
      %vm785 = vcmask 490496
      %v786 = vsel %vm785, %v766, %v768
      %v787 = vsel %vm785, %v768, %v770
      %v788 = vsel %vm785, %v770, %v772
      %v789 = vsel %vm785, %v772, %v774
      %v790 = vsel %vm785, %v774, %v776
      %v791 = vsel %vm785, %v776, %v778
      %v792 = vsel %vm785, %v778, %v780
      %v793 = vsel %vm785, %v780, %v782
      %v794 = vsel %vm785, %v782, %v784
      %804 = vst [vmem:[#allocation2 + $0xd8] sm:$0xf] %v786
      %805 = vst [vmem:[#allocation2 + $0xe0] sm:$0xf] %v787
      %806 = vst [vmem:[#allocation2 + $0xe8] sm:$0xf] %v788
      %807 = vst [vmem:[#allocation2 + $0xf0] sm:$0xf] %v789
      %808 = vst [vmem:[#allocation2 + $0xf8] sm:$0xf] %v790
      %809 = vst [vmem:[#allocation2 + $0x100] sm:$0xf] %v791
      %810 = vst [vmem:[#allocation2 + $0x108] sm:$0xf] %v792
      %811 = vst [vmem:[#allocation2 + $0x110] sm:$0xf] %v793
      %812 = vst.msk [vmem:[#allocation2 + $0x118] sm:$0xf] %vm431, %v794
      %s813 = scalar_lea.vmem [#allocation1], 1
      %814 = vst [vmem:[%s813] ss:$2 sm:$0xff] %v387
      %s815 = scalar_lea.vmem [#allocation1], 17
      %816 = vst [vmem:[%s815] ss:$2 sm:$0xff] %v388
      %s817 = scalar_lea.vmem [#allocation1], 33
      %818 = vst [vmem:[%s817] ss:$2 sm:$0xff] %v389
      %s819 = scalar_lea.vmem [#allocation1], 49
      %820 = vst [vmem:[%s819] ss:$2 sm:$0xff] %v390
      %v821 = vld.sshfl [vmem:[#allocation1] sm:$0xff pattern:$0x75316420]
      %v822 = vld.sshfl [vmem:[#allocation1 + $0x8] sm:$0xff pattern:$0x75316420]
      %v823 = vld.sshfl [vmem:[#allocation1 + $0x10] sm:$0xff pattern:$0x75316420]
      %v824 = vld.sshfl [vmem:[#allocation1 + $0x18] sm:$0xff pattern:$0x75316420]
      %v825 = vld.sshfl [vmem:[#allocation1 + $0x20] sm:$0xff pattern:$0x75316420]
      %v826 = vld.sshfl [vmem:[#allocation1 + $0x28] sm:$0xff pattern:$0x75316420]
      %v827 = vld.sshfl [vmem:[#allocation1 + $0x30] sm:$0xff pattern:$0x75316420]
      %v828 = vld.sshfl [vmem:[#allocation1 + $0x38] sm:$0xff pattern:$0x75316420]
      %829 = vst [vmem:[%s813] ss:$2 sm:$0xff] %v391
      %v830 = vld.sshfl [vmem:[#allocation1] sm:$0xff pattern:$0x75316420]
      %v831 = vld.sshfl [vmem:[#allocation1 + $0x8] sm:$0xff pattern:$0x75316420]
      %832 = vrot.lane.b32.xlu0 %v821, 59
      %v833 = vpop.permute.xlu0 %832
      %834 = vrot.lane.b32.xlu0 %v822, 59
      %v835 = vpop.permute.xlu0 %834
      %836 = vrot.lane.b32.xlu0 %v823, 59
      %v837 = vpop.permute.xlu0 %836
      %838 = vrot.lane.b32.xlu0 %v824, 59
      %v839 = vpop.permute.xlu0 %838
      %840 = vrot.lane.b32.xlu0 %v825, 59
      %v841 = vpop.permute.xlu0 %840
      %842 = vrot.lane.b32.xlu0 %v826, 59
      %v843 = vpop.permute.xlu0 %842
      %844 = vrot.lane.b32.xlu0 %v827, 59
      %v845 = vpop.permute.xlu0 %844
      %846 = vrot.lane.b32.xlu0 %v828, 59
      %v847 = vpop.permute.xlu0 %846
      %848 = vrot.lane.b32.xlu0 %v830, 59
      %v849 = vpop.permute.xlu0 %848
      %850 = vrot.lane.b32.xlu0 %v831, 59
      %v851 = vpop.permute.xlu0 %850
      %vm852 = vcmask 482304
      %v853 = vsel %vm852, %v833, %v835
      %v854 = vsel %vm852, %v835, %v837
      %v855 = vsel %vm852, %v837, %v839
      %v856 = vsel %vm852, %v839, %v841
      %v857 = vsel %vm852, %v841, %v843
      %v858 = vsel %vm852, %v843, %v845
      %v859 = vsel %vm852, %v845, %v847
      %v860 = vsel %vm852, %v847, %v849
      %v861 = vsel %vm852, %v849, %v851
      %871 = vst [vmem:[#allocation2 + $0xd8] sm:$0xf0] %v853
      %872 = vst [vmem:[#allocation2 + $0xe0] sm:$0xf0] %v854
      %873 = vst [vmem:[#allocation2 + $0xe8] sm:$0xf0] %v855
      %874 = vst [vmem:[#allocation2 + $0xf0] sm:$0xf0] %v856
      %875 = vst [vmem:[#allocation2 + $0xf8] sm:$0xf0] %v857
      %876 = vst [vmem:[#allocation2 + $0x100] sm:$0xf0] %v858
      %877 = vst [vmem:[#allocation2 + $0x108] sm:$0xf0] %v859
      %878 = vst [vmem:[#allocation2 + $0x110] sm:$0xf0] %v860
      %879 = vst.msk [vmem:[#allocation2 + $0x118] sm:$0xf0] %vm495, %v861
      %880 = vst [vmem:[#allocation1] ss:$2 sm:$0xff] %v387
      %s881 = scalar_lea.vmem [#allocation1], 16
      %882 = vst [vmem:[%s881] ss:$2 sm:$0xff] %v388
      %s883 = scalar_lea.vmem [#allocation1], 32
      %884 = vst [vmem:[%s883] ss:$2 sm:$0xff] %v389
      %s885 = scalar_lea.vmem [#allocation1], 48
      %886 = vst [vmem:[%s885] ss:$2 sm:$0xff] %v390
      %v887 = vld.sshfl [vmem:[#allocation1] sm:$0xff pattern:$0x75316420]
      %v888 = vld.sshfl [vmem:[#allocation1 + $0x8] sm:$0xff pattern:$0x75316420]
      %v889 = vld.sshfl [vmem:[#allocation1 + $0x10] sm:$0xff pattern:$0x75316420]
      %v890 = vld.sshfl [vmem:[#allocation1 + $0x18] sm:$0xff pattern:$0x75316420]
      %v891 = vld.sshfl [vmem:[#allocation1 + $0x20] sm:$0xff pattern:$0x75316420]
      %v892 = vld.sshfl [vmem:[#allocation1 + $0x28] sm:$0xff pattern:$0x75316420]
      %v893 = vld.sshfl [vmem:[#allocation1 + $0x30] sm:$0xff pattern:$0x75316420]
      %v894 = vld.sshfl [vmem:[#allocation1 + $0x38] sm:$0xff pattern:$0x75316420]
      %895 = vst [vmem:[#allocation1] ss:$2 sm:$0xff] %v391
      %v896 = vld.sshfl [vmem:[#allocation1] sm:$0xff pattern:$0x75316420]
      %v897 = vld.sshfl [vmem:[#allocation1 + $0x8] sm:$0xff pattern:$0x75316420]
      %898 = vrot.lane.b32.xlu0 %v887, 58
      %v899 = vpop.permute.xlu0 %898
      %900 = vrot.lane.b32.xlu0 %v888, 58
      %v901 = vpop.permute.xlu0 %900
      %902 = vrot.lane.b32.xlu0 %v889, 58
      %v903 = vpop.permute.xlu0 %902
      %904 = vrot.lane.b32.xlu0 %v890, 58
      %v905 = vpop.permute.xlu0 %904
      %906 = vrot.lane.b32.xlu0 %v891, 58
      %v907 = vpop.permute.xlu0 %906
      %908 = vrot.lane.b32.xlu0 %v892, 58
      %v909 = vpop.permute.xlu0 %908
      %910 = vrot.lane.b32.xlu0 %v893, 58
      %v911 = vpop.permute.xlu0 %910
      %912 = vrot.lane.b32.xlu0 %v894, 58
      %v913 = vpop.permute.xlu0 %912
      %914 = vrot.lane.b32.xlu0 %v896, 58
      %v915 = vpop.permute.xlu0 %914
      %916 = vrot.lane.b32.xlu0 %v897, 58
      %v917 = vpop.permute.xlu0 %916
      %vm918 = vcmask 474112
      %v919 = vsel %vm918, %v899, %v901
      %v920 = vsel %vm918, %v901, %v903
      %v921 = vsel %vm918, %v903, %v905
      %v922 = vsel %vm918, %v905, %v907
      %v923 = vsel %vm918, %v907, %v909
      %v924 = vsel %vm918, %v909, %v911
      %v925 = vsel %vm918, %v911, %v913
      %v926 = vsel %vm918, %v913, %v915
      %v927 = vsel %vm918, %v915, %v917
      %937 = vst [vmem:[#allocation2 + $0x120] sm:$0xf] %v919
      %938 = vst [vmem:[#allocation2 + $0x128] sm:$0xf] %v920
      %939 = vst [vmem:[#allocation2 + $0x130] sm:$0xf] %v921
      %940 = vst [vmem:[#allocation2 + $0x138] sm:$0xf] %v922
      %941 = vst [vmem:[#allocation2 + $0x140] sm:$0xf] %v923
      %942 = vst [vmem:[#allocation2 + $0x148] sm:$0xf] %v924
      %943 = vst [vmem:[#allocation2 + $0x150] sm:$0xf] %v925
      %944 = vst [vmem:[#allocation2 + $0x158] sm:$0xf] %v926
      %945 = vst.msk [vmem:[#allocation2 + $0x160] sm:$0xf] %vm431, %v927
      %v946 = vld [vmem:[%s4] sm:$0xf]
      %v947 = vld [vmem:[#allocation2] sm:$0xff]
      %v948 = vld [vmem:[#allocation2 + $0x8] sm:$0xff]
      %v949 = vld [vmem:[#allocation2 + $0x10] sm:$0xff]
      %v950 = vld [vmem:[#allocation2 + $0x18] sm:$0xff]
      %v951 = vld [vmem:[#allocation2 + $0x20] sm:$0xff]
      %v952 = vld [vmem:[#allocation2 + $0x28] sm:$0xff]
      %v953 = vld [vmem:[#allocation2 + $0x30] sm:$0xff]
      %v954 = vld [vmem:[#allocation2 + $0x38] sm:$0xff]
      %v955 = vld [vmem:[#allocation2 + $0x40] sm:$0xff]
      %v956 = vld [vmem:[#allocation2 + $0x48] sm:$0xff]
      %v957 = vld [vmem:[#allocation2 + $0x50] sm:$0xff]
      %v958 = vld [vmem:[#allocation2 + $0x58] sm:$0xff]
      %v959 = vld [vmem:[#allocation2 + $0x60] sm:$0xff]
      %v960 = vld [vmem:[#allocation2 + $0x68] sm:$0xff]
      %v961 = vld [vmem:[#allocation2 + $0x70] sm:$0xff]
      %v962 = vld [vmem:[#allocation2 + $0x78] sm:$0xff]
      %v963 = vld [vmem:[#allocation2 + $0x80] sm:$0xff]
      %v964 = vld [vmem:[#allocation2 + $0x88] sm:$0xff]
      %v965 = vld [vmem:[#allocation2 + $0x90] sm:$0xff]
      %v966 = vld [vmem:[#allocation2 + $0x98] sm:$0xff]
      %v967 = vld [vmem:[#allocation2 + $0xa0] sm:$0xff]
      %v968 = vld [vmem:[#allocation2 + $0xa8] sm:$0xff]
      %v969 = vld [vmem:[#allocation2 + $0xb0] sm:$0xff]
      %v970 = vld [vmem:[#allocation2 + $0xb8] sm:$0xff]
      %v971 = vld [vmem:[#allocation2 + $0xc0] sm:$0xff]
      %v972 = vld [vmem:[#allocation2 + $0xc8] sm:$0xff]
      %v973 = vld [vmem:[#allocation2 + $0xd0] sm:$0xff]
      %v974 = vld [vmem:[#allocation2 + $0xd8] sm:$0xff]
      %v975 = vld [vmem:[#allocation2 + $0xe0] sm:$0xff]
      %v976 = vld [vmem:[#allocation2 + $0xe8] sm:$0xff]
      %v977 = vld [vmem:[#allocation2 + $0xf0] sm:$0xff]
      %v978 = vld [vmem:[#allocation2 + $0xf8] sm:$0xff]
      %v979 = vld [vmem:[#allocation2 + $0x100] sm:$0xff]
      %v980 = vld [vmem:[#allocation2 + $0x108] sm:$0xff]
      %v981 = vld [vmem:[#allocation2 + $0x110] sm:$0xff]
      %v982 = vld [vmem:[#allocation2 + $0x118] sm:$0xff]
      %v983 = vld [vmem:[#allocation2 + $0x120] sm:$0xf]
      %v984 = vld [vmem:[#allocation2 + $0x128] sm:$0xf]
      %v985 = vld [vmem:[#allocation2 + $0x130] sm:$0xf]
      %v986 = vld [vmem:[#allocation2 + $0x138] sm:$0xf]
      %v987 = vld [vmem:[#allocation2 + $0x140] sm:$0xf]
      %v988 = vld [vmem:[#allocation2 + $0x148] sm:$0xf]
      %v989 = vld [vmem:[#allocation2 + $0x150] sm:$0xf]
      %v990 = vld [vmem:[#allocation2 + $0x158] sm:$0xf]
      %v991 = vld [vmem:[#allocation2 + $0x160] sm:$0xf]
      %v992 = vld [vmem:[%s5] sm:$0xf]
      %994 = vset.pattern.permute.xlu0 0
      %995 = vperm.xlu0 %994, %v992
      %v996 = vpop.permute.xlu0 %995
      %vm998 = vcmask 293888
      %v1000 = vsel %vm998, %v946, 0
      %v1003 = vsel %vm376, %v983, 0
      %v1006 = vsel %vm376, %v984, 0
      %v1009 = vsel %vm376, %v985, 0
      %v1012 = vsel %vm376, %v986, 0
      %v1015 = vsel %vm376, %v987, 0
      %v1018 = vsel %vm376, %v988, 0
      %v1021 = vsel %vm376, %v989, 0
      %v1024 = vsel %vm376, %v990, 0
      %v1027 = vsel %vm376, %v991, 0
      %1029 = vmatpush.msra.mxu0 0.0
      %1030 = vmatpush.msra.mxu0 0.0
      %1031 = vmatpush.msra.mxu0 0.0
      %1032 = vmatpush.msra.mxu0 0.0
      %1033 = vmatpush.msra.mxu0 0.0
      %1034 = vmatpush.msra.mxu0 0.0
      %1035 = vmatpush.msra.mxu0 0.0
      %1036 = vmatpush.msra.mxu0 0.0
      %1037 = vmatpush.msra.mxu0 0.0
      %1038 = vmatpush.msra.mxu0 0.0
      %1039 = vmatpush.msra.mxu0 0.0
      %1040 = vmatpush.msra.mxu0 %v1003
      %1041 = vmatpush.msra.mxu0 %v974
      %1042 = vmatpush.msra.mxu0 %v965
      %1043 = vmatpush.msra.mxu0 %v956
      %1044 = vmatpush.msra.mxu0 %v947
      %1045 = vmatmul.f32.gmra.mxu0 %v1000
      %v1046 = vpop.f32.mrf.mxu0
      %v1047 = vadd.f32 %v996, %v1046
      %1048 = vdwg.mxu0
      %1049 = vmatpush.msra.mxu0 0.0
      %1050 = vmatpush.msra.mxu0 0.0
      %1051 = vmatpush.msra.mxu0 0.0
      %1052 = vmatpush.msra.mxu0 0.0
      %1053 = vmatpush.msra.mxu0 0.0
      %1054 = vmatpush.msra.mxu0 0.0
      %1055 = vmatpush.msra.mxu0 0.0
      %1056 = vmatpush.msra.mxu0 0.0
      %1057 = vmatpush.msra.mxu0 0.0
      %1058 = vmatpush.msra.mxu0 0.0
      %1059 = vmatpush.msra.mxu0 0.0
      %1060 = vmatpush.msra.mxu0 %v1006
      %1061 = vmatpush.msra.mxu0 %v975
      %1062 = vmatpush.msra.mxu0 %v966
      %1063 = vmatpush.msra.mxu0 %v957
      %1064 = vmatpush.msra.mxu0 %v948
      %1065 = vmatmul.f32.gmra.mxu0 %v1000
      %v1066 = vpop.f32.mrf.mxu0
      %v1067 = vadd.f32 %v996, %v1066
      %1068 = vdwg.mxu0
      %1069 = vmatpush.msra.mxu0 0.0
      %1070 = vmatpush.msra.mxu0 0.0
      %1071 = vmatpush.msra.mxu0 0.0
      %1072 = vmatpush.msra.mxu0 0.0
      %1073 = vmatpush.msra.mxu0 0.0
      %1074 = vmatpush.msra.mxu0 0.0
      %1075 = vmatpush.msra.mxu0 0.0
      %1076 = vmatpush.msra.mxu0 0.0
      %1077 = vmatpush.msra.mxu0 0.0
      %1078 = vmatpush.msra.mxu0 0.0
      %1079 = vmatpush.msra.mxu0 0.0
      %1080 = vmatpush.msra.mxu0 %v1009
      %1081 = vmatpush.msra.mxu0 %v976
      %1082 = vmatpush.msra.mxu0 %v967
      %1083 = vmatpush.msra.mxu0 %v958
      %1084 = vmatpush.msra.mxu0 %v949
      %1085 = vmatmul.f32.gmra.mxu0 %v1000
      %v1086 = vpop.f32.mrf.mxu0
      %v1087 = vadd.f32 %v996, %v1086
      %1088 = vdwg.mxu0
      %1089 = vmatpush.msra.mxu0 0.0
      %1090 = vmatpush.msra.mxu0 0.0
      %1091 = vmatpush.msra.mxu0 0.0
      %1092 = vmatpush.msra.mxu0 0.0
      %1093 = vmatpush.msra.mxu0 0.0
      %1094 = vmatpush.msra.mxu0 0.0
      %1095 = vmatpush.msra.mxu0 0.0
      %1096 = vmatpush.msra.mxu0 0.0
      %1097 = vmatpush.msra.mxu0 0.0
      %1098 = vmatpush.msra.mxu0 0.0
      %1099 = vmatpush.msra.mxu0 0.0
      %1100 = vmatpush.msra.mxu0 %v1012
      %1101 = vmatpush.msra.mxu0 %v977
      %1102 = vmatpush.msra.mxu0 %v968
      %1103 = vmatpush.msra.mxu0 %v959
      %1104 = vmatpush.msra.mxu0 %v950
      %1105 = vmatmul.f32.gmra.mxu0 %v1000
      %v1106 = vpop.f32.mrf.mxu0
      %v1107 = vadd.f32 %v996, %v1106
      %1108 = vdwg.mxu0
      %1109 = vmatpush.msra.mxu0 0.0
      %1110 = vmatpush.msra.mxu0 0.0
      %1111 = vmatpush.msra.mxu0 0.0
      %1112 = vmatpush.msra.mxu0 0.0
      %1113 = vmatpush.msra.mxu0 0.0
      %1114 = vmatpush.msra.mxu0 0.0
      %1115 = vmatpush.msra.mxu0 0.0
      %1116 = vmatpush.msra.mxu0 0.0
      %1117 = vmatpush.msra.mxu0 0.0
      %1118 = vmatpush.msra.mxu0 0.0
      %1119 = vmatpush.msra.mxu0 0.0
      %1120 = vmatpush.msra.mxu0 %v1015
      %1121 = vmatpush.msra.mxu0 %v978
      %1122 = vmatpush.msra.mxu0 %v969
      %1123 = vmatpush.msra.mxu0 %v960
      %1124 = vmatpush.msra.mxu0 %v951
      %1125 = vmatmul.f32.gmra.mxu0 %v1000
      %v1126 = vpop.f32.mrf.mxu0
      %v1127 = vadd.f32 %v996, %v1126
      %1128 = vdwg.mxu0
      %1129 = vmatpush.msra.mxu0 0.0
      %1130 = vmatpush.msra.mxu0 0.0
      %1131 = vmatpush.msra.mxu0 0.0
      %1132 = vmatpush.msra.mxu0 0.0
      %1133 = vmatpush.msra.mxu0 0.0
      %1134 = vmatpush.msra.mxu0 0.0
      %1135 = vmatpush.msra.mxu0 0.0
      %1136 = vmatpush.msra.mxu0 0.0
      %1137 = vmatpush.msra.mxu0 0.0
      %1138 = vmatpush.msra.mxu0 0.0
      %1139 = vmatpush.msra.mxu0 0.0
      %1140 = vmatpush.msra.mxu0 %v1018
      %1141 = vmatpush.msra.mxu0 %v979
      %1142 = vmatpush.msra.mxu0 %v970
      %1143 = vmatpush.msra.mxu0 %v961
      %1144 = vmatpush.msra.mxu0 %v952
      %1145 = vmatmul.f32.gmra.mxu0 %v1000
      %v1146 = vpop.f32.mrf.mxu0
      %v1147 = vadd.f32 %v996, %v1146
      %1148 = vdwg.mxu0
      %1149 = vmatpush.msra.mxu0 0.0
      %1150 = vmatpush.msra.mxu0 0.0
      %1151 = vmatpush.msra.mxu0 0.0
      %1152 = vmatpush.msra.mxu0 0.0
      %1153 = vmatpush.msra.mxu0 0.0
      %1154 = vmatpush.msra.mxu0 0.0
      %1155 = vmatpush.msra.mxu0 0.0
      %1156 = vmatpush.msra.mxu0 0.0
      %1157 = vmatpush.msra.mxu0 0.0
      %1158 = vmatpush.msra.mxu0 0.0
      %1159 = vmatpush.msra.mxu0 0.0
      %1160 = vmatpush.msra.mxu0 %v1021
      %1161 = vmatpush.msra.mxu0 %v980
      %1162 = vmatpush.msra.mxu0 %v971
      %1163 = vmatpush.msra.mxu0 %v962
      %1164 = vmatpush.msra.mxu0 %v953
      %1165 = vmatmul.f32.gmra.mxu0 %v1000
      %v1166 = vpop.f32.mrf.mxu0
      %v1167 = vadd.f32 %v996, %v1166
      %1168 = vdwg.mxu0
      %1169 = vmatpush.msra.mxu0 0.0
      %1170 = vmatpush.msra.mxu0 0.0
      %1171 = vmatpush.msra.mxu0 0.0
      %1172 = vmatpush.msra.mxu0 0.0
      %1173 = vmatpush.msra.mxu0 0.0
      %1174 = vmatpush.msra.mxu0 0.0
      %1175 = vmatpush.msra.mxu0 0.0
      %1176 = vmatpush.msra.mxu0 0.0
      %1177 = vmatpush.msra.mxu0 0.0
      %1178 = vmatpush.msra.mxu0 0.0
      %1179 = vmatpush.msra.mxu0 0.0
      %1180 = vmatpush.msra.mxu0 %v1024
      %1181 = vmatpush.msra.mxu0 %v981
      %1182 = vmatpush.msra.mxu0 %v972
      %1183 = vmatpush.msra.mxu0 %v963
      %1184 = vmatpush.msra.mxu0 %v954
      %1185 = vmatmul.f32.gmra.mxu0 %v1000
      %v1186 = vpop.f32.mrf.mxu0
      %v1187 = vadd.f32 %v996, %v1186
      %1188 = vdwg.mxu0
      %1189 = vmatpush.msra.mxu0 0.0
      %1190 = vmatpush.msra.mxu0 0.0
      %1191 = vmatpush.msra.mxu0 0.0
      %1192 = vmatpush.msra.mxu0 0.0
      %1193 = vmatpush.msra.mxu0 0.0
      %1194 = vmatpush.msra.mxu0 0.0
      %1195 = vmatpush.msra.mxu0 0.0
      %1196 = vmatpush.msra.mxu0 0.0
      %1197 = vmatpush.msra.mxu0 0.0
      %1198 = vmatpush.msra.mxu0 0.0
      %1199 = vmatpush.msra.mxu0 0.0
      %1200 = vmatpush.msra.mxu0 %v1027
      %1201 = vmatpush.msra.mxu0 %v982
      %1202 = vmatpush.msra.mxu0 %v973
      %1203 = vmatpush.msra.mxu0 %v964
      %1204 = vmatpush.msra.mxu0 %v955
      %1205 = vmatmul.f32.gmra.mxu0 %v1000
      %v1206 = vpop.f32.mrf.mxu0
      %v1207 = vadd.f32 %v996, %v1206
      %1208 = vdwg.mxu0
      %v1209 = vld [vmem:[%s6] sm:$0xff]
      %v1210 = vld [vmem:[%s6 + $0x8] sm:$0x1]
      %v1213 = vperm.slane %v1209, 0
      %v1214 = vperm.slane %v1209, 1
      %v1215 = vperm.slane %v1209, 2
      %v1216 = vperm.slane %v1209, 3
      %v1217 = vperm.slane %v1209, 4
      %v1218 = vperm.slane %v1209, 5
      %v1219 = vperm.slane %v1209, 6
      %v1220 = vperm.slane %v1209, 7
      %v1221 = vperm.slane %v1210, 0
      %v1231 = vmul.f32 %v1047, %v1213
      %v1232 = vmul.f32 %v1067, %v1214
      %v1233 = vmul.f32 %v1087, %v1215
      %v1234 = vmul.f32 %v1107, %v1216
      %v1235 = vmul.f32 %v1127, %v1217
      %v1236 = vmul.f32 %v1147, %v1218
      %v1237 = vmul.f32 %v1167, %v1219
      %v1238 = vmul.f32 %v1187, %v1220
      %v1239 = vmul.f32 %v1207, %v1221
      %v1240 = vsel %vm376, %v1231, 0.0
      %v1241 = vsel %vm376, %v1232, 0.0
      %v1242 = vadd.f32 %v1240, %v1241
      %v1243 = vsel %vm376, %v1233, 0.0
      %v1244 = vadd.f32 %v1242, %v1243
      %v1245 = vsel %vm376, %v1234, 0.0
      %v1246 = vadd.f32 %v1244, %v1245
      %v1247 = vsel %vm376, %v1235, 0.0
      %v1248 = vadd.f32 %v1246, %v1247
      %v1249 = vsel %vm376, %v1236, 0.0
      %v1250 = vadd.f32 %v1248, %v1249
      %v1251 = vsel %vm376, %v1237, 0.0
      %v1252 = vadd.f32 %v1250, %v1251
      %v1253 = vsel %vm376, %v1238, 0.0
      %v1254 = vadd.f32 %v1252, %v1253
      %v1255 = vsel %vm431, %v1239, 0.0
      %v1256 = vadd.f32 %v1254, %v1255
      %1257 = vadd.xlane.f32.xlu0 %v1256
      %v1258 = vpop.xlane.xlu0 %1257
      %vm1259 = vcmask 3072
      %1260 = vst.msk [vmem:[%s316] sm:$0xf] %vm1259, %v1258
      %v1261 = vmul.f32 %v1231, %v1231
      %v1262 = vmul.f32 %v1232, %v1232
      %v1263 = vmul.f32 %v1233, %v1233
      %v1264 = vmul.f32 %v1234, %v1234
      %v1265 = vmul.f32 %v1235, %v1235
      %v1266 = vmul.f32 %v1236, %v1236
      %v1267 = vmul.f32 %v1237, %v1237
      %v1268 = vmul.f32 %v1238, %v1238
      %v1269 = vmul.f32 %v1239, %v1239
      %v1270 = vsel %vm376, %v1261, 0.0
      %v1271 = vsel %vm376, %v1262, 0.0
      %v1272 = vadd.f32 %v1270, %v1271
      %v1273 = vsel %vm376, %v1263, 0.0
      %v1274 = vadd.f32 %v1272, %v1273
      %v1275 = vsel %vm376, %v1264, 0.0
      %v1276 = vadd.f32 %v1274, %v1275
      %v1277 = vsel %vm376, %v1265, 0.0
      %v1278 = vadd.f32 %v1276, %v1277
      %v1279 = vsel %vm376, %v1266, 0.0
      %v1280 = vadd.f32 %v1278, %v1279
      %v1281 = vsel %vm376, %v1267, 0.0
      %v1282 = vadd.f32 %v1280, %v1281
      %v1283 = vsel %vm376, %v1268, 0.0
      %v1284 = vadd.f32 %v1282, %v1283
      %v1285 = vsel %vm431, %v1269, 0.0
      %v1286 = vadd.f32 %v1284, %v1285
      %1287 = vadd.xlane.f32.xlu0 %v1286
      %v1288 = vpop.xlane.xlu0 %1287
      %vm1289 = vcmask 11272
      %1290 = vst.msk [vmem:[%s316] sm:$0xf] %vm1289, %v1288
      %1291 = vst [vmem:[%s312] sm:$0xff] 0.0
      %1292 = vst [vmem:[%s312 + $0x8] sm:$0xff] 0.0
      %1293 = vst [vmem:[%s312 + $0x10] sm:$0xff] 0.0
      %1294 = vst [vmem:[%s312 + $0x18] sm:$0xff] 0.0
      %vm1295 = vcmask 310276
      %vm1296 = vmor %vm1295, %vm376
      %1297 = vst.msk [vmem:[%s312 + $0x20] sm:$0xff] %vm1296, 0.0
      %v1307 = vrot.slane %v1232, 4
      %v1308 = vrot.slane %v1234, 4
      %v1309 = vrot.slane %v1236, 4
      %v1310 = vrot.slane %v1238, 4
      %v1311 = vsel %vm376, %v1231, %v1307
      %v1312 = vsel %vm376, %v1233, %v1308
      %v1313 = vsel %vm376, %v1235, %v1309
      %v1314 = vsel %vm376, %v1237, %v1310
      %1315 = vrot.lane.b32.xlu0 %v1311, 35
      %v1316 = vpop.permute.xlu0 %1315
      %1317 = vrot.lane.b32.xlu0 %v1312, 35
      %v1318 = vpop.permute.xlu0 %1317
      %1319 = vrot.lane.b32.xlu0 %v1313, 35
      %v1320 = vpop.permute.xlu0 %1319
      %1321 = vrot.lane.b32.xlu0 %v1314, 35
      %v1322 = vpop.permute.xlu0 %1321
      %1323 = vrot.lane.b32.xlu0 %v1239, 35
      %v1324 = vpop.permute.xlu0 %1323
      %v1325 = vrot.slane %v1316, 4
      %v1326 = vrot.slane %v1318, 4
      %v1327 = vrot.slane %v1320, 4
      %v1328 = vrot.slane %v1322, 4
      %vm1329 = vcmask 285696
      %v1330 = vsel %vm1329, %v1325, %v1316
      %v1331 = vsel %vm376, %v1325, %v1326
      %v1332 = vsel %vm1329, %v1331, %v1318
      %v1333 = vsel %vm376, %v1326, %v1327
      %v1334 = vsel %vm1329, %v1333, %v1320
      %v1335 = vsel %vm376, %v1327, %v1328
      %v1336 = vsel %vm1329, %v1335, %v1322
      %v1337 = vsel %vm1329, %v1328, %v1324
      %vm1343 = vcmask 1043736
      %vm1344 = vcmask 1047556
      %vm1345 = vmor %vm1344, %vm1343
      %1346 = vst.msk [vmem:[%s312] sm:$0xff] %vm1345, %v1330
      %1347 = vst [vmem:[%s312 + $0x8] sm:$0xff] %v1332
      %1348 = vst [vmem:[%s312 + $0x10] sm:$0xff] %v1334
      %1349 = vst [vmem:[%s312 + $0x18] sm:$0xff] %v1336
      %vm1350 = vcmask 805888
      %1351 = vst.msk [vmem:[%s312 + $0x20] sm:$0xf] %vm1350, %v1337
      %p1352 = scmp.lt.s32.totalorder %s20, 1
      %s1353 = scalar_select %p1352, %s20, 1
      %s1354 = smul.addr %s1353, 10
      %s1355 = smul.addr %s1354, 4
      %s1356 = scalar_lea.vmem %s7, %s1355
      %p1357 = scmp.lt.s32.totalorder %s20, 1
      %s1358 = scalar_select %p1357, %s20, 1
      %s1359 = smul.addr %s1358, 4
      %s1360 = scalar_lea.vmem %s8, %s1359
      // Predicated region
      $region49: #{unet_expansion_stack.6} parent=47 // pred_check
        %p1361 = pneg %p190
      $region50: #{unet_expansion_stack.6} parent=47 // pred_check_branch
        %1363 = sbr.rel (%p1361) target = $region52
      $region51: #{unet_expansion_stack.6} parent=47 // pred_region
        _
      $region52: #{unet_expansion_stack.6} parent=47 // pred_fallthru
        _
      // Predicated region
      $region53: #{unet_expansion_stack.6} parent=47 // pred_check
        %p1364 = pneg %p216
      $region54: #{unet_expansion_stack.6} parent=47 // pred_check_branch
        %1366 = sbr.rel (%p1364) target = $region56
      $region55: #{unet_expansion_stack.6} parent=47 // pred_region
        _
      $region56: #{unet_expansion_stack.6} parent=47 // pred_fallthru
        _
    $region48: #{unet_expansion_stack.6} parent=5 // pred_fallthru
      _
    %p1367 = scmp.le.s32.totalorder 2, %s15
    // Predicated region
    $region57: #{unet_expansion_stack.6} parent=5 // pred_check
      %p1368 = pneg %p1367
    $region58: #{unet_expansion_stack.6} parent=5 // pred_check_branch
      %1370 = sbr.rel (%p1368) target = $region60
    $region59: #{unet_expansion_stack.6} parent=5 // pred_region
      %s1371 = ssub.s32 %s15, 2
      // Predicated region
      $region61: #{unet_expansion_stack.6} parent=59 // pred_check
        %p1372 = pneg %p196
      $region62: #{unet_expansion_stack.6} parent=59 // pred_check_branch
        %1374 = sbr.rel (%p1372) target = $region64
      $region63: #{unet_expansion_stack.6} parent=59 // pred_region
        %p1375 = scmp.lt.s32.totalorder %s21, 1
        %s1376 = scalar_select %p1375, %s21, 1
        %s1377 = smul.addr %s1376, 10
        %s1378 = smul.addr %s1377, 4
        %s1379 = scalar_lea.vmem %s7, %s1378
      $region64: #{unet_expansion_stack.6} parent=59 // pred_fallthru
        _
      // Predicated region
      $region65: #{unet_expansion_stack.6} parent=59 // pred_check
        %p1380 = pneg %p222
      $region66: #{unet_expansion_stack.6} parent=59 // pred_check_branch
        %1382 = sbr.rel (%p1380) target = $region68
      $region67: #{unet_expansion_stack.6} parent=59 // pred_region
        %p1383 = scmp.lt.s32.totalorder %s21, 1
        %s1384 = scalar_select %p1383, %s21, 1
        %s1385 = smul.addr %s1384, 4
        %s1386 = scalar_lea.vmem %s8, %s1385
      $region68: #{unet_expansion_stack.6} parent=59 // pred_fallthru
        _
    $region60: #{unet_expansion_stack.6} parent=5 // pred_fallthru
      _
  $region6: #{unet_expansion_stack.6} parent=0 // loop_footer
    %s19 = sadd.s32 1, %s15
  $region7: #{unet_expansion_stack.6} parent=0 // loop_footer_branch
    %14 = sbr.rel target = $region3
  $region8: #{unet_expansion_stack.6} parent=0 // loop_exit
    _

</llo_original>
